<compile_context>
chip_gen: v7x
topology: tpu7x:2x2x1
jax: 0.10.0
libtpu: 0.0.40
codegen_flags: <defaults>
</compile_context>

<pallas_src>
import jax
import jax.numpy as jnp
from jax.experimental import pallas as pl
from jax.experimental.pallas import tpu as pltpu

INPUT_SIZE = 1
HIDDEN_SIZES = [10, 10, 10]
OUTPUT_SIZE = 1

LANE = 128          # lane width (vreg fast axis)
SUB = 16            # sublane rows per batch tile
TILE = SUB * LANE   # samples handled per grid step (2048)


def mlp_kernel(x_ref,
               w1_ref, b1_ref,
               w2_ref, b2_ref,
               w3_ref, b3_ref,
               w4_ref, b4_ref,
               o_ref):
    """One batch tile of shape (SUB, LANE); each element is one sample's scalar input.

    Weight refs are row-major-flattened PyTorch (out, in) matrices living in SMEM;
    each layer is an unrolled scalar-broadcast FMA chain on the VPU, ReLU fused.
    """
    h1_n, h2_n, h3_n = HIDDEN_SIZES
    x = x_ref[...]  # (SUB, LANE) f32 -- one sample per element (INPUT_SIZE == 1)

    # Layer 1: Linear(1 -> 10) + ReLU  (K=1: pure broadcast multiply-add)
    h1 = [jnp.maximum(w1_ref[j] * x + b1_ref[j], 0.0) for j in range(h1_n)]

    # Layer 2: Linear(10 -> 10) + ReLU
    h2 = []
    for j in range(h2_n):
        acc = w2_ref[j * h1_n] * h1[0]
        for k in range(1, h1_n):
            acc = acc + w2_ref[j * h1_n + k] * h1[k]
        h2.append(jnp.maximum(acc + b2_ref[j], 0.0))

    # Layer 3: Linear(10 -> 10) + ReLU
    h3 = []
    for j in range(h3_n):
        acc = w3_ref[j * h2_n] * h2[0]
        for k in range(1, h2_n):
            acc = acc + w3_ref[j * h2_n + k] * h2[k]
        h3.append(jnp.maximum(acc + b3_ref[j], 0.0))

    # Layer 4: Linear(10 -> 1), no activation (N=1: multiply + reduce over 10 terms)
    out = w4_ref[0] * h3[0]
    for k in range(1, h3_n):
        out = out + w4_ref[k] * h3[k]
    o_ref[...] = (out + b4_ref[0]).astype(o_ref.dtype)


def init_params(key, input_size, hidden_sizes, output_size):
    """Deterministic init mimicking nn.Linear default: U(-1/sqrt(fan_in), +1/sqrt(fan_in)).

    Weights stored PyTorch-style as (out_features, in_features), biases as (out_features,).
    """
    sizes = [input_size] + list(hidden_sizes) + [output_size]
    params = []
    for i in range(len(sizes) - 1):
        fan_in, fan_out = sizes[i], sizes[i + 1]
        key, kw, kb = jax.random.split(key, 3)
        bound = 1.0 / float(fan_in) ** 0.5
        w = jax.random.uniform(kw, (fan_out, fan_in), jnp.float32, -bound, bound)
        b = jax.random.uniform(kb, (fan_out,), jnp.float32, -bound, bound)
        params.append((w, b))
    return params


def approx_nn_forward(x, params):
    """x: (batch, INPUT_SIZE) f32. params: [(w (out,in), b (out,)), ...] like nn.Linear."""
    assert x.shape[1] == INPUT_SIZE == 1
    batch = x.shape[0]
    b_pad = ((batch + TILE - 1) // TILE) * TILE

    # Batch onto (sublane, lane): fully lane-dense input/output tiles.
    xf = x.reshape(batch).astype(jnp.float32)
    if b_pad != batch:
        xf = jnp.pad(xf, (0, b_pad - batch))
    x2 = xf.reshape(b_pad // LANE, LANE)

    # Flatten tiny weights/biases to 1-D f32 so they live compactly in SMEM.
    flat = []
    for w, b in params:
        flat.append(w.reshape(-1).astype(jnp.float32))  # row-major (out, in)
        flat.append(b.reshape(-1).astype(jnp.float32))

    batch_spec = pl.BlockSpec((SUB, LANE), lambda i: (i, 0))
    smem_spec = pl.BlockSpec(memory_space=pltpu.MemorySpace.SMEM)

    out2 = pl.pallas_call(
        mlp_kernel,
        out_shape=jax.ShapeDtypeStruct((b_pad // LANE, LANE), jnp.float32),
        grid=(b_pad // TILE,),
        in_specs=[batch_spec] + [smem_spec] * 8,
        out_specs=batch_spec,
        compiler_params=pltpu.CompilerParams(
            dimension_semantics=("parallel",)),
    )(x2, *flat)

    return out2.reshape(b_pad)[:batch].reshape(batch, OUTPUT_SIZE)


def reference_forward(x, params):
    h = x
    for i, (w, b) in enumerate(params):
        h = jnp.dot(h, w.T, precision=jax.lax.Precision.HIGHEST) + b
        if i < len(params) - 1:
            h = jnp.maximum(h, 0.0)
    return h


if __name__ == "__main__":
    key = jax.random.PRNGKey(0)
    key, kx = jax.random.split(key)
    batch = 4100  # exercises multiple grid steps + tail padding (pads to 3 tiles of 2048... -> 6144)
    x = jax.random.normal(kx, (batch, INPUT_SIZE), jnp.float32)
    params = init_params(key, INPUT_SIZE, HIDDEN_SIZES, OUTPUT_SIZE)

    out = jax.block_until_ready(approx_nn_forward(x, params))
    ref = reference_forward(x, params)

    assert out.shape == (batch, OUTPUT_SIZE), out.shape
    assert jnp.allclose(out, ref, atol=1e-5, rtol=1e-5), (out[:4], ref[:4])
    print("KERNEL_OK")
</pallas_src>

<mosaic_0001>
module attributes {stable_mosaic.version = 11 : i64} {
  func.func @mlp_kernel(%arg0: i32, %arg1: memref<16x128xf32, #tpu.memory_space<vmem>>, %arg2: memref<10xf32, #tpu.memory_space<smem>>, %arg3: memref<10xf32, #tpu.memory_space<smem>>, %arg4: memref<100xf32, #tpu.memory_space<smem>>, %arg5: memref<10xf32, #tpu.memory_space<smem>>, %arg6: memref<100xf32, #tpu.memory_space<smem>>, %arg7: memref<10xf32, #tpu.memory_space<smem>>, %arg8: memref<10xf32, #tpu.memory_space<smem>>, %arg9: memref<1xf32, #tpu.memory_space<smem>>, %arg10: memref<16x128xf32, #tpu.memory_space<vmem>>) attributes {dimension_semantics = [#tpu.dimension_semantics<parallel>], iteration_bounds = array<i64: 3>, scalar_prefetch = 0 : i64, scratch_operands = 0 : i64, tpu.core_type = #tpu.core_type<tc>, window_params = [{transform_indices = @transform_0, window_bounds = array<i64: 16, 128>}, {transform_indices = @transform_1, window_bounds = array<i64: 10>}, {transform_indices = @transform_2, window_bounds = array<i64: 10>}, {transform_indices = @transform_3, window_bounds = array<i64: 100>}, {transform_indices = @transform_4, window_bounds = array<i64: 10>}, {transform_indices = @transform_5, window_bounds = array<i64: 100>}, {transform_indices = @transform_6, window_bounds = array<i64: 10>}, {transform_indices = @transform_7, window_bounds = array<i64: 10>}, {transform_indices = @transform_8, window_bounds = array<i64: 1>}, {transform_indices = @transform_9, window_bounds = array<i64: 16, 128>}]} {
    %c0 = arith.constant 0 : index
    %c0_0 = arith.constant 0 : index
    %0 = vector.load %arg1[%c0, %c0_0] : memref<16x128xf32, #tpu.memory_space<vmem>>, vector<16x128xf32>
    %c0_1 = arith.constant 0 : index
    %1 = memref.load %arg2[%c0_1] : memref<10xf32, #tpu.memory_space<smem>>
    %2 = vector.broadcast %1 : f32 to vector<16x128xf32>
    %3 = arith.mulf %2, %0 : vector<16x128xf32>
    %c0_2 = arith.constant 0 : index
    %4 = memref.load %arg3[%c0_2] : memref<10xf32, #tpu.memory_space<smem>>
    %5 = vector.broadcast %4 : f32 to vector<16x128xf32>
    %6 = arith.addf %3, %5 : vector<16x128xf32>
    %cst = arith.constant 0.000000e+00 : f32
    %7 = vector.broadcast %cst : f32 to vector<16x128xf32>
    %8 = arith.maximumf %6, %7 : vector<16x128xf32>
    %c1 = arith.constant 1 : index
    %9 = memref.load %arg2[%c1] : memref<10xf32, #tpu.memory_space<smem>>
    %10 = vector.broadcast %9 : f32 to vector<16x128xf32>
    %11 = arith.mulf %10, %0 : vector<16x128xf32>
    %c1_3 = arith.constant 1 : index
    %12 = memref.load %arg3[%c1_3] : memref<10xf32, #tpu.memory_space<smem>>
    %13 = vector.broadcast %12 : f32 to vector<16x128xf32>
    %14 = arith.addf %11, %13 : vector<16x128xf32>
    %cst_4 = arith.constant 0.000000e+00 : f32
    %15 = vector.broadcast %cst_4 : f32 to vector<16x128xf32>
    %16 = arith.maximumf %14, %15 : vector<16x128xf32>
    %c2 = arith.constant 2 : index
    %17 = memref.load %arg2[%c2] : memref<10xf32, #tpu.memory_space<smem>>
    %18 = vector.broadcast %17 : f32 to vector<16x128xf32>
    %19 = arith.mulf %18, %0 : vector<16x128xf32>
    %c2_5 = arith.constant 2 : index
    %20 = memref.load %arg3[%c2_5] : memref<10xf32, #tpu.memory_space<smem>>
    %21 = vector.broadcast %20 : f32 to vector<16x128xf32>
    %22 = arith.addf %19, %21 : vector<16x128xf32>
    %cst_6 = arith.constant 0.000000e+00 : f32
    %23 = vector.broadcast %cst_6 : f32 to vector<16x128xf32>
    %24 = arith.maximumf %22, %23 : vector<16x128xf32>
    %c3 = arith.constant 3 : index
    %25 = memref.load %arg2[%c3] : memref<10xf32, #tpu.memory_space<smem>>
    %26 = vector.broadcast %25 : f32 to vector<16x128xf32>
    %27 = arith.mulf %26, %0 : vector<16x128xf32>
    %c3_7 = arith.constant 3 : index
    %28 = memref.load %arg3[%c3_7] : memref<10xf32, #tpu.memory_space<smem>>
    %29 = vector.broadcast %28 : f32 to vector<16x128xf32>
    %30 = arith.addf %27, %29 : vector<16x128xf32>
    %cst_8 = arith.constant 0.000000e+00 : f32
    %31 = vector.broadcast %cst_8 : f32 to vector<16x128xf32>
    %32 = arith.maximumf %30, %31 : vector<16x128xf32>
    %c4 = arith.constant 4 : index
    %33 = memref.load %arg2[%c4] : memref<10xf32, #tpu.memory_space<smem>>
    %34 = vector.broadcast %33 : f32 to vector<16x128xf32>
    %35 = arith.mulf %34, %0 : vector<16x128xf32>
    %c4_9 = arith.constant 4 : index
    %36 = memref.load %arg3[%c4_9] : memref<10xf32, #tpu.memory_space<smem>>
    %37 = vector.broadcast %36 : f32 to vector<16x128xf32>
    %38 = arith.addf %35, %37 : vector<16x128xf32>
    %cst_10 = arith.constant 0.000000e+00 : f32
    %39 = vector.broadcast %cst_10 : f32 to vector<16x128xf32>
    %40 = arith.maximumf %38, %39 : vector<16x128xf32>
    %c5 = arith.constant 5 : index
    %41 = memref.load %arg2[%c5] : memref<10xf32, #tpu.memory_space<smem>>
    %42 = vector.broadcast %41 : f32 to vector<16x128xf32>
    %43 = arith.mulf %42, %0 : vector<16x128xf32>
    %c5_11 = arith.constant 5 : index
    %44 = memref.load %arg3[%c5_11] : memref<10xf32, #tpu.memory_space<smem>>
    %45 = vector.broadcast %44 : f32 to vector<16x128xf32>
    %46 = arith.addf %43, %45 : vector<16x128xf32>
    %cst_12 = arith.constant 0.000000e+00 : f32
    %47 = vector.broadcast %cst_12 : f32 to vector<16x128xf32>
    %48 = arith.maximumf %46, %47 : vector<16x128xf32>
    %c6 = arith.constant 6 : index
    %49 = memref.load %arg2[%c6] : memref<10xf32, #tpu.memory_space<smem>>
    %50 = vector.broadcast %49 : f32 to vector<16x128xf32>
    %51 = arith.mulf %50, %0 : vector<16x128xf32>
    %c6_13 = arith.constant 6 : index
    %52 = memref.load %arg3[%c6_13] : memref<10xf32, #tpu.memory_space<smem>>
    %53 = vector.broadcast %52 : f32 to vector<16x128xf32>
    %54 = arith.addf %51, %53 : vector<16x128xf32>
    %cst_14 = arith.constant 0.000000e+00 : f32
    %55 = vector.broadcast %cst_14 : f32 to vector<16x128xf32>
    %56 = arith.maximumf %54, %55 : vector<16x128xf32>
    %c7 = arith.constant 7 : index
    %57 = memref.load %arg2[%c7] : memref<10xf32, #tpu.memory_space<smem>>
    %58 = vector.broadcast %57 : f32 to vector<16x128xf32>
    %59 = arith.mulf %58, %0 : vector<16x128xf32>
    %c7_15 = arith.constant 7 : index
    %60 = memref.load %arg3[%c7_15] : memref<10xf32, #tpu.memory_space<smem>>
    %61 = vector.broadcast %60 : f32 to vector<16x128xf32>
    %62 = arith.addf %59, %61 : vector<16x128xf32>
    %cst_16 = arith.constant 0.000000e+00 : f32
    %63 = vector.broadcast %cst_16 : f32 to vector<16x128xf32>
    %64 = arith.maximumf %62, %63 : vector<16x128xf32>
    %c8 = arith.constant 8 : index
    %65 = memref.load %arg2[%c8] : memref<10xf32, #tpu.memory_space<smem>>
    %66 = vector.broadcast %65 : f32 to vector<16x128xf32>
    %67 = arith.mulf %66, %0 : vector<16x128xf32>
    %c8_17 = arith.constant 8 : index
    %68 = memref.load %arg3[%c8_17] : memref<10xf32, #tpu.memory_space<smem>>
    %69 = vector.broadcast %68 : f32 to vector<16x128xf32>
    %70 = arith.addf %67, %69 : vector<16x128xf32>
    %cst_18 = arith.constant 0.000000e+00 : f32
    %71 = vector.broadcast %cst_18 : f32 to vector<16x128xf32>
    %72 = arith.maximumf %70, %71 : vector<16x128xf32>
    %c9 = arith.constant 9 : index
    %73 = memref.load %arg2[%c9] : memref<10xf32, #tpu.memory_space<smem>>
    %74 = vector.broadcast %73 : f32 to vector<16x128xf32>
    %75 = arith.mulf %74, %0 : vector<16x128xf32>
    %c9_19 = arith.constant 9 : index
    %76 = memref.load %arg3[%c9_19] : memref<10xf32, #tpu.memory_space<smem>>
    %77 = vector.broadcast %76 : f32 to vector<16x128xf32>
    %78 = arith.addf %75, %77 : vector<16x128xf32>
    %cst_20 = arith.constant 0.000000e+00 : f32
    %79 = vector.broadcast %cst_20 : f32 to vector<16x128xf32>
    %80 = arith.maximumf %78, %79 : vector<16x128xf32>
    %c0_21 = arith.constant 0 : index
    %81 = memref.load %arg4[%c0_21] : memref<100xf32, #tpu.memory_space<smem>>
    %82 = vector.broadcast %81 : f32 to vector<16x128xf32>
    %83 = arith.mulf %82, %8 : vector<16x128xf32>
    %c1_22 = arith.constant 1 : index
    %84 = memref.load %arg4[%c1_22] : memref<100xf32, #tpu.memory_space<smem>>
    %85 = vector.broadcast %84 : f32 to vector<16x128xf32>
    %86 = arith.mulf %85, %16 : vector<16x128xf32>
    %87 = arith.addf %83, %86 : vector<16x128xf32>
    %c2_23 = arith.constant 2 : index
    %88 = memref.load %arg4[%c2_23] : memref<100xf32, #tpu.memory_space<smem>>
    %89 = vector.broadcast %88 : f32 to vector<16x128xf32>
    %90 = arith.mulf %89, %24 : vector<16x128xf32>
    %91 = arith.addf %87, %90 : vector<16x128xf32>
    %c3_24 = arith.constant 3 : index
    %92 = memref.load %arg4[%c3_24] : memref<100xf32, #tpu.memory_space<smem>>
    %93 = vector.broadcast %92 : f32 to vector<16x128xf32>
    %94 = arith.mulf %93, %32 : vector<16x128xf32>
    %95 = arith.addf %91, %94 : vector<16x128xf32>
    %c4_25 = arith.constant 4 : index
    %96 = memref.load %arg4[%c4_25] : memref<100xf32, #tpu.memory_space<smem>>
    %97 = vector.broadcast %96 : f32 to vector<16x128xf32>
    %98 = arith.mulf %97, %40 : vector<16x128xf32>
    %99 = arith.addf %95, %98 : vector<16x128xf32>
    %c5_26 = arith.constant 5 : index
    %100 = memref.load %arg4[%c5_26] : memref<100xf32, #tpu.memory_space<smem>>
    %101 = vector.broadcast %100 : f32 to vector<16x128xf32>
    %102 = arith.mulf %101, %48 : vector<16x128xf32>
    %103 = arith.addf %99, %102 : vector<16x128xf32>
    %c6_27 = arith.constant 6 : index
    %104 = memref.load %arg4[%c6_27] : memref<100xf32, #tpu.memory_space<smem>>
    %105 = vector.broadcast %104 : f32 to vector<16x128xf32>
    %106 = arith.mulf %105, %56 : vector<16x128xf32>
    %107 = arith.addf %103, %106 : vector<16x128xf32>
    %c7_28 = arith.constant 7 : index
    %108 = memref.load %arg4[%c7_28] : memref<100xf32, #tpu.memory_space<smem>>
    %109 = vector.broadcast %108 : f32 to vector<16x128xf32>
    %110 = arith.mulf %109, %64 : vector<16x128xf32>
    %111 = arith.addf %107, %110 : vector<16x128xf32>
    %c8_29 = arith.constant 8 : index
    %112 = memref.load %arg4[%c8_29] : memref<100xf32, #tpu.memory_space<smem>>
    %113 = vector.broadcast %112 : f32 to vector<16x128xf32>
    %114 = arith.mulf %113, %72 : vector<16x128xf32>
    %115 = arith.addf %111, %114 : vector<16x128xf32>
    %c9_30 = arith.constant 9 : index
    %116 = memref.load %arg4[%c9_30] : memref<100xf32, #tpu.memory_space<smem>>
    %117 = vector.broadcast %116 : f32 to vector<16x128xf32>
    %118 = arith.mulf %117, %80 : vector<16x128xf32>
    %119 = arith.addf %115, %118 : vector<16x128xf32>
    %c0_31 = arith.constant 0 : index
    %120 = memref.load %arg5[%c0_31] : memref<10xf32, #tpu.memory_space<smem>>
    %121 = vector.broadcast %120 : f32 to vector<16x128xf32>
    %122 = arith.addf %119, %121 : vector<16x128xf32>
    %cst_32 = arith.constant 0.000000e+00 : f32
    %123 = vector.broadcast %cst_32 : f32 to vector<16x128xf32>
    %124 = arith.maximumf %122, %123 : vector<16x128xf32>
    %c10 = arith.constant 10 : index
    %125 = memref.load %arg4[%c10] : memref<100xf32, #tpu.memory_space<smem>>
    %126 = vector.broadcast %125 : f32 to vector<16x128xf32>
    %127 = arith.mulf %126, %8 : vector<16x128xf32>
    %c11 = arith.constant 11 : index
    %128 = memref.load %arg4[%c11] : memref<100xf32, #tpu.memory_space<smem>>
    %129 = vector.broadcast %128 : f32 to vector<16x128xf32>
    %130 = arith.mulf %129, %16 : vector<16x128xf32>
    %131 = arith.addf %127, %130 : vector<16x128xf32>
    %c12 = arith.constant 12 : index
    %132 = memref.load %arg4[%c12] : memref<100xf32, #tpu.memory_space<smem>>
    %133 = vector.broadcast %132 : f32 to vector<16x128xf32>
    %134 = arith.mulf %133, %24 : vector<16x128xf32>
    %135 = arith.addf %131, %134 : vector<16x128xf32>
    %c13 = arith.constant 13 : index
    %136 = memref.load %arg4[%c13] : memref<100xf32, #tpu.memory_space<smem>>
    %137 = vector.broadcast %136 : f32 to vector<16x128xf32>
    %138 = arith.mulf %137, %32 : vector<16x128xf32>
    %139 = arith.addf %135, %138 : vector<16x128xf32>
    %c14 = arith.constant 14 : index
    %140 = memref.load %arg4[%c14] : memref<100xf32, #tpu.memory_space<smem>>
    %141 = vector.broadcast %140 : f32 to vector<16x128xf32>
    %142 = arith.mulf %141, %40 : vector<16x128xf32>
    %143 = arith.addf %139, %142 : vector<16x128xf32>
    %c15 = arith.constant 15 : index
    %144 = memref.load %arg4[%c15] : memref<100xf32, #tpu.memory_space<smem>>
    %145 = vector.broadcast %144 : f32 to vector<16x128xf32>
    %146 = arith.mulf %145, %48 : vector<16x128xf32>
    %147 = arith.addf %143, %146 : vector<16x128xf32>
    %c16 = arith.constant 16 : index
    %148 = memref.load %arg4[%c16] : memref<100xf32, #tpu.memory_space<smem>>
    %149 = vector.broadcast %148 : f32 to vector<16x128xf32>
    %150 = arith.mulf %149, %56 : vector<16x128xf32>
    %151 = arith.addf %147, %150 : vector<16x128xf32>
    %c17 = arith.constant 17 : index
    %152 = memref.load %arg4[%c17] : memref<100xf32, #tpu.memory_space<smem>>
    %153 = vector.broadcast %152 : f32 to vector<16x128xf32>
    %154 = arith.mulf %153, %64 : vector<16x128xf32>
    %155 = arith.addf %151, %154 : vector<16x128xf32>
    %c18 = arith.constant 18 : index
    %156 = memref.load %arg4[%c18] : memref<100xf32, #tpu.memory_space<smem>>
    %157 = vector.broadcast %156 : f32 to vector<16x128xf32>
    %158 = arith.mulf %157, %72 : vector<16x128xf32>
    %159 = arith.addf %155, %158 : vector<16x128xf32>
    %c19 = arith.constant 19 : index
    %160 = memref.load %arg4[%c19] : memref<100xf32, #tpu.memory_space<smem>>
    %161 = vector.broadcast %160 : f32 to vector<16x128xf32>
    %162 = arith.mulf %161, %80 : vector<16x128xf32>
    %163 = arith.addf %159, %162 : vector<16x128xf32>
    %c1_33 = arith.constant 1 : index
    %164 = memref.load %arg5[%c1_33] : memref<10xf32, #tpu.memory_space<smem>>
    %165 = vector.broadcast %164 : f32 to vector<16x128xf32>
    %166 = arith.addf %163, %165 : vector<16x128xf32>
    %cst_34 = arith.constant 0.000000e+00 : f32
    %167 = vector.broadcast %cst_34 : f32 to vector<16x128xf32>
    %168 = arith.maximumf %166, %167 : vector<16x128xf32>
    %c20 = arith.constant 20 : index
    %169 = memref.load %arg4[%c20] : memref<100xf32, #tpu.memory_space<smem>>
    %170 = vector.broadcast %169 : f32 to vector<16x128xf32>
    %171 = arith.mulf %170, %8 : vector<16x128xf32>
    %c21 = arith.constant 21 : index
    %172 = memref.load %arg4[%c21] : memref<100xf32, #tpu.memory_space<smem>>
    %173 = vector.broadcast %172 : f32 to vector<16x128xf32>
    %174 = arith.mulf %173, %16 : vector<16x128xf32>
    %175 = arith.addf %171, %174 : vector<16x128xf32>
    %c22 = arith.constant 22 : index
    %176 = memref.load %arg4[%c22] : memref<100xf32, #tpu.memory_space<smem>>
    %177 = vector.broadcast %176 : f32 to vector<16x128xf32>
    %178 = arith.mulf %177, %24 : vector<16x128xf32>
    %179 = arith.addf %175, %178 : vector<16x128xf32>
    %c23 = arith.constant 23 : index
    %180 = memref.load %arg4[%c23] : memref<100xf32, #tpu.memory_space<smem>>
    %181 = vector.broadcast %180 : f32 to vector<16x128xf32>
    %182 = arith.mulf %181, %32 : vector<16x128xf32>
    %183 = arith.addf %179, %182 : vector<16x128xf32>
    %c24 = arith.constant 24 : index
    %184 = memref.load %arg4[%c24] : memref<100xf32, #tpu.memory_space<smem>>
    %185 = vector.broadcast %184 : f32 to vector<16x128xf32>
    %186 = arith.mulf %185, %40 : vector<16x128xf32>
    %187 = arith.addf %183, %186 : vector<16x128xf32>
    %c25 = arith.constant 25 : index
    %188 = memref.load %arg4[%c25] : memref<100xf32, #tpu.memory_space<smem>>
    %189 = vector.broadcast %188 : f32 to vector<16x128xf32>
    %190 = arith.mulf %189, %48 : vector<16x128xf32>
    %191 = arith.addf %187, %190 : vector<16x128xf32>
    %c26 = arith.constant 26 : index
    %192 = memref.load %arg4[%c26] : memref<100xf32, #tpu.memory_space<smem>>
    %193 = vector.broadcast %192 : f32 to vector<16x128xf32>
    %194 = arith.mulf %193, %56 : vector<16x128xf32>
    %195 = arith.addf %191, %194 : vector<16x128xf32>
    %c27 = arith.constant 27 : index
    %196 = memref.load %arg4[%c27] : memref<100xf32, #tpu.memory_space<smem>>
    %197 = vector.broadcast %196 : f32 to vector<16x128xf32>
    %198 = arith.mulf %197, %64 : vector<16x128xf32>
    %199 = arith.addf %195, %198 : vector<16x128xf32>
    %c28 = arith.constant 28 : index
    %200 = memref.load %arg4[%c28] : memref<100xf32, #tpu.memory_space<smem>>
    %201 = vector.broadcast %200 : f32 to vector<16x128xf32>
    %202 = arith.mulf %201, %72 : vector<16x128xf32>
    %203 = arith.addf %199, %202 : vector<16x128xf32>
    %c29 = arith.constant 29 : index
    %204 = memref.load %arg4[%c29] : memref<100xf32, #tpu.memory_space<smem>>
    %205 = vector.broadcast %204 : f32 to vector<16x128xf32>
    %206 = arith.mulf %205, %80 : vector<16x128xf32>
    %207 = arith.addf %203, %206 : vector<16x128xf32>
    %c2_35 = arith.constant 2 : index
    %208 = memref.load %arg5[%c2_35] : memref<10xf32, #tpu.memory_space<smem>>
    %209 = vector.broadcast %208 : f32 to vector<16x128xf32>
    %210 = arith.addf %207, %209 : vector<16x128xf32>
    %cst_36 = arith.constant 0.000000e+00 : f32
    %211 = vector.broadcast %cst_36 : f32 to vector<16x128xf32>
    %212 = arith.maximumf %210, %211 : vector<16x128xf32>
    %c30 = arith.constant 30 : index
    %213 = memref.load %arg4[%c30] : memref<100xf32, #tpu.memory_space<smem>>
    %214 = vector.broadcast %213 : f32 to vector<16x128xf32>
    %215 = arith.mulf %214, %8 : vector<16x128xf32>
    %c31 = arith.constant 31 : index
    %216 = memref.load %arg4[%c31] : memref<100xf32, #tpu.memory_space<smem>>
    %217 = vector.broadcast %216 : f32 to vector<16x128xf32>
    %218 = arith.mulf %217, %16 : vector<16x128xf32>
    %219 = arith.addf %215, %218 : vector<16x128xf32>
    %c32 = arith.constant 32 : index
    %220 = memref.load %arg4[%c32] : memref<100xf32, #tpu.memory_space<smem>>
    %221 = vector.broadcast %220 : f32 to vector<16x128xf32>
    %222 = arith.mulf %221, %24 : vector<16x128xf32>
    %223 = arith.addf %219, %222 : vector<16x128xf32>
    %c33 = arith.constant 33 : index
    %224 = memref.load %arg4[%c33] : memref<100xf32, #tpu.memory_space<smem>>
    %225 = vector.broadcast %224 : f32 to vector<16x128xf32>
    %226 = arith.mulf %225, %32 : vector<16x128xf32>
    %227 = arith.addf %223, %226 : vector<16x128xf32>
    %c34 = arith.constant 34 : index
    %228 = memref.load %arg4[%c34] : memref<100xf32, #tpu.memory_space<smem>>
    %229 = vector.broadcast %228 : f32 to vector<16x128xf32>
    %230 = arith.mulf %229, %40 : vector<16x128xf32>
    %231 = arith.addf %227, %230 : vector<16x128xf32>
    %c35 = arith.constant 35 : index
    %232 = memref.load %arg4[%c35] : memref<100xf32, #tpu.memory_space<smem>>
    %233 = vector.broadcast %232 : f32 to vector<16x128xf32>
    %234 = arith.mulf %233, %48 : vector<16x128xf32>
    %235 = arith.addf %231, %234 : vector<16x128xf32>
    %c36 = arith.constant 36 : index
    %236 = memref.load %arg4[%c36] : memref<100xf32, #tpu.memory_space<smem>>
    %237 = vector.broadcast %236 : f32 to vector<16x128xf32>
    %238 = arith.mulf %237, %56 : vector<16x128xf32>
    %239 = arith.addf %235, %238 : vector<16x128xf32>
    %c37 = arith.constant 37 : index
    %240 = memref.load %arg4[%c37] : memref<100xf32, #tpu.memory_space<smem>>
    %241 = vector.broadcast %240 : f32 to vector<16x128xf32>
    %242 = arith.mulf %241, %64 : vector<16x128xf32>
    %243 = arith.addf %239, %242 : vector<16x128xf32>
    %c38 = arith.constant 38 : index
    %244 = memref.load %arg4[%c38] : memref<100xf32, #tpu.memory_space<smem>>
    %245 = vector.broadcast %244 : f32 to vector<16x128xf32>
    %246 = arith.mulf %245, %72 : vector<16x128xf32>
    %247 = arith.addf %243, %246 : vector<16x128xf32>
    %c39 = arith.constant 39 : index
    %248 = memref.load %arg4[%c39] : memref<100xf32, #tpu.memory_space<smem>>
    %249 = vector.broadcast %248 : f32 to vector<16x128xf32>
    %250 = arith.mulf %249, %80 : vector<16x128xf32>
    %251 = arith.addf %247, %250 : vector<16x128xf32>
    %c3_37 = arith.constant 3 : index
    %252 = memref.load %arg5[%c3_37] : memref<10xf32, #tpu.memory_space<smem>>
    %253 = vector.broadcast %252 : f32 to vector<16x128xf32>
    %254 = arith.addf %251, %253 : vector<16x128xf32>
    %cst_38 = arith.constant 0.000000e+00 : f32
    %255 = vector.broadcast %cst_38 : f32 to vector<16x128xf32>
    %256 = arith.maximumf %254, %255 : vector<16x128xf32>
    %c40 = arith.constant 40 : index
    %257 = memref.load %arg4[%c40] : memref<100xf32, #tpu.memory_space<smem>>
    %258 = vector.broadcast %257 : f32 to vector<16x128xf32>
    %259 = arith.mulf %258, %8 : vector<16x128xf32>
    %c41 = arith.constant 41 : index
    %260 = memref.load %arg4[%c41] : memref<100xf32, #tpu.memory_space<smem>>
    %261 = vector.broadcast %260 : f32 to vector<16x128xf32>
    %262 = arith.mulf %261, %16 : vector<16x128xf32>
    %263 = arith.addf %259, %262 : vector<16x128xf32>
    %c42 = arith.constant 42 : index
    %264 = memref.load %arg4[%c42] : memref<100xf32, #tpu.memory_space<smem>>
    %265 = vector.broadcast %264 : f32 to vector<16x128xf32>
    %266 = arith.mulf %265, %24 : vector<16x128xf32>
    %267 = arith.addf %263, %266 : vector<16x128xf32>
    %c43 = arith.constant 43 : index
    %268 = memref.load %arg4[%c43] : memref<100xf32, #tpu.memory_space<smem>>
    %269 = vector.broadcast %268 : f32 to vector<16x128xf32>
    %270 = arith.mulf %269, %32 : vector<16x128xf32>
    %271 = arith.addf %267, %270 : vector<16x128xf32>
    %c44 = arith.constant 44 : index
    %272 = memref.load %arg4[%c44] : memref<100xf32, #tpu.memory_space<smem>>
    %273 = vector.broadcast %272 : f32 to vector<16x128xf32>
    %274 = arith.mulf %273, %40 : vector<16x128xf32>
    %275 = arith.addf %271, %274 : vector<16x128xf32>
    %c45 = arith.constant 45 : index
    %276 = memref.load %arg4[%c45] : memref<100xf32, #tpu.memory_space<smem>>
    %277 = vector.broadcast %276 : f32 to vector<16x128xf32>
    %278 = arith.mulf %277, %48 : vector<16x128xf32>
    %279 = arith.addf %275, %278 : vector<16x128xf32>
    %c46 = arith.constant 46 : index
    %280 = memref.load %arg4[%c46] : memref<100xf32, #tpu.memory_space<smem>>
    %281 = vector.broadcast %280 : f32 to vector<16x128xf32>
    %282 = arith.mulf %281, %56 : vector<16x128xf32>
    %283 = arith.addf %279, %282 : vector<16x128xf32>
    %c47 = arith.constant 47 : index
    %284 = memref.load %arg4[%c47] : memref<100xf32, #tpu.memory_space<smem>>
    %285 = vector.broadcast %284 : f32 to vector<16x128xf32>
    %286 = arith.mulf %285, %64 : vector<16x128xf32>
    %287 = arith.addf %283, %286 : vector<16x128xf32>
    %c48 = arith.constant 48 : index
    %288 = memref.load %arg4[%c48] : memref<100xf32, #tpu.memory_space<smem>>
    %289 = vector.broadcast %288 : f32 to vector<16x128xf32>
    %290 = arith.mulf %289, %72 : vector<16x128xf32>
    %291 = arith.addf %287, %290 : vector<16x128xf32>
    %c49 = arith.constant 49 : index
    %292 = memref.load %arg4[%c49] : memref<100xf32, #tpu.memory_space<smem>>
    %293 = vector.broadcast %292 : f32 to vector<16x128xf32>
    %294 = arith.mulf %293, %80 : vector<16x128xf32>
    %295 = arith.addf %291, %294 : vector<16x128xf32>
    %c4_39 = arith.constant 4 : index
    %296 = memref.load %arg5[%c4_39] : memref<10xf32, #tpu.memory_space<smem>>
    %297 = vector.broadcast %296 : f32 to vector<16x128xf32>
    %298 = arith.addf %295, %297 : vector<16x128xf32>
    %cst_40 = arith.constant 0.000000e+00 : f32
    %299 = vector.broadcast %cst_40 : f32 to vector<16x128xf32>
    %300 = arith.maximumf %298, %299 : vector<16x128xf32>
    %c50 = arith.constant 50 : index
    %301 = memref.load %arg4[%c50] : memref<100xf32, #tpu.memory_space<smem>>
    %302 = vector.broadcast %301 : f32 to vector<16x128xf32>
    %303 = arith.mulf %302, %8 : vector<16x128xf32>
    %c51 = arith.constant 51 : index
    %304 = memref.load %arg4[%c51] : memref<100xf32, #tpu.memory_space<smem>>
    %305 = vector.broadcast %304 : f32 to vector<16x128xf32>
    %306 = arith.mulf %305, %16 : vector<16x128xf32>
    %307 = arith.addf %303, %306 : vector<16x128xf32>
    %c52 = arith.constant 52 : index
    %308 = memref.load %arg4[%c52] : memref<100xf32, #tpu.memory_space<smem>>
    %309 = vector.broadcast %308 : f32 to vector<16x128xf32>
    %310 = arith.mulf %309, %24 : vector<16x128xf32>
    %311 = arith.addf %307, %310 : vector<16x128xf32>
    %c53 = arith.constant 53 : index
    %312 = memref.load %arg4[%c53] : memref<100xf32, #tpu.memory_space<smem>>
    %313 = vector.broadcast %312 : f32 to vector<16x128xf32>
    %314 = arith.mulf %313, %32 : vector<16x128xf32>
    %315 = arith.addf %311, %314 : vector<16x128xf32>
    %c54 = arith.constant 54 : index
    %316 = memref.load %arg4[%c54] : memref<100xf32, #tpu.memory_space<smem>>
    %317 = vector.broadcast %316 : f32 to vector<16x128xf32>
    %318 = arith.mulf %317, %40 : vector<16x128xf32>
    %319 = arith.addf %315, %318 : vector<16x128xf32>
    %c55 = arith.constant 55 : index
    %320 = memref.load %arg4[%c55] : memref<100xf32, #tpu.memory_space<smem>>
    %321 = vector.broadcast %320 : f32 to vector<16x128xf32>
    %322 = arith.mulf %321, %48 : vector<16x128xf32>
    %323 = arith.addf %319, %322 : vector<16x128xf32>
    %c56 = arith.constant 56 : index
    %324 = memref.load %arg4[%c56] : memref<100xf32, #tpu.memory_space<smem>>
    %325 = vector.broadcast %324 : f32 to vector<16x128xf32>
    %326 = arith.mulf %325, %56 : vector<16x128xf32>
    %327 = arith.addf %323, %326 : vector<16x128xf32>
    %c57 = arith.constant 57 : index
    %328 = memref.load %arg4[%c57] : memref<100xf32, #tpu.memory_space<smem>>
    %329 = vector.broadcast %328 : f32 to vector<16x128xf32>
    %330 = arith.mulf %329, %64 : vector<16x128xf32>
    %331 = arith.addf %327, %330 : vector<16x128xf32>
    %c58 = arith.constant 58 : index
    %332 = memref.load %arg4[%c58] : memref<100xf32, #tpu.memory_space<smem>>
    %333 = vector.broadcast %332 : f32 to vector<16x128xf32>
    %334 = arith.mulf %333, %72 : vector<16x128xf32>
    %335 = arith.addf %331, %334 : vector<16x128xf32>
    %c59 = arith.constant 59 : index
    %336 = memref.load %arg4[%c59] : memref<100xf32, #tpu.memory_space<smem>>
    %337 = vector.broadcast %336 : f32 to vector<16x128xf32>
    %338 = arith.mulf %337, %80 : vector<16x128xf32>
    %339 = arith.addf %335, %338 : vector<16x128xf32>
    %c5_41 = arith.constant 5 : index
    %340 = memref.load %arg5[%c5_41] : memref<10xf32, #tpu.memory_space<smem>>
    %341 = vector.broadcast %340 : f32 to vector<16x128xf32>
    %342 = arith.addf %339, %341 : vector<16x128xf32>
    %cst_42 = arith.constant 0.000000e+00 : f32
    %343 = vector.broadcast %cst_42 : f32 to vector<16x128xf32>
    %344 = arith.maximumf %342, %343 : vector<16x128xf32>
    %c60 = arith.constant 60 : index
    %345 = memref.load %arg4[%c60] : memref<100xf32, #tpu.memory_space<smem>>
    %346 = vector.broadcast %345 : f32 to vector<16x128xf32>
    %347 = arith.mulf %346, %8 : vector<16x128xf32>
    %c61 = arith.constant 61 : index
    %348 = memref.load %arg4[%c61] : memref<100xf32, #tpu.memory_space<smem>>
    %349 = vector.broadcast %348 : f32 to vector<16x128xf32>
    %350 = arith.mulf %349, %16 : vector<16x128xf32>
    %351 = arith.addf %347, %350 : vector<16x128xf32>
    %c62 = arith.constant 62 : index
    %352 = memref.load %arg4[%c62] : memref<100xf32, #tpu.memory_space<smem>>
    %353 = vector.broadcast %352 : f32 to vector<16x128xf32>
    %354 = arith.mulf %353, %24 : vector<16x128xf32>
    %355 = arith.addf %351, %354 : vector<16x128xf32>
    %c63 = arith.constant 63 : index
    %356 = memref.load %arg4[%c63] : memref<100xf32, #tpu.memory_space<smem>>
    %357 = vector.broadcast %356 : f32 to vector<16x128xf32>
    %358 = arith.mulf %357, %32 : vector<16x128xf32>
    %359 = arith.addf %355, %358 : vector<16x128xf32>
    %c64 = arith.constant 64 : index
    %360 = memref.load %arg4[%c64] : memref<100xf32, #tpu.memory_space<smem>>
    %361 = vector.broadcast %360 : f32 to vector<16x128xf32>
    %362 = arith.mulf %361, %40 : vector<16x128xf32>
    %363 = arith.addf %359, %362 : vector<16x128xf32>
    %c65 = arith.constant 65 : index
    %364 = memref.load %arg4[%c65] : memref<100xf32, #tpu.memory_space<smem>>
    %365 = vector.broadcast %364 : f32 to vector<16x128xf32>
    %366 = arith.mulf %365, %48 : vector<16x128xf32>
    %367 = arith.addf %363, %366 : vector<16x128xf32>
    %c66 = arith.constant 66 : index
    %368 = memref.load %arg4[%c66] : memref<100xf32, #tpu.memory_space<smem>>
    %369 = vector.broadcast %368 : f32 to vector<16x128xf32>
    %370 = arith.mulf %369, %56 : vector<16x128xf32>
    %371 = arith.addf %367, %370 : vector<16x128xf32>
    %c67 = arith.constant 67 : index
    %372 = memref.load %arg4[%c67] : memref<100xf32, #tpu.memory_space<smem>>
    %373 = vector.broadcast %372 : f32 to vector<16x128xf32>
    %374 = arith.mulf %373, %64 : vector<16x128xf32>
    %375 = arith.addf %371, %374 : vector<16x128xf32>
    %c68 = arith.constant 68 : index
    %376 = memref.load %arg4[%c68] : memref<100xf32, #tpu.memory_space<smem>>
    %377 = vector.broadcast %376 : f32 to vector<16x128xf32>
    %378 = arith.mulf %377, %72 : vector<16x128xf32>
    %379 = arith.addf %375, %378 : vector<16x128xf32>
    %c69 = arith.constant 69 : index
    %380 = memref.load %arg4[%c69] : memref<100xf32, #tpu.memory_space<smem>>
    %381 = vector.broadcast %380 : f32 to vector<16x128xf32>
    %382 = arith.mulf %381, %80 : vector<16x128xf32>
    %383 = arith.addf %379, %382 : vector<16x128xf32>
    %c6_43 = arith.constant 6 : index
    %384 = memref.load %arg5[%c6_43] : memref<10xf32, #tpu.memory_space<smem>>
    %385 = vector.broadcast %384 : f32 to vector<16x128xf32>
    %386 = arith.addf %383, %385 : vector<16x128xf32>
    %cst_44 = arith.constant 0.000000e+00 : f32
    %387 = vector.broadcast %cst_44 : f32 to vector<16x128xf32>
    %388 = arith.maximumf %386, %387 : vector<16x128xf32>
    %c70 = arith.constant 70 : index
    %389 = memref.load %arg4[%c70] : memref<100xf32, #tpu.memory_space<smem>>
    %390 = vector.broadcast %389 : f32 to vector<16x128xf32>
    %391 = arith.mulf %390, %8 : vector<16x128xf32>
    %c71 = arith.constant 71 : index
    %392 = memref.load %arg4[%c71] : memref<100xf32, #tpu.memory_space<smem>>
    %393 = vector.broadcast %392 : f32 to vector<16x128xf32>
    %394 = arith.mulf %393, %16 : vector<16x128xf32>
    %395 = arith.addf %391, %394 : vector<16x128xf32>
    %c72 = arith.constant 72 : index
    %396 = memref.load %arg4[%c72] : memref<100xf32, #tpu.memory_space<smem>>
    %397 = vector.broadcast %396 : f32 to vector<16x128xf32>
    %398 = arith.mulf %397, %24 : vector<16x128xf32>
    %399 = arith.addf %395, %398 : vector<16x128xf32>
    %c73 = arith.constant 73 : index
    %400 = memref.load %arg4[%c73] : memref<100xf32, #tpu.memory_space<smem>>
    %401 = vector.broadcast %400 : f32 to vector<16x128xf32>
    %402 = arith.mulf %401, %32 : vector<16x128xf32>
    %403 = arith.addf %399, %402 : vector<16x128xf32>
    %c74 = arith.constant 74 : index
    %404 = memref.load %arg4[%c74] : memref<100xf32, #tpu.memory_space<smem>>
    %405 = vector.broadcast %404 : f32 to vector<16x128xf32>
    %406 = arith.mulf %405, %40 : vector<16x128xf32>
    %407 = arith.addf %403, %406 : vector<16x128xf32>
    %c75 = arith.constant 75 : index
    %408 = memref.load %arg4[%c75] : memref<100xf32, #tpu.memory_space<smem>>
    %409 = vector.broadcast %408 : f32 to vector<16x128xf32>
    %410 = arith.mulf %409, %48 : vector<16x128xf32>
    %411 = arith.addf %407, %410 : vector<16x128xf32>
    %c76 = arith.constant 76 : index
    %412 = memref.load %arg4[%c76] : memref<100xf32, #tpu.memory_space<smem>>
    %413 = vector.broadcast %412 : f32 to vector<16x128xf32>
    %414 = arith.mulf %413, %56 : vector<16x128xf32>
    %415 = arith.addf %411, %414 : vector<16x128xf32>
    %c77 = arith.constant 77 : index
    %416 = memref.load %arg4[%c77] : memref<100xf32, #tpu.memory_space<smem>>
    %417 = vector.broadcast %416 : f32 to vector<16x128xf32>
    %418 = arith.mulf %417, %64 : vector<16x128xf32>
    %419 = arith.addf %415, %418 : vector<16x128xf32>
    %c78 = arith.constant 78 : index
    %420 = memref.load %arg4[%c78] : memref<100xf32, #tpu.memory_space<smem>>
    %421 = vector.broadcast %420 : f32 to vector<16x128xf32>
    %422 = arith.mulf %421, %72 : vector<16x128xf32>
    %423 = arith.addf %419, %422 : vector<16x128xf32>
    %c79 = arith.constant 79 : index
    %424 = memref.load %arg4[%c79] : memref<100xf32, #tpu.memory_space<smem>>
    %425 = vector.broadcast %424 : f32 to vector<16x128xf32>
    %426 = arith.mulf %425, %80 : vector<16x128xf32>
    %427 = arith.addf %423, %426 : vector<16x128xf32>
    %c7_45 = arith.constant 7 : index
    %428 = memref.load %arg5[%c7_45] : memref<10xf32, #tpu.memory_space<smem>>
    %429 = vector.broadcast %428 : f32 to vector<16x128xf32>
    %430 = arith.addf %427, %429 : vector<16x128xf32>
    %cst_46 = arith.constant 0.000000e+00 : f32
    %431 = vector.broadcast %cst_46 : f32 to vector<16x128xf32>
    %432 = arith.maximumf %430, %431 : vector<16x128xf32>
    %c80 = arith.constant 80 : index
    %433 = memref.load %arg4[%c80] : memref<100xf32, #tpu.memory_space<smem>>
    %434 = vector.broadcast %433 : f32 to vector<16x128xf32>
    %435 = arith.mulf %434, %8 : vector<16x128xf32>
    %c81 = arith.constant 81 : index
    %436 = memref.load %arg4[%c81] : memref<100xf32, #tpu.memory_space<smem>>
    %437 = vector.broadcast %436 : f32 to vector<16x128xf32>
    %438 = arith.mulf %437, %16 : vector<16x128xf32>
    %439 = arith.addf %435, %438 : vector<16x128xf32>
    %c82 = arith.constant 82 : index
    %440 = memref.load %arg4[%c82] : memref<100xf32, #tpu.memory_space<smem>>
    %441 = vector.broadcast %440 : f32 to vector<16x128xf32>
    %442 = arith.mulf %441, %24 : vector<16x128xf32>
    %443 = arith.addf %439, %442 : vector<16x128xf32>
    %c83 = arith.constant 83 : index
    %444 = memref.load %arg4[%c83] : memref<100xf32, #tpu.memory_space<smem>>
    %445 = vector.broadcast %444 : f32 to vector<16x128xf32>
    %446 = arith.mulf %445, %32 : vector<16x128xf32>
    %447 = arith.addf %443, %446 : vector<16x128xf32>
    %c84 = arith.constant 84 : index
    %448 = memref.load %arg4[%c84] : memref<100xf32, #tpu.memory_space<smem>>
    %449 = vector.broadcast %448 : f32 to vector<16x128xf32>
    %450 = arith.mulf %449, %40 : vector<16x128xf32>
    %451 = arith.addf %447, %450 : vector<16x128xf32>
    %c85 = arith.constant 85 : index
    %452 = memref.load %arg4[%c85] : memref<100xf32, #tpu.memory_space<smem>>
    %453 = vector.broadcast %452 : f32 to vector<16x128xf32>
    %454 = arith.mulf %453, %48 : vector<16x128xf32>
    %455 = arith.addf %451, %454 : vector<16x128xf32>
    %c86 = arith.constant 86 : index
    %456 = memref.load %arg4[%c86] : memref<100xf32, #tpu.memory_space<smem>>
    %457 = vector.broadcast %456 : f32 to vector<16x128xf32>
    %458 = arith.mulf %457, %56 : vector<16x128xf32>
    %459 = arith.addf %455, %458 : vector<16x128xf32>
    %c87 = arith.constant 87 : index
    %460 = memref.load %arg4[%c87] : memref<100xf32, #tpu.memory_space<smem>>
    %461 = vector.broadcast %460 : f32 to vector<16x128xf32>
    %462 = arith.mulf %461, %64 : vector<16x128xf32>
    %463 = arith.addf %459, %462 : vector<16x128xf32>
    %c88 = arith.constant 88 : index
    %464 = memref.load %arg4[%c88] : memref<100xf32, #tpu.memory_space<smem>>
    %465 = vector.broadcast %464 : f32 to vector<16x128xf32>
    %466 = arith.mulf %465, %72 : vector<16x128xf32>
    %467 = arith.addf %463, %466 : vector<16x128xf32>
    %c89 = arith.constant 89 : index
    %468 = memref.load %arg4[%c89] : memref<100xf32, #tpu.memory_space<smem>>
    %469 = vector.broadcast %468 : f32 to vector<16x128xf32>
    %470 = arith.mulf %469, %80 : vector<16x128xf32>
    %471 = arith.addf %467, %470 : vector<16x128xf32>
    %c8_47 = arith.constant 8 : index
    %472 = memref.load %arg5[%c8_47] : memref<10xf32, #tpu.memory_space<smem>>
    %473 = vector.broadcast %472 : f32 to vector<16x128xf32>
    %474 = arith.addf %471, %473 : vector<16x128xf32>
    %cst_48 = arith.constant 0.000000e+00 : f32
    %475 = vector.broadcast %cst_48 : f32 to vector<16x128xf32>
    %476 = arith.maximumf %474, %475 : vector<16x128xf32>
    %c90 = arith.constant 90 : index
    %477 = memref.load %arg4[%c90] : memref<100xf32, #tpu.memory_space<smem>>
    %478 = vector.broadcast %477 : f32 to vector<16x128xf32>
    %479 = arith.mulf %478, %8 : vector<16x128xf32>
    %c91 = arith.constant 91 : index
    %480 = memref.load %arg4[%c91] : memref<100xf32, #tpu.memory_space<smem>>
    %481 = vector.broadcast %480 : f32 to vector<16x128xf32>
    %482 = arith.mulf %481, %16 : vector<16x128xf32>
    %483 = arith.addf %479, %482 : vector<16x128xf32>
    %c92 = arith.constant 92 : index
    %484 = memref.load %arg4[%c92] : memref<100xf32, #tpu.memory_space<smem>>
    %485 = vector.broadcast %484 : f32 to vector<16x128xf32>
    %486 = arith.mulf %485, %24 : vector<16x128xf32>
    %487 = arith.addf %483, %486 : vector<16x128xf32>
    %c93 = arith.constant 93 : index
    %488 = memref.load %arg4[%c93] : memref<100xf32, #tpu.memory_space<smem>>
    %489 = vector.broadcast %488 : f32 to vector<16x128xf32>
    %490 = arith.mulf %489, %32 : vector<16x128xf32>
    %491 = arith.addf %487, %490 : vector<16x128xf32>
    %c94 = arith.constant 94 : index
    %492 = memref.load %arg4[%c94] : memref<100xf32, #tpu.memory_space<smem>>
    %493 = vector.broadcast %492 : f32 to vector<16x128xf32>
    %494 = arith.mulf %493, %40 : vector<16x128xf32>
    %495 = arith.addf %491, %494 : vector<16x128xf32>
    %c95 = arith.constant 95 : index
    %496 = memref.load %arg4[%c95] : memref<100xf32, #tpu.memory_space<smem>>
    %497 = vector.broadcast %496 : f32 to vector<16x128xf32>
    %498 = arith.mulf %497, %48 : vector<16x128xf32>
    %499 = arith.addf %495, %498 : vector<16x128xf32>
    %c96 = arith.constant 96 : index
    %500 = memref.load %arg4[%c96] : memref<100xf32, #tpu.memory_space<smem>>
    %501 = vector.broadcast %500 : f32 to vector<16x128xf32>
    %502 = arith.mulf %501, %56 : vector<16x128xf32>
    %503 = arith.addf %499, %502 : vector<16x128xf32>
    %c97 = arith.constant 97 : index
    %504 = memref.load %arg4[%c97] : memref<100xf32, #tpu.memory_space<smem>>
    %505 = vector.broadcast %504 : f32 to vector<16x128xf32>
    %506 = arith.mulf %505, %64 : vector<16x128xf32>
    %507 = arith.addf %503, %506 : vector<16x128xf32>
    %c98 = arith.constant 98 : index
    %508 = memref.load %arg4[%c98] : memref<100xf32, #tpu.memory_space<smem>>
    %509 = vector.broadcast %508 : f32 to vector<16x128xf32>
    %510 = arith.mulf %509, %72 : vector<16x128xf32>
    %511 = arith.addf %507, %510 : vector<16x128xf32>
    %c99 = arith.constant 99 : index
    %512 = memref.load %arg4[%c99] : memref<100xf32, #tpu.memory_space<smem>>
    %513 = vector.broadcast %512 : f32 to vector<16x128xf32>
    %514 = arith.mulf %513, %80 : vector<16x128xf32>
    %515 = arith.addf %511, %514 : vector<16x128xf32>
    %c9_49 = arith.constant 9 : index
    %516 = memref.load %arg5[%c9_49] : memref<10xf32, #tpu.memory_space<smem>>
    %517 = vector.broadcast %516 : f32 to vector<16x128xf32>
    %518 = arith.addf %515, %517 : vector<16x128xf32>
    %cst_50 = arith.constant 0.000000e+00 : f32
    %519 = vector.broadcast %cst_50 : f32 to vector<16x128xf32>
    %520 = arith.maximumf %518, %519 : vector<16x128xf32>
    %c0_51 = arith.constant 0 : index
    %521 = memref.load %arg6[%c0_51] : memref<100xf32, #tpu.memory_space<smem>>
    %522 = vector.broadcast %521 : f32 to vector<16x128xf32>
    %523 = arith.mulf %522, %124 : vector<16x128xf32>
    %c1_52 = arith.constant 1 : index
    %524 = memref.load %arg6[%c1_52] : memref<100xf32, #tpu.memory_space<smem>>
    %525 = vector.broadcast %524 : f32 to vector<16x128xf32>
    %526 = arith.mulf %525, %168 : vector<16x128xf32>
    %527 = arith.addf %523, %526 : vector<16x128xf32>
    %c2_53 = arith.constant 2 : index
    %528 = memref.load %arg6[%c2_53] : memref<100xf32, #tpu.memory_space<smem>>
    %529 = vector.broadcast %528 : f32 to vector<16x128xf32>
    %530 = arith.mulf %529, %212 : vector<16x128xf32>
    %531 = arith.addf %527, %530 : vector<16x128xf32>
    %c3_54 = arith.constant 3 : index
    %532 = memref.load %arg6[%c3_54] : memref<100xf32, #tpu.memory_space<smem>>
    %533 = vector.broadcast %532 : f32 to vector<16x128xf32>
    %534 = arith.mulf %533, %256 : vector<16x128xf32>
    %535 = arith.addf %531, %534 : vector<16x128xf32>
    %c4_55 = arith.constant 4 : index
    %536 = memref.load %arg6[%c4_55] : memref<100xf32, #tpu.memory_space<smem>>
    %537 = vector.broadcast %536 : f32 to vector<16x128xf32>
    %538 = arith.mulf %537, %300 : vector<16x128xf32>
    %539 = arith.addf %535, %538 : vector<16x128xf32>
    %c5_56 = arith.constant 5 : index
    %540 = memref.load %arg6[%c5_56] : memref<100xf32, #tpu.memory_space<smem>>
    %541 = vector.broadcast %540 : f32 to vector<16x128xf32>
    %542 = arith.mulf %541, %344 : vector<16x128xf32>
    %543 = arith.addf %539, %542 : vector<16x128xf32>
    %c6_57 = arith.constant 6 : index
    %544 = memref.load %arg6[%c6_57] : memref<100xf32, #tpu.memory_space<smem>>
    %545 = vector.broadcast %544 : f32 to vector<16x128xf32>
    %546 = arith.mulf %545, %388 : vector<16x128xf32>
    %547 = arith.addf %543, %546 : vector<16x128xf32>
    %c7_58 = arith.constant 7 : index
    %548 = memref.load %arg6[%c7_58] : memref<100xf32, #tpu.memory_space<smem>>
    %549 = vector.broadcast %548 : f32 to vector<16x128xf32>
    %550 = arith.mulf %549, %432 : vector<16x128xf32>
    %551 = arith.addf %547, %550 : vector<16x128xf32>
    %c8_59 = arith.constant 8 : index
    %552 = memref.load %arg6[%c8_59] : memref<100xf32, #tpu.memory_space<smem>>
    %553 = vector.broadcast %552 : f32 to vector<16x128xf32>
    %554 = arith.mulf %553, %476 : vector<16x128xf32>
    %555 = arith.addf %551, %554 : vector<16x128xf32>
    %c9_60 = arith.constant 9 : index
    %556 = memref.load %arg6[%c9_60] : memref<100xf32, #tpu.memory_space<smem>>
    %557 = vector.broadcast %556 : f32 to vector<16x128xf32>
    %558 = arith.mulf %557, %520 : vector<16x128xf32>
    %559 = arith.addf %555, %558 : vector<16x128xf32>
    %c0_61 = arith.constant 0 : index
    %560 = memref.load %arg7[%c0_61] : memref<10xf32, #tpu.memory_space<smem>>
    %561 = vector.broadcast %560 : f32 to vector<16x128xf32>
    %562 = arith.addf %559, %561 : vector<16x128xf32>
    %cst_62 = arith.constant 0.000000e+00 : f32
    %563 = vector.broadcast %cst_62 : f32 to vector<16x128xf32>
    %564 = arith.maximumf %562, %563 : vector<16x128xf32>
    %c10_63 = arith.constant 10 : index
    %565 = memref.load %arg6[%c10_63] : memref<100xf32, #tpu.memory_space<smem>>
    %566 = vector.broadcast %565 : f32 to vector<16x128xf32>
    %567 = arith.mulf %566, %124 : vector<16x128xf32>
    %c11_64 = arith.constant 11 : index
    %568 = memref.load %arg6[%c11_64] : memref<100xf32, #tpu.memory_space<smem>>
    %569 = vector.broadcast %568 : f32 to vector<16x128xf32>
    %570 = arith.mulf %569, %168 : vector<16x128xf32>
    %571 = arith.addf %567, %570 : vector<16x128xf32>
    %c12_65 = arith.constant 12 : index
    %572 = memref.load %arg6[%c12_65] : memref<100xf32, #tpu.memory_space<smem>>
    %573 = vector.broadcast %572 : f32 to vector<16x128xf32>
    %574 = arith.mulf %573, %212 : vector<16x128xf32>
    %575 = arith.addf %571, %574 : vector<16x128xf32>
    %c13_66 = arith.constant 13 : index
    %576 = memref.load %arg6[%c13_66] : memref<100xf32, #tpu.memory_space<smem>>
    %577 = vector.broadcast %576 : f32 to vector<16x128xf32>
    %578 = arith.mulf %577, %256 : vector<16x128xf32>
    %579 = arith.addf %575, %578 : vector<16x128xf32>
    %c14_67 = arith.constant 14 : index
    %580 = memref.load %arg6[%c14_67] : memref<100xf32, #tpu.memory_space<smem>>
    %581 = vector.broadcast %580 : f32 to vector<16x128xf32>
    %582 = arith.mulf %581, %300 : vector<16x128xf32>
    %583 = arith.addf %579, %582 : vector<16x128xf32>
    %c15_68 = arith.constant 15 : index
    %584 = memref.load %arg6[%c15_68] : memref<100xf32, #tpu.memory_space<smem>>
    %585 = vector.broadcast %584 : f32 to vector<16x128xf32>
    %586 = arith.mulf %585, %344 : vector<16x128xf32>
    %587 = arith.addf %583, %586 : vector<16x128xf32>
    %c16_69 = arith.constant 16 : index
    %588 = memref.load %arg6[%c16_69] : memref<100xf32, #tpu.memory_space<smem>>
    %589 = vector.broadcast %588 : f32 to vector<16x128xf32>
    %590 = arith.mulf %589, %388 : vector<16x128xf32>
    %591 = arith.addf %587, %590 : vector<16x128xf32>
    %c17_70 = arith.constant 17 : index
    %592 = memref.load %arg6[%c17_70] : memref<100xf32, #tpu.memory_space<smem>>
    %593 = vector.broadcast %592 : f32 to vector<16x128xf32>
    %594 = arith.mulf %593, %432 : vector<16x128xf32>
    %595 = arith.addf %591, %594 : vector<16x128xf32>
    %c18_71 = arith.constant 18 : index
    %596 = memref.load %arg6[%c18_71] : memref<100xf32, #tpu.memory_space<smem>>
    %597 = vector.broadcast %596 : f32 to vector<16x128xf32>
    %598 = arith.mulf %597, %476 : vector<16x128xf32>
    %599 = arith.addf %595, %598 : vector<16x128xf32>
    %c19_72 = arith.constant 19 : index
    %600 = memref.load %arg6[%c19_72] : memref<100xf32, #tpu.memory_space<smem>>
    %601 = vector.broadcast %600 : f32 to vector<16x128xf32>
    %602 = arith.mulf %601, %520 : vector<16x128xf32>
    %603 = arith.addf %599, %602 : vector<16x128xf32>
    %c1_73 = arith.constant 1 : index
    %604 = memref.load %arg7[%c1_73] : memref<10xf32, #tpu.memory_space<smem>>
    %605 = vector.broadcast %604 : f32 to vector<16x128xf32>
    %606 = arith.addf %603, %605 : vector<16x128xf32>
    %cst_74 = arith.constant 0.000000e+00 : f32
    %607 = vector.broadcast %cst_74 : f32 to vector<16x128xf32>
    %608 = arith.maximumf %606, %607 : vector<16x128xf32>
    %c20_75 = arith.constant 20 : index
    %609 = memref.load %arg6[%c20_75] : memref<100xf32, #tpu.memory_space<smem>>
    %610 = vector.broadcast %609 : f32 to vector<16x128xf32>
    %611 = arith.mulf %610, %124 : vector<16x128xf32>
    %c21_76 = arith.constant 21 : index
    %612 = memref.load %arg6[%c21_76] : memref<100xf32, #tpu.memory_space<smem>>
    %613 = vector.broadcast %612 : f32 to vector<16x128xf32>
    %614 = arith.mulf %613, %168 : vector<16x128xf32>
    %615 = arith.addf %611, %614 : vector<16x128xf32>
    %c22_77 = arith.constant 22 : index
    %616 = memref.load %arg6[%c22_77] : memref<100xf32, #tpu.memory_space<smem>>
    %617 = vector.broadcast %616 : f32 to vector<16x128xf32>
    %618 = arith.mulf %617, %212 : vector<16x128xf32>
    %619 = arith.addf %615, %618 : vector<16x128xf32>
    %c23_78 = arith.constant 23 : index
    %620 = memref.load %arg6[%c23_78] : memref<100xf32, #tpu.memory_space<smem>>
    %621 = vector.broadcast %620 : f32 to vector<16x128xf32>
    %622 = arith.mulf %621, %256 : vector<16x128xf32>
    %623 = arith.addf %619, %622 : vector<16x128xf32>
    %c24_79 = arith.constant 24 : index
    %624 = memref.load %arg6[%c24_79] : memref<100xf32, #tpu.memory_space<smem>>
    %625 = vector.broadcast %624 : f32 to vector<16x128xf32>
    %626 = arith.mulf %625, %300 : vector<16x128xf32>
    %627 = arith.addf %623, %626 : vector<16x128xf32>
    %c25_80 = arith.constant 25 : index
    %628 = memref.load %arg6[%c25_80] : memref<100xf32, #tpu.memory_space<smem>>
    %629 = vector.broadcast %628 : f32 to vector<16x128xf32>
    %630 = arith.mulf %629, %344 : vector<16x128xf32>
    %631 = arith.addf %627, %630 : vector<16x128xf32>
    %c26_81 = arith.constant 26 : index
    %632 = memref.load %arg6[%c26_81] : memref<100xf32, #tpu.memory_space<smem>>
    %633 = vector.broadcast %632 : f32 to vector<16x128xf32>
    %634 = arith.mulf %633, %388 : vector<16x128xf32>
    %635 = arith.addf %631, %634 : vector<16x128xf32>
    %c27_82 = arith.constant 27 : index
    %636 = memref.load %arg6[%c27_82] : memref<100xf32, #tpu.memory_space<smem>>
    %637 = vector.broadcast %636 : f32 to vector<16x128xf32>
    %638 = arith.mulf %637, %432 : vector<16x128xf32>
    %639 = arith.addf %635, %638 : vector<16x128xf32>
    %c28_83 = arith.constant 28 : index
    %640 = memref.load %arg6[%c28_83] : memref<100xf32, #tpu.memory_space<smem>>
    %641 = vector.broadcast %640 : f32 to vector<16x128xf32>
    %642 = arith.mulf %641, %476 : vector<16x128xf32>
    %643 = arith.addf %639, %642 : vector<16x128xf32>
    %c29_84 = arith.constant 29 : index
    %644 = memref.load %arg6[%c29_84] : memref<100xf32, #tpu.memory_space<smem>>
    %645 = vector.broadcast %644 : f32 to vector<16x128xf32>
    %646 = arith.mulf %645, %520 : vector<16x128xf32>
    %647 = arith.addf %643, %646 : vector<16x128xf32>
    %c2_85 = arith.constant 2 : index
    %648 = memref.load %arg7[%c2_85] : memref<10xf32, #tpu.memory_space<smem>>
    %649 = vector.broadcast %648 : f32 to vector<16x128xf32>
    %650 = arith.addf %647, %649 : vector<16x128xf32>
    %cst_86 = arith.constant 0.000000e+00 : f32
    %651 = vector.broadcast %cst_86 : f32 to vector<16x128xf32>
    %652 = arith.maximumf %650, %651 : vector<16x128xf32>
    %c30_87 = arith.constant 30 : index
    %653 = memref.load %arg6[%c30_87] : memref<100xf32, #tpu.memory_space<smem>>
    %654 = vector.broadcast %653 : f32 to vector<16x128xf32>
    %655 = arith.mulf %654, %124 : vector<16x128xf32>
    %c31_88 = arith.constant 31 : index
    %656 = memref.load %arg6[%c31_88] : memref<100xf32, #tpu.memory_space<smem>>
    %657 = vector.broadcast %656 : f32 to vector<16x128xf32>
    %658 = arith.mulf %657, %168 : vector<16x128xf32>
    %659 = arith.addf %655, %658 : vector<16x128xf32>
    %c32_89 = arith.constant 32 : index
    %660 = memref.load %arg6[%c32_89] : memref<100xf32, #tpu.memory_space<smem>>
    %661 = vector.broadcast %660 : f32 to vector<16x128xf32>
    %662 = arith.mulf %661, %212 : vector<16x128xf32>
    %663 = arith.addf %659, %662 : vector<16x128xf32>
    %c33_90 = arith.constant 33 : index
    %664 = memref.load %arg6[%c33_90] : memref<100xf32, #tpu.memory_space<smem>>
    %665 = vector.broadcast %664 : f32 to vector<16x128xf32>
    %666 = arith.mulf %665, %256 : vector<16x128xf32>
    %667 = arith.addf %663, %666 : vector<16x128xf32>
    %c34_91 = arith.constant 34 : index
    %668 = memref.load %arg6[%c34_91] : memref<100xf32, #tpu.memory_space<smem>>
    %669 = vector.broadcast %668 : f32 to vector<16x128xf32>
    %670 = arith.mulf %669, %300 : vector<16x128xf32>
    %671 = arith.addf %667, %670 : vector<16x128xf32>
    %c35_92 = arith.constant 35 : index
    %672 = memref.load %arg6[%c35_92] : memref<100xf32, #tpu.memory_space<smem>>
    %673 = vector.broadcast %672 : f32 to vector<16x128xf32>
    %674 = arith.mulf %673, %344 : vector<16x128xf32>
    %675 = arith.addf %671, %674 : vector<16x128xf32>
    %c36_93 = arith.constant 36 : index
    %676 = memref.load %arg6[%c36_93] : memref<100xf32, #tpu.memory_space<smem>>
    %677 = vector.broadcast %676 : f32 to vector<16x128xf32>
    %678 = arith.mulf %677, %388 : vector<16x128xf32>
    %679 = arith.addf %675, %678 : vector<16x128xf32>
    %c37_94 = arith.constant 37 : index
    %680 = memref.load %arg6[%c37_94] : memref<100xf32, #tpu.memory_space<smem>>
    %681 = vector.broadcast %680 : f32 to vector<16x128xf32>
    %682 = arith.mulf %681, %432 : vector<16x128xf32>
    %683 = arith.addf %679, %682 : vector<16x128xf32>
    %c38_95 = arith.constant 38 : index
    %684 = memref.load %arg6[%c38_95] : memref<100xf32, #tpu.memory_space<smem>>
    %685 = vector.broadcast %684 : f32 to vector<16x128xf32>
    %686 = arith.mulf %685, %476 : vector<16x128xf32>
    %687 = arith.addf %683, %686 : vector<16x128xf32>
    %c39_96 = arith.constant 39 : index
    %688 = memref.load %arg6[%c39_96] : memref<100xf32, #tpu.memory_space<smem>>
    %689 = vector.broadcast %688 : f32 to vector<16x128xf32>
    %690 = arith.mulf %689, %520 : vector<16x128xf32>
    %691 = arith.addf %687, %690 : vector<16x128xf32>
    %c3_97 = arith.constant 3 : index
    %692 = memref.load %arg7[%c3_97] : memref<10xf32, #tpu.memory_space<smem>>
    %693 = vector.broadcast %692 : f32 to vector<16x128xf32>
    %694 = arith.addf %691, %693 : vector<16x128xf32>
    %cst_98 = arith.constant 0.000000e+00 : f32
    %695 = vector.broadcast %cst_98 : f32 to vector<16x128xf32>
    %696 = arith.maximumf %694, %695 : vector<16x128xf32>
    %c40_99 = arith.constant 40 : index
    %697 = memref.load %arg6[%c40_99] : memref<100xf32, #tpu.memory_space<smem>>
    %698 = vector.broadcast %697 : f32 to vector<16x128xf32>
    %699 = arith.mulf %698, %124 : vector<16x128xf32>
    %c41_100 = arith.constant 41 : index
    %700 = memref.load %arg6[%c41_100] : memref<100xf32, #tpu.memory_space<smem>>
    %701 = vector.broadcast %700 : f32 to vector<16x128xf32>
    %702 = arith.mulf %701, %168 : vector<16x128xf32>
    %703 = arith.addf %699, %702 : vector<16x128xf32>
    %c42_101 = arith.constant 42 : index
    %704 = memref.load %arg6[%c42_101] : memref<100xf32, #tpu.memory_space<smem>>
    %705 = vector.broadcast %704 : f32 to vector<16x128xf32>
    %706 = arith.mulf %705, %212 : vector<16x128xf32>
    %707 = arith.addf %703, %706 : vector<16x128xf32>
    %c43_102 = arith.constant 43 : index
    %708 = memref.load %arg6[%c43_102] : memref<100xf32, #tpu.memory_space<smem>>
    %709 = vector.broadcast %708 : f32 to vector<16x128xf32>
    %710 = arith.mulf %709, %256 : vector<16x128xf32>
    %711 = arith.addf %707, %710 : vector<16x128xf32>
    %c44_103 = arith.constant 44 : index
    %712 = memref.load %arg6[%c44_103] : memref<100xf32, #tpu.memory_space<smem>>
    %713 = vector.broadcast %712 : f32 to vector<16x128xf32>
    %714 = arith.mulf %713, %300 : vector<16x128xf32>
    %715 = arith.addf %711, %714 : vector<16x128xf32>
    %c45_104 = arith.constant 45 : index
    %716 = memref.load %arg6[%c45_104] : memref<100xf32, #tpu.memory_space<smem>>
    %717 = vector.broadcast %716 : f32 to vector<16x128xf32>
    %718 = arith.mulf %717, %344 : vector<16x128xf32>
    %719 = arith.addf %715, %718 : vector<16x128xf32>
    %c46_105 = arith.constant 46 : index
    %720 = memref.load %arg6[%c46_105] : memref<100xf32, #tpu.memory_space<smem>>
    %721 = vector.broadcast %720 : f32 to vector<16x128xf32>
    %722 = arith.mulf %721, %388 : vector<16x128xf32>
    %723 = arith.addf %719, %722 : vector<16x128xf32>
    %c47_106 = arith.constant 47 : index
    %724 = memref.load %arg6[%c47_106] : memref<100xf32, #tpu.memory_space<smem>>
    %725 = vector.broadcast %724 : f32 to vector<16x128xf32>
    %726 = arith.mulf %725, %432 : vector<16x128xf32>
    %727 = arith.addf %723, %726 : vector<16x128xf32>
    %c48_107 = arith.constant 48 : index
    %728 = memref.load %arg6[%c48_107] : memref<100xf32, #tpu.memory_space<smem>>
    %729 = vector.broadcast %728 : f32 to vector<16x128xf32>
    %730 = arith.mulf %729, %476 : vector<16x128xf32>
    %731 = arith.addf %727, %730 : vector<16x128xf32>
    %c49_108 = arith.constant 49 : index
    %732 = memref.load %arg6[%c49_108] : memref<100xf32, #tpu.memory_space<smem>>
    %733 = vector.broadcast %732 : f32 to vector<16x128xf32>
    %734 = arith.mulf %733, %520 : vector<16x128xf32>
    %735 = arith.addf %731, %734 : vector<16x128xf32>
    %c4_109 = arith.constant 4 : index
    %736 = memref.load %arg7[%c4_109] : memref<10xf32, #tpu.memory_space<smem>>
    %737 = vector.broadcast %736 : f32 to vector<16x128xf32>
    %738 = arith.addf %735, %737 : vector<16x128xf32>
    %cst_110 = arith.constant 0.000000e+00 : f32
    %739 = vector.broadcast %cst_110 : f32 to vector<16x128xf32>
    %740 = arith.maximumf %738, %739 : vector<16x128xf32>
    %c50_111 = arith.constant 50 : index
    %741 = memref.load %arg6[%c50_111] : memref<100xf32, #tpu.memory_space<smem>>
    %742 = vector.broadcast %741 : f32 to vector<16x128xf32>
    %743 = arith.mulf %742, %124 : vector<16x128xf32>
    %c51_112 = arith.constant 51 : index
    %744 = memref.load %arg6[%c51_112] : memref<100xf32, #tpu.memory_space<smem>>
    %745 = vector.broadcast %744 : f32 to vector<16x128xf32>
    %746 = arith.mulf %745, %168 : vector<16x128xf32>
    %747 = arith.addf %743, %746 : vector<16x128xf32>
    %c52_113 = arith.constant 52 : index
    %748 = memref.load %arg6[%c52_113] : memref<100xf32, #tpu.memory_space<smem>>
    %749 = vector.broadcast %748 : f32 to vector<16x128xf32>
    %750 = arith.mulf %749, %212 : vector<16x128xf32>
    %751 = arith.addf %747, %750 : vector<16x128xf32>
    %c53_114 = arith.constant 53 : index
    %752 = memref.load %arg6[%c53_114] : memref<100xf32, #tpu.memory_space<smem>>
    %753 = vector.broadcast %752 : f32 to vector<16x128xf32>
    %754 = arith.mulf %753, %256 : vector<16x128xf32>
    %755 = arith.addf %751, %754 : vector<16x128xf32>
    %c54_115 = arith.constant 54 : index
    %756 = memref.load %arg6[%c54_115] : memref<100xf32, #tpu.memory_space<smem>>
    %757 = vector.broadcast %756 : f32 to vector<16x128xf32>
    %758 = arith.mulf %757, %300 : vector<16x128xf32>
    %759 = arith.addf %755, %758 : vector<16x128xf32>
    %c55_116 = arith.constant 55 : index
    %760 = memref.load %arg6[%c55_116] : memref<100xf32, #tpu.memory_space<smem>>
    %761 = vector.broadcast %760 : f32 to vector<16x128xf32>
    %762 = arith.mulf %761, %344 : vector<16x128xf32>
    %763 = arith.addf %759, %762 : vector<16x128xf32>
    %c56_117 = arith.constant 56 : index
    %764 = memref.load %arg6[%c56_117] : memref<100xf32, #tpu.memory_space<smem>>
    %765 = vector.broadcast %764 : f32 to vector<16x128xf32>
    %766 = arith.mulf %765, %388 : vector<16x128xf32>
    %767 = arith.addf %763, %766 : vector<16x128xf32>
    %c57_118 = arith.constant 57 : index
    %768 = memref.load %arg6[%c57_118] : memref<100xf32, #tpu.memory_space<smem>>
    %769 = vector.broadcast %768 : f32 to vector<16x128xf32>
    %770 = arith.mulf %769, %432 : vector<16x128xf32>
    %771 = arith.addf %767, %770 : vector<16x128xf32>
    %c58_119 = arith.constant 58 : index
    %772 = memref.load %arg6[%c58_119] : memref<100xf32, #tpu.memory_space<smem>>
    %773 = vector.broadcast %772 : f32 to vector<16x128xf32>
    %774 = arith.mulf %773, %476 : vector<16x128xf32>
    %775 = arith.addf %771, %774 : vector<16x128xf32>
    %c59_120 = arith.constant 59 : index
    %776 = memref.load %arg6[%c59_120] : memref<100xf32, #tpu.memory_space<smem>>
    %777 = vector.broadcast %776 : f32 to vector<16x128xf32>
    %778 = arith.mulf %777, %520 : vector<16x128xf32>
    %779 = arith.addf %775, %778 : vector<16x128xf32>
    %c5_121 = arith.constant 5 : index
    %780 = memref.load %arg7[%c5_121] : memref<10xf32, #tpu.memory_space<smem>>
    %781 = vector.broadcast %780 : f32 to vector<16x128xf32>
    %782 = arith.addf %779, %781 : vector<16x128xf32>
    %cst_122 = arith.constant 0.000000e+00 : f32
    %783 = vector.broadcast %cst_122 : f32 to vector<16x128xf32>
    %784 = arith.maximumf %782, %783 : vector<16x128xf32>
    %c60_123 = arith.constant 60 : index
    %785 = memref.load %arg6[%c60_123] : memref<100xf32, #tpu.memory_space<smem>>
    %786 = vector.broadcast %785 : f32 to vector<16x128xf32>
    %787 = arith.mulf %786, %124 : vector<16x128xf32>
    %c61_124 = arith.constant 61 : index
    %788 = memref.load %arg6[%c61_124] : memref<100xf32, #tpu.memory_space<smem>>
    %789 = vector.broadcast %788 : f32 to vector<16x128xf32>
    %790 = arith.mulf %789, %168 : vector<16x128xf32>
    %791 = arith.addf %787, %790 : vector<16x128xf32>
    %c62_125 = arith.constant 62 : index
    %792 = memref.load %arg6[%c62_125] : memref<100xf32, #tpu.memory_space<smem>>
    %793 = vector.broadcast %792 : f32 to vector<16x128xf32>
    %794 = arith.mulf %793, %212 : vector<16x128xf32>
    %795 = arith.addf %791, %794 : vector<16x128xf32>
    %c63_126 = arith.constant 63 : index
    %796 = memref.load %arg6[%c63_126] : memref<100xf32, #tpu.memory_space<smem>>
    %797 = vector.broadcast %796 : f32 to vector<16x128xf32>
    %798 = arith.mulf %797, %256 : vector<16x128xf32>
    %799 = arith.addf %795, %798 : vector<16x128xf32>
    %c64_127 = arith.constant 64 : index
    %800 = memref.load %arg6[%c64_127] : memref<100xf32, #tpu.memory_space<smem>>
    %801 = vector.broadcast %800 : f32 to vector<16x128xf32>
    %802 = arith.mulf %801, %300 : vector<16x128xf32>
    %803 = arith.addf %799, %802 : vector<16x128xf32>
    %c65_128 = arith.constant 65 : index
    %804 = memref.load %arg6[%c65_128] : memref<100xf32, #tpu.memory_space<smem>>
    %805 = vector.broadcast %804 : f32 to vector<16x128xf32>
    %806 = arith.mulf %805, %344 : vector<16x128xf32>
    %807 = arith.addf %803, %806 : vector<16x128xf32>
    %c66_129 = arith.constant 66 : index
    %808 = memref.load %arg6[%c66_129] : memref<100xf32, #tpu.memory_space<smem>>
    %809 = vector.broadcast %808 : f32 to vector<16x128xf32>
    %810 = arith.mulf %809, %388 : vector<16x128xf32>
    %811 = arith.addf %807, %810 : vector<16x128xf32>
    %c67_130 = arith.constant 67 : index
    %812 = memref.load %arg6[%c67_130] : memref<100xf32, #tpu.memory_space<smem>>
    %813 = vector.broadcast %812 : f32 to vector<16x128xf32>
    %814 = arith.mulf %813, %432 : vector<16x128xf32>
    %815 = arith.addf %811, %814 : vector<16x128xf32>
    %c68_131 = arith.constant 68 : index
    %816 = memref.load %arg6[%c68_131] : memref<100xf32, #tpu.memory_space<smem>>
    %817 = vector.broadcast %816 : f32 to vector<16x128xf32>
    %818 = arith.mulf %817, %476 : vector<16x128xf32>
    %819 = arith.addf %815, %818 : vector<16x128xf32>
    %c69_132 = arith.constant 69 : index
    %820 = memref.load %arg6[%c69_132] : memref<100xf32, #tpu.memory_space<smem>>
    %821 = vector.broadcast %820 : f32 to vector<16x128xf32>
    %822 = arith.mulf %821, %520 : vector<16x128xf32>
    %823 = arith.addf %819, %822 : vector<16x128xf32>
    %c6_133 = arith.constant 6 : index
    %824 = memref.load %arg7[%c6_133] : memref<10xf32, #tpu.memory_space<smem>>
    %825 = vector.broadcast %824 : f32 to vector<16x128xf32>
    %826 = arith.addf %823, %825 : vector<16x128xf32>
    %cst_134 = arith.constant 0.000000e+00 : f32
    %827 = vector.broadcast %cst_134 : f32 to vector<16x128xf32>
    %828 = arith.maximumf %826, %827 : vector<16x128xf32>
    %c70_135 = arith.constant 70 : index
    %829 = memref.load %arg6[%c70_135] : memref<100xf32, #tpu.memory_space<smem>>
    %830 = vector.broadcast %829 : f32 to vector<16x128xf32>
    %831 = arith.mulf %830, %124 : vector<16x128xf32>
    %c71_136 = arith.constant 71 : index
    %832 = memref.load %arg6[%c71_136] : memref<100xf32, #tpu.memory_space<smem>>
    %833 = vector.broadcast %832 : f32 to vector<16x128xf32>
    %834 = arith.mulf %833, %168 : vector<16x128xf32>
    %835 = arith.addf %831, %834 : vector<16x128xf32>
    %c72_137 = arith.constant 72 : index
    %836 = memref.load %arg6[%c72_137] : memref<100xf32, #tpu.memory_space<smem>>
    %837 = vector.broadcast %836 : f32 to vector<16x128xf32>
    %838 = arith.mulf %837, %212 : vector<16x128xf32>
    %839 = arith.addf %835, %838 : vector<16x128xf32>
    %c73_138 = arith.constant 73 : index
    %840 = memref.load %arg6[%c73_138] : memref<100xf32, #tpu.memory_space<smem>>
    %841 = vector.broadcast %840 : f32 to vector<16x128xf32>
    %842 = arith.mulf %841, %256 : vector<16x128xf32>
    %843 = arith.addf %839, %842 : vector<16x128xf32>
    %c74_139 = arith.constant 74 : index
    %844 = memref.load %arg6[%c74_139] : memref<100xf32, #tpu.memory_space<smem>>
    %845 = vector.broadcast %844 : f32 to vector<16x128xf32>
    %846 = arith.mulf %845, %300 : vector<16x128xf32>
    %847 = arith.addf %843, %846 : vector<16x128xf32>
    %c75_140 = arith.constant 75 : index
    %848 = memref.load %arg6[%c75_140] : memref<100xf32, #tpu.memory_space<smem>>
    %849 = vector.broadcast %848 : f32 to vector<16x128xf32>
    %850 = arith.mulf %849, %344 : vector<16x128xf32>
    %851 = arith.addf %847, %850 : vector<16x128xf32>
    %c76_141 = arith.constant 76 : index
    %852 = memref.load %arg6[%c76_141] : memref<100xf32, #tpu.memory_space<smem>>
    %853 = vector.broadcast %852 : f32 to vector<16x128xf32>
    %854 = arith.mulf %853, %388 : vector<16x128xf32>
    %855 = arith.addf %851, %854 : vector<16x128xf32>
    %c77_142 = arith.constant 77 : index
    %856 = memref.load %arg6[%c77_142] : memref<100xf32, #tpu.memory_space<smem>>
    %857 = vector.broadcast %856 : f32 to vector<16x128xf32>
    %858 = arith.mulf %857, %432 : vector<16x128xf32>
    %859 = arith.addf %855, %858 : vector<16x128xf32>
    %c78_143 = arith.constant 78 : index
    %860 = memref.load %arg6[%c78_143] : memref<100xf32, #tpu.memory_space<smem>>
    %861 = vector.broadcast %860 : f32 to vector<16x128xf32>
    %862 = arith.mulf %861, %476 : vector<16x128xf32>
    %863 = arith.addf %859, %862 : vector<16x128xf32>
    %c79_144 = arith.constant 79 : index
    %864 = memref.load %arg6[%c79_144] : memref<100xf32, #tpu.memory_space<smem>>
    %865 = vector.broadcast %864 : f32 to vector<16x128xf32>
    %866 = arith.mulf %865, %520 : vector<16x128xf32>
    %867 = arith.addf %863, %866 : vector<16x128xf32>
    %c7_145 = arith.constant 7 : index
    %868 = memref.load %arg7[%c7_145] : memref<10xf32, #tpu.memory_space<smem>>
    %869 = vector.broadcast %868 : f32 to vector<16x128xf32>
    %870 = arith.addf %867, %869 : vector<16x128xf32>
    %cst_146 = arith.constant 0.000000e+00 : f32
    %871 = vector.broadcast %cst_146 : f32 to vector<16x128xf32>
    %872 = arith.maximumf %870, %871 : vector<16x128xf32>
    %c80_147 = arith.constant 80 : index
    %873 = memref.load %arg6[%c80_147] : memref<100xf32, #tpu.memory_space<smem>>
    %874 = vector.broadcast %873 : f32 to vector<16x128xf32>
    %875 = arith.mulf %874, %124 : vector<16x128xf32>
    %c81_148 = arith.constant 81 : index
    %876 = memref.load %arg6[%c81_148] : memref<100xf32, #tpu.memory_space<smem>>
    %877 = vector.broadcast %876 : f32 to vector<16x128xf32>
    %878 = arith.mulf %877, %168 : vector<16x128xf32>
    %879 = arith.addf %875, %878 : vector<16x128xf32>
    %c82_149 = arith.constant 82 : index
    %880 = memref.load %arg6[%c82_149] : memref<100xf32, #tpu.memory_space<smem>>
    %881 = vector.broadcast %880 : f32 to vector<16x128xf32>
    %882 = arith.mulf %881, %212 : vector<16x128xf32>
    %883 = arith.addf %879, %882 : vector<16x128xf32>
    %c83_150 = arith.constant 83 : index
    %884 = memref.load %arg6[%c83_150] : memref<100xf32, #tpu.memory_space<smem>>
    %885 = vector.broadcast %884 : f32 to vector<16x128xf32>
    %886 = arith.mulf %885, %256 : vector<16x128xf32>
    %887 = arith.addf %883, %886 : vector<16x128xf32>
    %c84_151 = arith.constant 84 : index
    %888 = memref.load %arg6[%c84_151] : memref<100xf32, #tpu.memory_space<smem>>
    %889 = vector.broadcast %888 : f32 to vector<16x128xf32>
    %890 = arith.mulf %889, %300 : vector<16x128xf32>
    %891 = arith.addf %887, %890 : vector<16x128xf32>
    %c85_152 = arith.constant 85 : index
    %892 = memref.load %arg6[%c85_152] : memref<100xf32, #tpu.memory_space<smem>>
    %893 = vector.broadcast %892 : f32 to vector<16x128xf32>
    %894 = arith.mulf %893, %344 : vector<16x128xf32>
    %895 = arith.addf %891, %894 : vector<16x128xf32>
    %c86_153 = arith.constant 86 : index
    %896 = memref.load %arg6[%c86_153] : memref<100xf32, #tpu.memory_space<smem>>
    %897 = vector.broadcast %896 : f32 to vector<16x128xf32>
    %898 = arith.mulf %897, %388 : vector<16x128xf32>
    %899 = arith.addf %895, %898 : vector<16x128xf32>
    %c87_154 = arith.constant 87 : index
    %900 = memref.load %arg6[%c87_154] : memref<100xf32, #tpu.memory_space<smem>>
    %901 = vector.broadcast %900 : f32 to vector<16x128xf32>
    %902 = arith.mulf %901, %432 : vector<16x128xf32>
    %903 = arith.addf %899, %902 : vector<16x128xf32>
    %c88_155 = arith.constant 88 : index
    %904 = memref.load %arg6[%c88_155] : memref<100xf32, #tpu.memory_space<smem>>
    %905 = vector.broadcast %904 : f32 to vector<16x128xf32>
    %906 = arith.mulf %905, %476 : vector<16x128xf32>
    %907 = arith.addf %903, %906 : vector<16x128xf32>
    %c89_156 = arith.constant 89 : index
    %908 = memref.load %arg6[%c89_156] : memref<100xf32, #tpu.memory_space<smem>>
    %909 = vector.broadcast %908 : f32 to vector<16x128xf32>
    %910 = arith.mulf %909, %520 : vector<16x128xf32>
    %911 = arith.addf %907, %910 : vector<16x128xf32>
    %c8_157 = arith.constant 8 : index
    %912 = memref.load %arg7[%c8_157] : memref<10xf32, #tpu.memory_space<smem>>
    %913 = vector.broadcast %912 : f32 to vector<16x128xf32>
    %914 = arith.addf %911, %913 : vector<16x128xf32>
    %cst_158 = arith.constant 0.000000e+00 : f32
    %915 = vector.broadcast %cst_158 : f32 to vector<16x128xf32>
    %916 = arith.maximumf %914, %915 : vector<16x128xf32>
    %c90_159 = arith.constant 90 : index
    %917 = memref.load %arg6[%c90_159] : memref<100xf32, #tpu.memory_space<smem>>
    %918 = vector.broadcast %917 : f32 to vector<16x128xf32>
    %919 = arith.mulf %918, %124 : vector<16x128xf32>
    %c91_160 = arith.constant 91 : index
    %920 = memref.load %arg6[%c91_160] : memref<100xf32, #tpu.memory_space<smem>>
    %921 = vector.broadcast %920 : f32 to vector<16x128xf32>
    %922 = arith.mulf %921, %168 : vector<16x128xf32>
    %923 = arith.addf %919, %922 : vector<16x128xf32>
    %c92_161 = arith.constant 92 : index
    %924 = memref.load %arg6[%c92_161] : memref<100xf32, #tpu.memory_space<smem>>
    %925 = vector.broadcast %924 : f32 to vector<16x128xf32>
    %926 = arith.mulf %925, %212 : vector<16x128xf32>
    %927 = arith.addf %923, %926 : vector<16x128xf32>
    %c93_162 = arith.constant 93 : index
    %928 = memref.load %arg6[%c93_162] : memref<100xf32, #tpu.memory_space<smem>>
    %929 = vector.broadcast %928 : f32 to vector<16x128xf32>
    %930 = arith.mulf %929, %256 : vector<16x128xf32>
    %931 = arith.addf %927, %930 : vector<16x128xf32>
    %c94_163 = arith.constant 94 : index
    %932 = memref.load %arg6[%c94_163] : memref<100xf32, #tpu.memory_space<smem>>
    %933 = vector.broadcast %932 : f32 to vector<16x128xf32>
    %934 = arith.mulf %933, %300 : vector<16x128xf32>
    %935 = arith.addf %931, %934 : vector<16x128xf32>
    %c95_164 = arith.constant 95 : index
    %936 = memref.load %arg6[%c95_164] : memref<100xf32, #tpu.memory_space<smem>>
    %937 = vector.broadcast %936 : f32 to vector<16x128xf32>
    %938 = arith.mulf %937, %344 : vector<16x128xf32>
    %939 = arith.addf %935, %938 : vector<16x128xf32>
    %c96_165 = arith.constant 96 : index
    %940 = memref.load %arg6[%c96_165] : memref<100xf32, #tpu.memory_space<smem>>
    %941 = vector.broadcast %940 : f32 to vector<16x128xf32>
    %942 = arith.mulf %941, %388 : vector<16x128xf32>
    %943 = arith.addf %939, %942 : vector<16x128xf32>
    %c97_166 = arith.constant 97 : index
    %944 = memref.load %arg6[%c97_166] : memref<100xf32, #tpu.memory_space<smem>>
    %945 = vector.broadcast %944 : f32 to vector<16x128xf32>
    %946 = arith.mulf %945, %432 : vector<16x128xf32>
    %947 = arith.addf %943, %946 : vector<16x128xf32>
    %c98_167 = arith.constant 98 : index
    %948 = memref.load %arg6[%c98_167] : memref<100xf32, #tpu.memory_space<smem>>
    %949 = vector.broadcast %948 : f32 to vector<16x128xf32>
    %950 = arith.mulf %949, %476 : vector<16x128xf32>
    %951 = arith.addf %947, %950 : vector<16x128xf32>
    %c99_168 = arith.constant 99 : index
    %952 = memref.load %arg6[%c99_168] : memref<100xf32, #tpu.memory_space<smem>>
    %953 = vector.broadcast %952 : f32 to vector<16x128xf32>
    %954 = arith.mulf %953, %520 : vector<16x128xf32>
    %955 = arith.addf %951, %954 : vector<16x128xf32>
    %c9_169 = arith.constant 9 : index
    %956 = memref.load %arg7[%c9_169] : memref<10xf32, #tpu.memory_space<smem>>
    %957 = vector.broadcast %956 : f32 to vector<16x128xf32>
    %958 = arith.addf %955, %957 : vector<16x128xf32>
    %cst_170 = arith.constant 0.000000e+00 : f32
    %959 = vector.broadcast %cst_170 : f32 to vector<16x128xf32>
    %960 = arith.maximumf %958, %959 : vector<16x128xf32>
    %c0_171 = arith.constant 0 : index
    %961 = memref.load %arg8[%c0_171] : memref<10xf32, #tpu.memory_space<smem>>
    %962 = vector.broadcast %961 : f32 to vector<16x128xf32>
    %963 = arith.mulf %962, %564 : vector<16x128xf32>
    %c1_172 = arith.constant 1 : index
    %964 = memref.load %arg8[%c1_172] : memref<10xf32, #tpu.memory_space<smem>>
    %965 = vector.broadcast %964 : f32 to vector<16x128xf32>
    %966 = arith.mulf %965, %608 : vector<16x128xf32>
    %967 = arith.addf %963, %966 : vector<16x128xf32>
    %c2_173 = arith.constant 2 : index
    %968 = memref.load %arg8[%c2_173] : memref<10xf32, #tpu.memory_space<smem>>
    %969 = vector.broadcast %968 : f32 to vector<16x128xf32>
    %970 = arith.mulf %969, %652 : vector<16x128xf32>
    %971 = arith.addf %967, %970 : vector<16x128xf32>
    %c3_174 = arith.constant 3 : index
    %972 = memref.load %arg8[%c3_174] : memref<10xf32, #tpu.memory_space<smem>>
    %973 = vector.broadcast %972 : f32 to vector<16x128xf32>
    %974 = arith.mulf %973, %696 : vector<16x128xf32>
    %975 = arith.addf %971, %974 : vector<16x128xf32>
    %c4_175 = arith.constant 4 : index
    %976 = memref.load %arg8[%c4_175] : memref<10xf32, #tpu.memory_space<smem>>
    %977 = vector.broadcast %976 : f32 to vector<16x128xf32>
    %978 = arith.mulf %977, %740 : vector<16x128xf32>
    %979 = arith.addf %975, %978 : vector<16x128xf32>
    %c5_176 = arith.constant 5 : index
    %980 = memref.load %arg8[%c5_176] : memref<10xf32, #tpu.memory_space<smem>>
    %981 = vector.broadcast %980 : f32 to vector<16x128xf32>
    %982 = arith.mulf %981, %784 : vector<16x128xf32>
    %983 = arith.addf %979, %982 : vector<16x128xf32>
    %c6_177 = arith.constant 6 : index
    %984 = memref.load %arg8[%c6_177] : memref<10xf32, #tpu.memory_space<smem>>
    %985 = vector.broadcast %984 : f32 to vector<16x128xf32>
    %986 = arith.mulf %985, %828 : vector<16x128xf32>
    %987 = arith.addf %983, %986 : vector<16x128xf32>
    %c7_178 = arith.constant 7 : index
    %988 = memref.load %arg8[%c7_178] : memref<10xf32, #tpu.memory_space<smem>>
    %989 = vector.broadcast %988 : f32 to vector<16x128xf32>
    %990 = arith.mulf %989, %872 : vector<16x128xf32>
    %991 = arith.addf %987, %990 : vector<16x128xf32>
    %c8_179 = arith.constant 8 : index
    %992 = memref.load %arg8[%c8_179] : memref<10xf32, #tpu.memory_space<smem>>
    %993 = vector.broadcast %992 : f32 to vector<16x128xf32>
    %994 = arith.mulf %993, %916 : vector<16x128xf32>
    %995 = arith.addf %991, %994 : vector<16x128xf32>
    %c9_180 = arith.constant 9 : index
    %996 = memref.load %arg8[%c9_180] : memref<10xf32, #tpu.memory_space<smem>>
    %997 = vector.broadcast %996 : f32 to vector<16x128xf32>
    %998 = arith.mulf %997, %960 : vector<16x128xf32>
    %999 = arith.addf %995, %998 : vector<16x128xf32>
    %c0_181 = arith.constant 0 : index
    %1000 = memref.load %arg9[%c0_181] : memref<1xf32, #tpu.memory_space<smem>>
    %1001 = vector.broadcast %1000 : f32 to vector<16x128xf32>
    %1002 = arith.addf %999, %1001 : vector<16x128xf32>
    %c0_182 = arith.constant 0 : index
    %c0_183 = arith.constant 0 : index
    %1003 = vector.load %arg10[%c0_182, %c0_183] : memref<16x128xf32, #tpu.memory_space<vmem>>, vector<16x128xf32>
    tpu.vector_store %arg10[%c0_182, %c0_183], %1002 {strides = array<i32>} : memref<16x128xf32, #tpu.memory_space<vmem>>, vector<16x128xf32>,
    return
  }
  func.func @transform_0(%arg0: i32) -> (i32, i32) {
    %c0_i32 = arith.constant 0 : i32
    %c0_i32_0 = arith.constant 0 : i32
    return %arg0, %c0_i32 : i32, i32
  }
  func.func @transform_1(%arg0: i32) -> i32 {
    %c0_i32 = arith.constant 0 : i32
    %c0_i32_0 = arith.constant 0 : i32
    return %c0_i32 : i32
  }
  func.func @transform_2(%arg0: i32) -> i32 {
    %c0_i32 = arith.constant 0 : i32
    %c0_i32_0 = arith.constant 0 : i32
    return %c0_i32 : i32
  }
  func.func @transform_3(%arg0: i32) -> i32 {
    %c0_i32 = arith.constant 0 : i32
    %c0_i32_0 = arith.constant 0 : i32
    return %c0_i32 : i32
  }
  func.func @transform_4(%arg0: i32) -> i32 {
    %c0_i32 = arith.constant 0 : i32
    %c0_i32_0 = arith.constant 0 : i32
    return %c0_i32 : i32
  }
  func.func @transform_5(%arg0: i32) -> i32 {
    %c0_i32 = arith.constant 0 : i32
    %c0_i32_0 = arith.constant 0 : i32
    return %c0_i32 : i32
  }
  func.func @transform_6(%arg0: i32) -> i32 {
    %c0_i32 = arith.constant 0 : i32
    %c0_i32_0 = arith.constant 0 : i32
    return %c0_i32 : i32
  }
  func.func @transform_7(%arg0: i32) -> i32 {
    %c0_i32 = arith.constant 0 : i32
    %c0_i32_0 = arith.constant 0 : i32
    return %c0_i32 : i32
  }
  func.func @transform_8(%arg0: i32) -> i32 {
    %c0_i32 = arith.constant 0 : i32
    %c0_i32_0 = arith.constant 0 : i32
    return %c0_i32 : i32
  }
  func.func @transform_9(%arg0: i32) -> (i32, i32) {
    %c0_i32 = arith.constant 0 : i32
    %c0_i32_0 = arith.constant 0 : i32
    return %arg0, %c0_i32 : i32, i32
  }
}

</mosaic_0001>

<llo_original>
// kernel: tpu_custom_call.1
$region0: #{tpu_custom_call.1}
  #allocation0 [shape = 'u32[]', space=smem, size = 0x4, offset = 0x4, fixed_abs, tag = 'smem constant byte address 0x4 - core index']
  #allocation1 [shape = 'u32[144,128]{1,0:T(1,128)}', space=vmem, size = 0x12000, scoped, tag = 'internal scratch']
  #allocation2 [shape = 'f32[1]{0:T(128)S(6)}', space=smem, size = 0x200, scoped, tag = 'scoped memory for tpu_custom_call.1']
  %s0 = inlined_call_operand.hbm [shape: f32[48,128], index: 0, kind: input, shape index: {}]
  %s1 = inlined_call_operand.vmem [shape: f32[10], index: 1, kind: input, shape index: {}]
  %s2 = inlined_call_operand.vmem [shape: f32[10], index: 2, kind: input, shape index: {}]
  %s3 = inlined_call_operand.vmem [shape: f32[100], index: 3, kind: input, shape index: {}]
  %s4 = inlined_call_operand.vmem [shape: f32[10], index: 4, kind: input, shape index: {}]
  %s5 = inlined_call_operand.vmem [shape: f32[100], index: 5, kind: input, shape index: {}]
  %s6 = inlined_call_operand.vmem [shape: f32[10], index: 6, kind: input, shape index: {}]
  %s7 = inlined_call_operand.vmem [shape: f32[10], index: 7, kind: input, shape index: {}]
  %s8 = inlined_call_operand.<no memory space> [shape: f32[1], index: 8, kind: input, shape index: {}]
  %s9 = inlined_call_operand.hbm [shape: f32[48,128], index: 9, kind: output, shape index: {}]
  %s10 = sld [smem:[#allocation0]]
  $region101: #{tpu_custom_call.1} parent=0
    _
  %s12 = ssub.s32 1, %s10
  %s13 = scalar_select 0, %s12, %s10
  %14 = sst [smem:[#allocation2]] %s8
  $region1: #{tpu_custom_call.1} parent=0
    #allocation3 [shape = 'u8[16384]{0}', space=vmem, size = 0x4000, scoped, tag = 'input window, operand 0']
    #allocation4 [shape = 's32[2]{0}', space=sflag, size = 0x8, scoped, tag = 'scoped memory for tpu_custom_call.1']
    #allocation5 [shape = 's32[2]{0}', space=sflag, size = 0x8, scoped, tag = 'scoped memory for tpu_custom_call.1']
    #allocation6 [shape = 's32[2]{0}', space=sflag, size = 0x8, scoped, tag = 'scoped memory for tpu_custom_call.1']
    #allocation7 [shape = 'u8[512]{0}', space=smem, size = 0x200, scoped, tag = 'input window, operand 1, single buffered']
    #allocation8 [shape = 'u8[512]{0}', space=smem, size = 0x200, scoped, tag = 'input window, operand 2, single buffered']
    #allocation9 [shape = 's32[1]{0}', space=sflag, size = 0x4, scoped, tag = 'scoped memory for tpu_custom_call.1']
    #allocation10 [shape = 'u8[512]{0}', space=smem, size = 0x200, scoped, tag = 'input window, operand 3, single buffered']
    #allocation11 [shape = 'u8[512]{0}', space=smem, size = 0x200, scoped, tag = 'input window, operand 4, single buffered']
    #allocation12 [shape = 's32[1]{0}', space=sflag, size = 0x4, scoped, tag = 'scoped memory for tpu_custom_call.1']
    #allocation13 [shape = 'u8[512]{0}', space=smem, size = 0x200, scoped, tag = 'input window, operand 5, single buffered']
    #allocation14 [shape = 'u8[512]{0}', space=smem, size = 0x200, scoped, tag = 'input window, operand 6, single buffered']
    #allocation15 [shape = 's32[1]{0}', space=sflag, size = 0x4, scoped, tag = 'scoped memory for tpu_custom_call.1']
    #allocation16 [shape = 'u8[512]{0}', space=smem, size = 0x200, scoped, tag = 'input window, operand 7, single buffered']
    #allocation17 [shape = 'u8[16384]{0}', space=vmem, size = 0x4000, scoped, tag = 'output window, operand 0']
    %15 = vsyncpa [#allocation4], 0
    %s16 = scalar_lea.sflag [#allocation4], 1
    %17 = vsyncpa %s16, 0
    %18 = vsyncpa [#allocation6], 0
    %19 = vsyncpa [#allocation9], 0
    %20 = vsyncpa [#allocation12], 0
    %21 = vsyncpa [#allocation15], 0
    %22 = vsyncpa [#allocation5], 0
    %s23 = scalar_lea.sflag [#allocation5], 1
    %24 = vsyncpa %s23, 0
    loop: start=0, step=1, limit=5
    $region2: #{tpu_custom_call.1} parent=1 // loop_pre_header
      _
    $region3: #{tpu_custom_call.1} parent=1 // loop_header
      %s26 = sphi 0, %s30
      %p27 = scmp.ge.s32.totalorder %s26, 5
      %s36 = sphi 0, %s38
      %s39 = sphi 0, %s36
      %s40 = sphi 0, %s39
      %s56 = sphi 0, %s40
      %s60 = sphi 0, %s60
      %s62 = sphi 0, %s60
      %s63 = sphi 0, %s62
      %s77 = sphi 0, %s63
      %s81 = sphi 0, %s81
      %s83 = sphi 0, %s81
      %s84 = sphi 0, %s83
      %s98 = sphi 0, %s84
      %s102 = sphi 0, %s102
      %s104 = sphi 0, %s102
      %s105 = sphi 0, %s104
      %s119 = sphi 0, %s105
      %s123 = sphi 0, %s123
      %s125 = sphi 0, %s123
      %s126 = sphi 0, %s125
      %s140 = sphi 0, %s126
      %s144 = sphi 0, %s144
      %s146 = sphi 0, %s144
      %s147 = sphi 0, %s146
      %s161 = sphi 0, %s147
      %s165 = sphi 0, %s165
      %s167 = sphi 0, %s165
      %s168 = sphi 0, %s167
      %s182 = sphi 0, %s168
      %s186 = sphi 0, %s186
      %s188 = sphi 0, %s186
      %s189 = sphi 0, %s188
      %s203 = sphi 0, %s189
      %s207 = sphi 0, %s207
      %s209 = sphi 0, %s207
      %s210 = sphi 0, %s209
      %s224 = sphi 0, %s210
      %s230 = sphi 0, %s232
      %s233 = sphi 0, %s230
      %s234 = sphi 0, %s233
      %s250 = sphi 0, %s234
    $region4: #{tpu_custom_call.1} parent=1 // loop_header_branch
      %29 = sbr.rel (%p27) target = $region8
    $region5: #{tpu_custom_call.1} parent=1 // loop_body
      %s31 = ssub.s32 %s26, 1
      %s32 = ssub.s32 %s26, 2
      %s33 = sadd.s32 %s26, 1
      %s34 = ssub.s32 %s26, %s33
      %p35 = scmp.eq.s32.totalorder %s34, 0
      %s37 = sadd.s32 %s36, 1
      %s38 = scalar_select %p35, %s36, %s37
      %p41 = pneg %p35
      %p42 = scmp.eq.s32.totalorder %s26, 2
      %p43 = por %p41, %p42
      %p44 = scmp.ne.s32.totalorder %s36, %s39
      %p45 = scmp.eq.s32.totalorder %s26, 0
      %p46 = por %p44, %p45
      %p47 = scmp.ne.s32.totalorder %s36, %s39
      %p48 = scmp.eq.s32.totalorder %s31, 2
      %p49 = por %p47, %p48
      %p50 = scmp.ne.s32.totalorder %s39, %s40
      %p51 = scmp.eq.s32.totalorder %s31, 0
      %p52 = por %p50, %p51
      %p53 = scmp.ne.s32.totalorder %s39, %s40
      %p54 = scmp.eq.s32.totalorder %s32, 2
      %p55 = por %p53, %p54
      %p57 = scmp.ne.s32.totalorder %s40, %s56
      %p58 = scmp.eq.s32.totalorder %s32, 0
      %p59 = por %p57, %p58
      %s61 = sadd.s32 %s60, 1
      %p64 = scmp.eq.s32.totalorder %s26, 2
      %p65 = scmp.ne.s32.totalorder %s60, %s62
      %p66 = scmp.eq.s32.totalorder %s26, 0
      %p67 = por %p65, %p66
      %p68 = scmp.ne.s32.totalorder %s60, %s62
      %p69 = scmp.eq.s32.totalorder %s31, 2
      %p70 = por %p68, %p69
      %p71 = scmp.ne.s32.totalorder %s62, %s63
      %p72 = scmp.eq.s32.totalorder %s31, 0
      %p73 = por %p71, %p72
      %p74 = scmp.ne.s32.totalorder %s62, %s63
      %p75 = scmp.eq.s32.totalorder %s32, 2
      %p76 = por %p74, %p75
      %p78 = scmp.ne.s32.totalorder %s63, %s77
      %p79 = scmp.eq.s32.totalorder %s32, 0
      %p80 = por %p78, %p79
      %s82 = sadd.s32 %s81, 1
      %p85 = scmp.eq.s32.totalorder %s26, 2
      %p86 = scmp.ne.s32.totalorder %s81, %s83
      %p87 = scmp.eq.s32.totalorder %s26, 0
      %p88 = por %p86, %p87
      %p89 = scmp.ne.s32.totalorder %s81, %s83
      %p90 = scmp.eq.s32.totalorder %s31, 2
      %p91 = por %p89, %p90
      %p92 = scmp.ne.s32.totalorder %s83, %s84
      %p93 = scmp.eq.s32.totalorder %s31, 0
      %p94 = por %p92, %p93
      %p95 = scmp.ne.s32.totalorder %s83, %s84
      %p96 = scmp.eq.s32.totalorder %s32, 2
      %p97 = por %p95, %p96
      %p99 = scmp.ne.s32.totalorder %s84, %s98
      %p100 = scmp.eq.s32.totalorder %s32, 0
      %p101 = por %p99, %p100
      %s103 = sadd.s32 %s102, 1
      %p106 = scmp.eq.s32.totalorder %s26, 2
      %p107 = scmp.ne.s32.totalorder %s102, %s104
      %p108 = scmp.eq.s32.totalorder %s26, 0
      %p109 = por %p107, %p108
      %p110 = scmp.ne.s32.totalorder %s102, %s104
      %p111 = scmp.eq.s32.totalorder %s31, 2
      %p112 = por %p110, %p111
      %p113 = scmp.ne.s32.totalorder %s104, %s105
      %p114 = scmp.eq.s32.totalorder %s31, 0
      %p115 = por %p113, %p114
      %p116 = scmp.ne.s32.totalorder %s104, %s105
      %p117 = scmp.eq.s32.totalorder %s32, 2
      %p118 = por %p116, %p117
      %p120 = scmp.ne.s32.totalorder %s105, %s119
      %p121 = scmp.eq.s32.totalorder %s32, 0
      %p122 = por %p120, %p121
      %s124 = sadd.s32 %s123, 1
      %p127 = scmp.eq.s32.totalorder %s26, 2
      %p128 = scmp.ne.s32.totalorder %s123, %s125
      %p129 = scmp.eq.s32.totalorder %s26, 0
      %p130 = por %p128, %p129
      %p131 = scmp.ne.s32.totalorder %s123, %s125
      %p132 = scmp.eq.s32.totalorder %s31, 2
      %p133 = por %p131, %p132
      %p134 = scmp.ne.s32.totalorder %s125, %s126
      %p135 = scmp.eq.s32.totalorder %s31, 0
      %p136 = por %p134, %p135
      %p137 = scmp.ne.s32.totalorder %s125, %s126
      %p138 = scmp.eq.s32.totalorder %s32, 2
      %p139 = por %p137, %p138
      %p141 = scmp.ne.s32.totalorder %s126, %s140
      %p142 = scmp.eq.s32.totalorder %s32, 0
      %p143 = por %p141, %p142
      %s145 = sadd.s32 %s144, 1
      %p148 = scmp.eq.s32.totalorder %s26, 2
      %p149 = scmp.ne.s32.totalorder %s144, %s146
      %p150 = scmp.eq.s32.totalorder %s26, 0
      %p151 = por %p149, %p150
      %p152 = scmp.ne.s32.totalorder %s144, %s146
      %p153 = scmp.eq.s32.totalorder %s31, 2
      %p154 = por %p152, %p153
      %p155 = scmp.ne.s32.totalorder %s146, %s147
      %p156 = scmp.eq.s32.totalorder %s31, 0
      %p157 = por %p155, %p156
      %p158 = scmp.ne.s32.totalorder %s146, %s147
      %p159 = scmp.eq.s32.totalorder %s32, 2
      %p160 = por %p158, %p159
      %p162 = scmp.ne.s32.totalorder %s147, %s161
      %p163 = scmp.eq.s32.totalorder %s32, 0
      %p164 = por %p162, %p163
      %s166 = sadd.s32 %s165, 1
      %p169 = scmp.eq.s32.totalorder %s26, 2
      %p170 = scmp.ne.s32.totalorder %s165, %s167
      %p171 = scmp.eq.s32.totalorder %s26, 0
      %p172 = por %p170, %p171
      %p173 = scmp.ne.s32.totalorder %s165, %s167
      %p174 = scmp.eq.s32.totalorder %s31, 2
      %p175 = por %p173, %p174
      %p176 = scmp.ne.s32.totalorder %s167, %s168
      %p177 = scmp.eq.s32.totalorder %s31, 0
      %p178 = por %p176, %p177
      %p179 = scmp.ne.s32.totalorder %s167, %s168
      %p180 = scmp.eq.s32.totalorder %s32, 2
      %p181 = por %p179, %p180
      %p183 = scmp.ne.s32.totalorder %s168, %s182
      %p184 = scmp.eq.s32.totalorder %s32, 0
      %p185 = por %p183, %p184
      %s187 = sadd.s32 %s186, 1
      %p190 = scmp.eq.s32.totalorder %s26, 2
      %p191 = scmp.ne.s32.totalorder %s186, %s188
      %p192 = scmp.eq.s32.totalorder %s26, 0
      %p193 = por %p191, %p192
      %p194 = scmp.ne.s32.totalorder %s186, %s188
      %p195 = scmp.eq.s32.totalorder %s31, 2
      %p196 = por %p194, %p195
      %p197 = scmp.ne.s32.totalorder %s188, %s189
      %p198 = scmp.eq.s32.totalorder %s31, 0
      %p199 = por %p197, %p198
      %p200 = scmp.ne.s32.totalorder %s188, %s189
      %p201 = scmp.eq.s32.totalorder %s32, 2
      %p202 = por %p200, %p201
      %p204 = scmp.ne.s32.totalorder %s189, %s203
      %p205 = scmp.eq.s32.totalorder %s32, 0
      %p206 = por %p204, %p205
      %s208 = sadd.s32 %s207, 1
      %p211 = scmp.eq.s32.totalorder %s26, 2
      %p212 = scmp.ne.s32.totalorder %s207, %s209
      %p213 = scmp.eq.s32.totalorder %s26, 0
      %p214 = por %p212, %p213
      %p215 = scmp.ne.s32.totalorder %s207, %s209
      %p216 = scmp.eq.s32.totalorder %s31, 2
      %p217 = por %p215, %p216
      %p218 = scmp.ne.s32.totalorder %s209, %s210
      %p219 = scmp.eq.s32.totalorder %s31, 0
      %p220 = por %p218, %p219
      %p221 = scmp.ne.s32.totalorder %s209, %s210
      %p222 = scmp.eq.s32.totalorder %s32, 2
      %p223 = por %p221, %p222
      %p225 = scmp.ne.s32.totalorder %s210, %s224
      %p226 = scmp.eq.s32.totalorder %s32, 0
      %p227 = por %p225, %p226
      %s228 = ssub.s32 %s26, %s33
      %p229 = scmp.eq.s32.totalorder %s228, 0
      %s231 = sadd.s32 %s230, 1
      %s232 = scalar_select %p229, %s230, %s231
      %p235 = pneg %p229
      %p236 = scmp.eq.s32.totalorder %s26, 2
      %p237 = por %p235, %p236
      %p238 = scmp.ne.s32.totalorder %s230, %s233
      %p239 = scmp.eq.s32.totalorder %s26, 0
      %p240 = por %p238, %p239
      %p241 = scmp.ne.s32.totalorder %s230, %s233
      %p242 = scmp.eq.s32.totalorder %s31, 2
      %p243 = por %p241, %p242
      %p244 = scmp.ne.s32.totalorder %s233, %s234
      %p245 = scmp.eq.s32.totalorder %s31, 0
      %p246 = por %p244, %p245
      %p247 = scmp.ne.s32.totalorder %s233, %s234
      %p248 = scmp.eq.s32.totalorder %s32, 2
      %p249 = por %p247, %p248
      %p251 = scmp.ne.s32.totalorder %s234, %s250
      %p252 = scmp.eq.s32.totalorder %s32, 0
      %p253 = por %p251, %p252
      %p254 = scmp.le.s32.totalorder 1, %s26
      %p255 = scmp.lt.s32.totalorder %s26, 4
      %p256 = pnand %p254, %p255
      %p257 = pneg %p256
      // Predicated region
      $region9: #{tpu_custom_call.1} parent=5 // pred_check
        _
      $region10: #{tpu_custom_call.1} parent=5 // pred_check_branch
        %259 = sbr.rel (%p256) target = $region12
      $region11: #{tpu_custom_call.1} parent=5 // pred_region
        %s260 = ssub.s32 %s26, 1
        // Predicated region
        $region13: #{tpu_custom_call.1} parent=11 // pred_check
          %p261 = pneg %p73
        $region14: #{tpu_custom_call.1} parent=11 // pred_check_branch
          %263 = sbr.rel (%p261) target = $region16
        $region15: #{tpu_custom_call.1} parent=11 // pred_region
          %s265 = ssub.s32 16, 16
          %266 = vsyncadd [#allocation6], %s265
          %s268 = sshll.u32 %s1, 4
          %s269 = int_to_ptr.vmem [resolvable:$true] %s268
          %271 = dma.vmem_to_smem %s269, 16, [#allocation7], [#allocation6]
        $region16: #{tpu_custom_call.1} parent=11 // pred_fallthru
          _
        // Predicated region
        $region17: #{tpu_custom_call.1} parent=11 // pred_check
          %p272 = pneg %p94
        $region18: #{tpu_custom_call.1} parent=11 // pred_check_branch
          %274 = sbr.rel (%p272) target = $region20
        $region19: #{tpu_custom_call.1} parent=11 // pred_region
          %s276 = ssub.s32 16, 16
          %277 = vsyncadd [#allocation9], %s276
          %s279 = sshll.u32 %s2, 4
          %s280 = int_to_ptr.vmem [resolvable:$true] %s279
          %282 = dma.vmem_to_smem %s280, 16, [#allocation8], [#allocation9]
        $region20: #{tpu_custom_call.1} parent=11 // pred_fallthru
          _
        // Predicated region
        $region21: #{tpu_custom_call.1} parent=11 // pred_check
          %p283 = pneg %p115
        $region22: #{tpu_custom_call.1} parent=11 // pred_check_branch
          %285 = sbr.rel (%p283) target = $region24
        $region23: #{tpu_custom_call.1} parent=11 // pred_region
          %s287 = ssub.s32 16, 16
          %288 = vsyncadd [#allocation9], %s287
          %s290 = sshll.u32 %s3, 4
          %s291 = int_to_ptr.vmem [resolvable:$true] %s290
          %293 = dma.vmem_to_smem %s291, 16, [#allocation10], [#allocation9]
        $region24: #{tpu_custom_call.1} parent=11 // pred_fallthru
          _
        // Predicated region
        $region25: #{tpu_custom_call.1} parent=11 // pred_check
          %p294 = pneg %p136
        $region26: #{tpu_custom_call.1} parent=11 // pred_check_branch
          %296 = sbr.rel (%p294) target = $region28
        $region27: #{tpu_custom_call.1} parent=11 // pred_region
          %s298 = ssub.s32 16, 16
          %299 = vsyncadd [#allocation12], %s298
          %s301 = sshll.u32 %s4, 4
          %s302 = int_to_ptr.vmem [resolvable:$true] %s301
          %304 = dma.vmem_to_smem %s302, 16, [#allocation11], [#allocation12]
        $region28: #{tpu_custom_call.1} parent=11 // pred_fallthru
          _
        // Predicated region
        $region29: #{tpu_custom_call.1} parent=11 // pred_check
          %p305 = pneg %p157
        $region30: #{tpu_custom_call.1} parent=11 // pred_check_branch
          %307 = sbr.rel (%p305) target = $region32
        $region31: #{tpu_custom_call.1} parent=11 // pred_region
          %s309 = ssub.s32 16, 16
          %310 = vsyncadd [#allocation12], %s309
          %s312 = sshll.u32 %s5, 4
          %s313 = int_to_ptr.vmem [resolvable:$true] %s312
          %315 = dma.vmem_to_smem %s313, 16, [#allocation13], [#allocation12]
        $region32: #{tpu_custom_call.1} parent=11 // pred_fallthru
          _
        // Predicated region
        $region33: #{tpu_custom_call.1} parent=11 // pred_check
          %p316 = pneg %p178
        $region34: #{tpu_custom_call.1} parent=11 // pred_check_branch
          %318 = sbr.rel (%p316) target = $region36
        $region35: #{tpu_custom_call.1} parent=11 // pred_region
          %s320 = ssub.s32 16, 16
          %321 = vsyncadd [#allocation15], %s320
          %s323 = sshll.u32 %s6, 4
          %s324 = int_to_ptr.vmem [resolvable:$true] %s323
          %326 = dma.vmem_to_smem %s324, 16, [#allocation14], [#allocation15]
        $region36: #{tpu_custom_call.1} parent=11 // pred_fallthru
          _
        // Predicated region
        $region37: #{tpu_custom_call.1} parent=11 // pred_check
          %p327 = pneg %p199
        $region38: #{tpu_custom_call.1} parent=11 // pred_check_branch
          %329 = sbr.rel (%p327) target = $region40
        $region39: #{tpu_custom_call.1} parent=11 // pred_region
          %s331 = ssub.s32 16, 16
          %332 = vsyncadd [#allocation15], %s331
          %s334 = sshll.u32 %s7, 4
          %s335 = int_to_ptr.vmem [resolvable:$true] %s334
          %337 = dma.vmem_to_smem %s335, 16, [#allocation16], [#allocation15]
        $region40: #{tpu_custom_call.1} parent=11 // pred_fallthru
          _
        // Predicated region
        $region41: #{tpu_custom_call.1} parent=11 // pred_check
          %p338 = pneg %p220
        $region42: #{tpu_custom_call.1} parent=11 // pred_check_branch
          %340 = sbr.rel (%p338) target = $region44
        $region43: #{tpu_custom_call.1} parent=11 // pred_region
          _
        $region44: #{tpu_custom_call.1} parent=11 // pred_fallthru
          _
      $region12: #{tpu_custom_call.1} parent=5 // pred_fallthru
        _
      %p341 = scmp.lt.s32.totalorder %s26, 3
      // Predicated region
      $region45: #{tpu_custom_call.1} parent=5 // pred_check
        %p342 = pneg %p341
      $region46: #{tpu_custom_call.1} parent=5 // pred_check_branch
        %344 = sbr.rel (%p342) target = $region48
      $region47: #{tpu_custom_call.1} parent=5 // pred_region
        // Predicated region
        $region49: #{tpu_custom_call.1} parent=47 // pred_check
          %p345 = pneg %p46
        $region50: #{tpu_custom_call.1} parent=47 // pred_check_branch
          %347 = sbr.rel (%p345) target = $region52
        $region51: #{tpu_custom_call.1} parent=47 // pred_region
          %s348 = sand.u32 %s36, 1
          %s349 = scalar_lea.sflag [#allocation4], %s348
          %s350 = sand.u32 %s36, 1
          %s351 = smul.addr %s350, 16
          %s352 = scalar_lea.vmem [#allocation3], %s351
          %s353 = smul.u32 2, %s26
          %s355 = ssub.s32 256, 256
          %356 = vsyncadd %s349, %s355
          %s357 = smul.addr %s353, 128
          %s358 = scalar_lea.hbm %s0, %s357
          %s359 = sshll.u32 %s352, 4
          %s360 = int_to_ptr.vmem [resolvable:$true] %s359
          %365 = dma.hbm_to_vmem [thread:$0]  %s358, 256, %s360, %s349, 128, 128, 8
        $region52: #{tpu_custom_call.1} parent=47 // pred_fallthru
          _
      $region48: #{tpu_custom_call.1} parent=5 // pred_fallthru
        _
      %p366 = scmp.le.s32.totalorder 1, %s26
      %p367 = scmp.lt.s32.totalorder %s26, 4
      %p368 = pnand %p366, %p367
      %p369 = pneg %p368
      // Predicated region
      $region53: #{tpu_custom_call.1} parent=5 // pred_check
        _
      $region54: #{tpu_custom_call.1} parent=5 // pred_check_branch
        %371 = sbr.rel (%p368) target = $region56
      $region55: #{tpu_custom_call.1} parent=5 // pred_region
        %s372 = ssub.s32 %s26, 1
        %s373 = sand.u32 %s39, 1
        %s374 = scalar_lea.sflag [#allocation4], %s373
        %s375 = sand.u32 %s39, 1
        %s376 = smul.addr %s375, 16
        %s377 = scalar_lea.vmem [#allocation3], %s376
        // Predicated region
        $region57: #{tpu_custom_call.1} parent=55 // pred_check
          %p378 = pneg %p52
        $region58: #{tpu_custom_call.1} parent=55 // pred_check_branch
          %380 = sbr.rel (%p378) target = $region60
        $region59: #{tpu_custom_call.1} parent=55 // pred_region
          %381 = dma.done %s374, 256
        $region60: #{tpu_custom_call.1} parent=55 // pred_fallthru
          _
        // Predicated region
        $region61: #{tpu_custom_call.1} parent=55 // pred_check
          %p382 = pneg %p73
        $region62: #{tpu_custom_call.1} parent=55 // pred_check_branch
          %384 = sbr.rel (%p382) target = $region64
        $region63: #{tpu_custom_call.1} parent=55 // pred_region
          %385 = dma.done [#allocation6], 16
        $region64: #{tpu_custom_call.1} parent=55 // pred_fallthru
          _
        // Predicated region
        $region65: #{tpu_custom_call.1} parent=55 // pred_check
          %p386 = pneg %p94
        $region66: #{tpu_custom_call.1} parent=55 // pred_check_branch
          %388 = sbr.rel (%p386) target = $region68
        $region67: #{tpu_custom_call.1} parent=55 // pred_region
          %389 = dma.done [#allocation9], 16
        $region68: #{tpu_custom_call.1} parent=55 // pred_fallthru
          _
        // Predicated region
        $region69: #{tpu_custom_call.1} parent=55 // pred_check
          %p390 = pneg %p115
        $region70: #{tpu_custom_call.1} parent=55 // pred_check_branch
          %392 = sbr.rel (%p390) target = $region72
        $region71: #{tpu_custom_call.1} parent=55 // pred_region
          %393 = dma.done [#allocation9], 16
        $region72: #{tpu_custom_call.1} parent=55 // pred_fallthru
          _
        // Predicated region
        $region73: #{tpu_custom_call.1} parent=55 // pred_check
          %p394 = pneg %p136
        $region74: #{tpu_custom_call.1} parent=55 // pred_check_branch
          %396 = sbr.rel (%p394) target = $region76
        $region75: #{tpu_custom_call.1} parent=55 // pred_region
          %397 = dma.done [#allocation12], 16
        $region76: #{tpu_custom_call.1} parent=55 // pred_fallthru
          _
        // Predicated region
        $region77: #{tpu_custom_call.1} parent=55 // pred_check
          %p398 = pneg %p157
        $region78: #{tpu_custom_call.1} parent=55 // pred_check_branch
          %400 = sbr.rel (%p398) target = $region80
        $region79: #{tpu_custom_call.1} parent=55 // pred_region
          %401 = dma.done [#allocation12], 16
        $region80: #{tpu_custom_call.1} parent=55 // pred_fallthru
          _
        // Predicated region
        $region81: #{tpu_custom_call.1} parent=55 // pred_check
          %p402 = pneg %p178
        $region82: #{tpu_custom_call.1} parent=55 // pred_check_branch
          %404 = sbr.rel (%p402) target = $region84
        $region83: #{tpu_custom_call.1} parent=55 // pred_region
          %405 = dma.done [#allocation15], 16
        $region84: #{tpu_custom_call.1} parent=55 // pred_fallthru
          _
        // Predicated region
        $region85: #{tpu_custom_call.1} parent=55 // pred_check
          %p406 = pneg %p199
        $region86: #{tpu_custom_call.1} parent=55 // pred_check_branch
          %408 = sbr.rel (%p406) target = $region88
        $region87: #{tpu_custom_call.1} parent=55 // pred_region
          %409 = dma.done [#allocation15], 16
        $region88: #{tpu_custom_call.1} parent=55 // pred_fallthru
          _
        %410 = sfence
        %s411 = sand.u32 %s39, 1
        %s412 = scalar_lea.sflag [#allocation4], %s411
        %s413 = sand.u32 %s39, 1
        %s414 = smul.addr %s413, 16
        %s415 = scalar_lea.vmem [#allocation3], %s414
        %p416 = pneg %p52
        %p417 = pneg %p49
        %p418 = pneg %p73
        %p419 = pneg %p70
        %p420 = pneg %p94
        %p421 = pneg %p91
        %p422 = pneg %p115
        %p423 = pneg %p112
        %p424 = pneg %p136
        %p425 = pneg %p133
        %p426 = pneg %p157
        %p427 = pneg %p154
        %p428 = pneg %p178
        %p429 = pneg %p175
        %p430 = pneg %p199
        %p431 = pneg %p196
        %p432 = pneg %p220
        %p433 = pneg %p217
        %p434 = pneg %p246
        %p435 = pneg %p243
        %s436 = sand.u32 %s233, 1
        %s437 = scalar_lea.sflag [#allocation5], %s436
        %s438 = sand.u32 %s233, 1
        %s439 = smul.addr %s438, 16
        %s440 = scalar_lea.vmem [#allocation17], %s439
        %s441 = smul.u32 2, %s31
        %s442 = smul.u32 2, %s31
        %v443 = vld [vmem:[%s377] sm:$0xff]
        %v444 = vld [vmem:[%s377 + $0x8] sm:$0xff]
        %s445 = sld [smem:[#allocation7]]
        %v446 = vstv %s445
        %v447 = vmul.f32 %v446, %v443
        %v448 = vmul.f32 %v446, %v444
        %s449 = sld [smem:[#allocation8]]
        %v450 = vstv %s449
        %v451 = vadd.f32 %v447, %v450
        %v452 = vadd.f32 %v448, %v450
        %v453 = vmax.f32 %v451, 0.0
        %v454 = vmax.f32 %v452, 0.0
        %s455 = sld [smem:[#allocation7 + $0x1]]
        %v456 = vstv %s455
        %v457 = vmul.f32 %v456, %v443
        %v458 = vmul.f32 %v456, %v444
        %s459 = sld [smem:[#allocation8 + $0x1]]
        %v460 = vstv %s459
        %v461 = vadd.f32 %v457, %v460
        %v462 = vadd.f32 %v458, %v460
        %v463 = vmax.f32 %v461, 0.0
        %v464 = vmax.f32 %v462, 0.0
        %s465 = sld [smem:[#allocation7 + $0x2]]
        %v466 = vstv %s465
        %v467 = vmul.f32 %v466, %v443
        %v468 = vmul.f32 %v466, %v444
        %s469 = sld [smem:[#allocation8 + $0x2]]
        %v470 = vstv %s469
        %v471 = vadd.f32 %v467, %v470
        %v472 = vadd.f32 %v468, %v470
        %v473 = vmax.f32 %v471, 0.0
        %v474 = vmax.f32 %v472, 0.0
        %s475 = sld [smem:[#allocation7 + $0x3]]
        %v476 = vstv %s475
        %v477 = vmul.f32 %v476, %v443
        %v478 = vmul.f32 %v476, %v444
        %s479 = sld [smem:[#allocation8 + $0x3]]
        %v480 = vstv %s479
        %v481 = vadd.f32 %v477, %v480
        %v482 = vadd.f32 %v478, %v480
        %v483 = vmax.f32 %v481, 0.0
        %v484 = vmax.f32 %v482, 0.0
        %s485 = sld [smem:[#allocation7 + $0x4]]
        %v486 = vstv %s485
        %v487 = vmul.f32 %v486, %v443
        %v488 = vmul.f32 %v486, %v444
        %s489 = sld [smem:[#allocation8 + $0x4]]
        %v490 = vstv %s489
        %v491 = vadd.f32 %v487, %v490
        %v492 = vadd.f32 %v488, %v490
        %v493 = vmax.f32 %v491, 0.0
        %v494 = vmax.f32 %v492, 0.0
        %s495 = sld [smem:[#allocation7 + $0x5]]
        %v496 = vstv %s495
        %v497 = vmul.f32 %v496, %v443
        %v498 = vmul.f32 %v496, %v444
        %s499 = sld [smem:[#allocation8 + $0x5]]
        %v500 = vstv %s499
        %v501 = vadd.f32 %v497, %v500
        %v502 = vadd.f32 %v498, %v500
        %v503 = vmax.f32 %v501, 0.0
        %v504 = vmax.f32 %v502, 0.0
        %s505 = sld [smem:[#allocation7 + $0x6]]
        %v506 = vstv %s505
        %v507 = vmul.f32 %v506, %v443
        %v508 = vmul.f32 %v506, %v444
        %s509 = sld [smem:[#allocation8 + $0x6]]
        %v510 = vstv %s509
        %v511 = vadd.f32 %v507, %v510
        %v512 = vadd.f32 %v508, %v510
        %v513 = vmax.f32 %v511, 0.0
        %v514 = vmax.f32 %v512, 0.0
        %s515 = sld [smem:[#allocation7 + $0x7]]
        %v516 = vstv %s515
        %v517 = vmul.f32 %v516, %v443
        %v518 = vmul.f32 %v516, %v444
        %s519 = sld [smem:[#allocation8 + $0x7]]
        %v520 = vstv %s519
        %v521 = vadd.f32 %v517, %v520
        %v522 = vadd.f32 %v518, %v520
        %v523 = vmax.f32 %v521, 0.0
        %v524 = vmax.f32 %v522, 0.0
        %s525 = sld [smem:[#allocation7 + $0x8]]
        %v526 = vstv %s525
        %v527 = vmul.f32 %v526, %v443
        %v528 = vmul.f32 %v526, %v444
        %s529 = sld [smem:[#allocation8 + $0x8]]
        %v530 = vstv %s529
        %v531 = vadd.f32 %v527, %v530
        %v532 = vadd.f32 %v528, %v530
        %v533 = vmax.f32 %v531, 0.0
        %v534 = vmax.f32 %v532, 0.0
        %s535 = sld [smem:[#allocation7 + $0x9]]
        %v536 = vstv %s535
        %v537 = vmul.f32 %v536, %v443
        %v538 = vmul.f32 %v536, %v444
        %s539 = sld [smem:[#allocation8 + $0x9]]
        %v540 = vstv %s539
        %v541 = vadd.f32 %v537, %v540
        %v542 = vadd.f32 %v538, %v540
        %v543 = vmax.f32 %v541, 0.0
        %v544 = vmax.f32 %v542, 0.0
        %s545 = sld [smem:[#allocation10]]
        %v546 = vstv %s545
        %v547 = vmul.f32 %v546, %v453
        %v548 = vmul.f32 %v546, %v454
        %s549 = sld [smem:[#allocation10 + $0x1]]
        %v550 = vstv %s549
        %v551 = vmul.f32 %v550, %v463
        %v552 = vmul.f32 %v550, %v464
        %v553 = vadd.f32 %v547, %v551
        %v554 = vadd.f32 %v548, %v552
        %s555 = sld [smem:[#allocation10 + $0x2]]
        %v556 = vstv %s555
        %v557 = vmul.f32 %v556, %v473
        %v558 = vmul.f32 %v556, %v474
        %v559 = vadd.f32 %v553, %v557
        %v560 = vadd.f32 %v554, %v558
        %s561 = sld [smem:[#allocation10 + $0x3]]
        %v562 = vstv %s561
        %v563 = vmul.f32 %v562, %v483
        %v564 = vmul.f32 %v562, %v484
        %v565 = vadd.f32 %v559, %v563
        %v566 = vadd.f32 %v560, %v564
        %s567 = sld [smem:[#allocation10 + $0x4]]
        %v568 = vstv %s567
        %v569 = vmul.f32 %v568, %v493
        %v570 = vmul.f32 %v568, %v494
        %v571 = vadd.f32 %v565, %v569
        %v572 = vadd.f32 %v566, %v570
        %s573 = sld [smem:[#allocation10 + $0x5]]
        %v574 = vstv %s573
        %v575 = vmul.f32 %v574, %v503
        %v576 = vmul.f32 %v574, %v504
        %v577 = vadd.f32 %v571, %v575
        %v578 = vadd.f32 %v572, %v576
        %s579 = sld [smem:[#allocation10 + $0x6]]
        %v580 = vstv %s579
        %v581 = vmul.f32 %v580, %v513
        %v582 = vmul.f32 %v580, %v514
        %v583 = vadd.f32 %v577, %v581
        %v584 = vadd.f32 %v578, %v582
        %s585 = sld [smem:[#allocation10 + $0x7]]
        %v586 = vstv %s585
        %v587 = vmul.f32 %v586, %v523
        %v588 = vmul.f32 %v586, %v524
        %v589 = vadd.f32 %v583, %v587
        %v590 = vadd.f32 %v584, %v588
        %s591 = sld [smem:[#allocation10 + $0x8]]
        %v592 = vstv %s591
        %v593 = vmul.f32 %v592, %v533
        %v594 = vmul.f32 %v592, %v534
        %v595 = vadd.f32 %v589, %v593
        %v596 = vadd.f32 %v590, %v594
        %s597 = sld [smem:[#allocation10 + $0x9]]
        %v598 = vstv %s597
        %v599 = vmul.f32 %v598, %v543
        %v600 = vmul.f32 %v598, %v544
        %v601 = vadd.f32 %v595, %v599
        %v602 = vadd.f32 %v596, %v600
        %s603 = sld [smem:[#allocation11]]
        %v604 = vstv %s603
        %v605 = vadd.f32 %v601, %v604
        %v606 = vadd.f32 %v602, %v604
        %v607 = vmax.f32 %v605, 0.0
        %v608 = vmax.f32 %v606, 0.0
        %s609 = sld [smem:[#allocation10 + $0xa]]
        %v610 = vstv %s609
        %v611 = vmul.f32 %v610, %v453
        %v612 = vmul.f32 %v610, %v454
        %s613 = sld [smem:[#allocation10 + $0xb]]
        %v614 = vstv %s613
        %v615 = vmul.f32 %v614, %v463
        %v616 = vmul.f32 %v614, %v464
        %v617 = vadd.f32 %v611, %v615
        %v618 = vadd.f32 %v612, %v616
        %s619 = sld [smem:[#allocation10 + $0xc]]
        %v620 = vstv %s619
        %v621 = vmul.f32 %v620, %v473
        %v622 = vmul.f32 %v620, %v474
        %v623 = vadd.f32 %v617, %v621
        %v624 = vadd.f32 %v618, %v622
        %s625 = sld [smem:[#allocation10 + $0xd]]
        %v626 = vstv %s625
        %v627 = vmul.f32 %v626, %v483
        %v628 = vmul.f32 %v626, %v484
        %v629 = vadd.f32 %v623, %v627
        %v630 = vadd.f32 %v624, %v628
        %s631 = sld [smem:[#allocation10 + $0xe]]
        %v632 = vstv %s631
        %v633 = vmul.f32 %v632, %v493
        %v634 = vmul.f32 %v632, %v494
        %v635 = vadd.f32 %v629, %v633
        %v636 = vadd.f32 %v630, %v634
        %s637 = sld [smem:[#allocation10 + $0xf]]
        %v638 = vstv %s637
        %v639 = vmul.f32 %v638, %v503
        %v640 = vmul.f32 %v638, %v504
        %v641 = vadd.f32 %v635, %v639
        %v642 = vadd.f32 %v636, %v640
        %s643 = sld [smem:[#allocation10 + $0x10]]
        %v644 = vstv %s643
        %v645 = vmul.f32 %v644, %v513
        %v646 = vmul.f32 %v644, %v514
        %v647 = vadd.f32 %v641, %v645
        %v648 = vadd.f32 %v642, %v646
        %s649 = sld [smem:[#allocation10 + $0x11]]
        %v650 = vstv %s649
        %v651 = vmul.f32 %v650, %v523
        %v652 = vmul.f32 %v650, %v524
        %v653 = vadd.f32 %v647, %v651
        %v654 = vadd.f32 %v648, %v652
        %s655 = sld [smem:[#allocation10 + $0x12]]
        %v656 = vstv %s655
        %v657 = vmul.f32 %v656, %v533
        %v658 = vmul.f32 %v656, %v534
        %v659 = vadd.f32 %v653, %v657
        %v660 = vadd.f32 %v654, %v658
        %s661 = sld [smem:[#allocation10 + $0x13]]
        %v662 = vstv %s661
        %v663 = vmul.f32 %v662, %v543
        %v664 = vmul.f32 %v662, %v544
        %v665 = vadd.f32 %v659, %v663
        %v666 = vadd.f32 %v660, %v664
        %s667 = sld [smem:[#allocation11 + $0x1]]
        %v668 = vstv %s667
        %v669 = vadd.f32 %v665, %v668
        %v670 = vadd.f32 %v666, %v668
        %v671 = vmax.f32 %v669, 0.0
        %v672 = vmax.f32 %v670, 0.0
        %s673 = sld [smem:[#allocation10 + $0x14]]
        %v674 = vstv %s673
        %v675 = vmul.f32 %v674, %v453
        %v676 = vmul.f32 %v674, %v454
        %s677 = sld [smem:[#allocation10 + $0x15]]
        %v678 = vstv %s677
        %v679 = vmul.f32 %v678, %v463
        %v680 = vmul.f32 %v678, %v464
        %v681 = vadd.f32 %v675, %v679
        %v682 = vadd.f32 %v676, %v680
        %s683 = sld [smem:[#allocation10 + $0x16]]
        %v684 = vstv %s683
        %v685 = vmul.f32 %v684, %v473
        %v686 = vmul.f32 %v684, %v474
        %v687 = vadd.f32 %v681, %v685
        %v688 = vadd.f32 %v682, %v686
        %s689 = sld [smem:[#allocation10 + $0x17]]
        %v690 = vstv %s689
        %v691 = vmul.f32 %v690, %v483
        %v692 = vmul.f32 %v690, %v484
        %v693 = vadd.f32 %v687, %v691
        %v694 = vadd.f32 %v688, %v692
        %s695 = sld [smem:[#allocation10 + $0x18]]
        %v696 = vstv %s695
        %v697 = vmul.f32 %v696, %v493
        %v698 = vmul.f32 %v696, %v494
        %v699 = vadd.f32 %v693, %v697
        %v700 = vadd.f32 %v694, %v698
        %s701 = sld [smem:[#allocation10 + $0x19]]
        %v702 = vstv %s701
        %v703 = vmul.f32 %v702, %v503
        %v704 = vmul.f32 %v702, %v504
        %v705 = vadd.f32 %v699, %v703
        %v706 = vadd.f32 %v700, %v704
        %s707 = sld [smem:[#allocation10 + $0x1a]]
        %v708 = vstv %s707
        %v709 = vmul.f32 %v708, %v513
        %v710 = vmul.f32 %v708, %v514
        %v711 = vadd.f32 %v705, %v709
        %v712 = vadd.f32 %v706, %v710
        %s713 = sld [smem:[#allocation10 + $0x1b]]
        %v714 = vstv %s713
        %v715 = vmul.f32 %v714, %v523
        %v716 = vmul.f32 %v714, %v524
        %v717 = vadd.f32 %v711, %v715
        %v718 = vadd.f32 %v712, %v716
        %s719 = sld [smem:[#allocation10 + $0x1c]]
        %v720 = vstv %s719
        %v721 = vmul.f32 %v720, %v533
        %v722 = vmul.f32 %v720, %v534
        %v723 = vadd.f32 %v717, %v721
        %v724 = vadd.f32 %v718, %v722
        %s725 = sld [smem:[#allocation10 + $0x1d]]
        %v726 = vstv %s725
        %v727 = vmul.f32 %v726, %v543
        %v728 = vmul.f32 %v726, %v544
        %v729 = vadd.f32 %v723, %v727
        %v730 = vadd.f32 %v724, %v728
        %s731 = sld [smem:[#allocation11 + $0x2]]
        %v732 = vstv %s731
        %v733 = vadd.f32 %v729, %v732
        %v734 = vadd.f32 %v730, %v732
        %v735 = vmax.f32 %v733, 0.0
        %v736 = vmax.f32 %v734, 0.0
        %s737 = sld [smem:[#allocation10 + $0x1e]]
        %v738 = vstv %s737
        %v739 = vmul.f32 %v738, %v453
        %v740 = vmul.f32 %v738, %v454
        %s741 = sld [smem:[#allocation10 + $0x1f]]
        %v742 = vstv %s741
        %v743 = vmul.f32 %v742, %v463
        %v744 = vmul.f32 %v742, %v464
        %v745 = vadd.f32 %v739, %v743
        %v746 = vadd.f32 %v740, %v744
        %s747 = sld [smem:[#allocation10 + $0x20]]
        %v748 = vstv %s747
        %v749 = vmul.f32 %v748, %v473
        %v750 = vmul.f32 %v748, %v474
        %v751 = vadd.f32 %v745, %v749
        %v752 = vadd.f32 %v746, %v750
        %s753 = sld [smem:[#allocation10 + $0x21]]
        %v754 = vstv %s753
        %v755 = vmul.f32 %v754, %v483
        %v756 = vmul.f32 %v754, %v484
        %v757 = vadd.f32 %v751, %v755
        %v758 = vadd.f32 %v752, %v756
        %s759 = sld [smem:[#allocation10 + $0x22]]
        %v760 = vstv %s759
        %v761 = vmul.f32 %v760, %v493
        %v762 = vmul.f32 %v760, %v494
        %v763 = vadd.f32 %v757, %v761
        %v764 = vadd.f32 %v758, %v762
        %s765 = sld [smem:[#allocation10 + $0x23]]
        %v766 = vstv %s765
        %v767 = vmul.f32 %v766, %v503
        %v768 = vmul.f32 %v766, %v504
        %v769 = vadd.f32 %v763, %v767
        %v770 = vadd.f32 %v764, %v768
        %s771 = sld [smem:[#allocation10 + $0x24]]
        %v772 = vstv %s771
        %v773 = vmul.f32 %v772, %v513
        %v774 = vmul.f32 %v772, %v514
        %v775 = vadd.f32 %v769, %v773
        %v776 = vadd.f32 %v770, %v774
        %s777 = sld [smem:[#allocation10 + $0x25]]
        %v778 = vstv %s777
        %v779 = vmul.f32 %v778, %v523
        %v780 = vmul.f32 %v778, %v524
        %v781 = vadd.f32 %v775, %v779
        %v782 = vadd.f32 %v776, %v780
        %s783 = sld [smem:[#allocation10 + $0x26]]
        %v784 = vstv %s783
        %v785 = vmul.f32 %v784, %v533
        %v786 = vmul.f32 %v784, %v534
        %v787 = vadd.f32 %v781, %v785
        %v788 = vadd.f32 %v782, %v786
        %s789 = sld [smem:[#allocation10 + $0x27]]
        %v790 = vstv %s789
        %v791 = vmul.f32 %v790, %v543
        %v792 = vmul.f32 %v790, %v544
        %v793 = vadd.f32 %v787, %v791
        %v794 = vadd.f32 %v788, %v792
        %s795 = sld [smem:[#allocation11 + $0x3]]
        %v796 = vstv %s795
        %v797 = vadd.f32 %v793, %v796
        %v798 = vadd.f32 %v794, %v796
        %v799 = vmax.f32 %v797, 0.0
        %v800 = vmax.f32 %v798, 0.0
        %s801 = sld [smem:[#allocation10 + $0x28]]
        %v802 = vstv %s801
        %v803 = vmul.f32 %v802, %v453
        %v804 = vmul.f32 %v802, %v454
        %s805 = sld [smem:[#allocation10 + $0x29]]
        %v806 = vstv %s805
        %v807 = vmul.f32 %v806, %v463
        %v808 = vmul.f32 %v806, %v464
        %v809 = vadd.f32 %v803, %v807
        %v810 = vadd.f32 %v804, %v808
        %s811 = sld [smem:[#allocation10 + $0x2a]]
        %v812 = vstv %s811
        %v813 = vmul.f32 %v812, %v473
        %v814 = vmul.f32 %v812, %v474
        %v815 = vadd.f32 %v809, %v813
        %v816 = vadd.f32 %v810, %v814
        %s817 = sld [smem:[#allocation10 + $0x2b]]
        %v818 = vstv %s817
        %v819 = vmul.f32 %v818, %v483
        %v820 = vmul.f32 %v818, %v484
        %v821 = vadd.f32 %v815, %v819
        %v822 = vadd.f32 %v816, %v820
        %s823 = sld [smem:[#allocation10 + $0x2c]]
        %v824 = vstv %s823
        %v825 = vmul.f32 %v824, %v493
        %v826 = vmul.f32 %v824, %v494
        %v827 = vadd.f32 %v821, %v825
        %v828 = vadd.f32 %v822, %v826
        %s829 = sld [smem:[#allocation10 + $0x2d]]
        %v830 = vstv %s829
        %v831 = vmul.f32 %v830, %v503
        %v832 = vmul.f32 %v830, %v504
        %v833 = vadd.f32 %v827, %v831
        %v834 = vadd.f32 %v828, %v832
        %s835 = sld [smem:[#allocation10 + $0x2e]]
        %v836 = vstv %s835
        %v837 = vmul.f32 %v836, %v513
        %v838 = vmul.f32 %v836, %v514
        %v839 = vadd.f32 %v833, %v837
        %v840 = vadd.f32 %v834, %v838
        %s841 = sld [smem:[#allocation10 + $0x2f]]
        %v842 = vstv %s841
        %v843 = vmul.f32 %v842, %v523
        %v844 = vmul.f32 %v842, %v524
        %v845 = vadd.f32 %v839, %v843
        %v846 = vadd.f32 %v840, %v844
        %s847 = sld [smem:[#allocation10 + $0x30]]
        %v848 = vstv %s847
        %v849 = vmul.f32 %v848, %v533
        %v850 = vmul.f32 %v848, %v534
        %v851 = vadd.f32 %v845, %v849
        %v852 = vadd.f32 %v846, %v850
        %s853 = sld [smem:[#allocation10 + $0x31]]
        %v854 = vstv %s853
        %v855 = vmul.f32 %v854, %v543
        %v856 = vmul.f32 %v854, %v544
        %v857 = vadd.f32 %v851, %v855
        %v858 = vadd.f32 %v852, %v856
        %s859 = sld [smem:[#allocation11 + $0x4]]
        %v860 = vstv %s859
        %v861 = vadd.f32 %v857, %v860
        %v862 = vadd.f32 %v858, %v860
        %v863 = vmax.f32 %v861, 0.0
        %v864 = vmax.f32 %v862, 0.0
        %s865 = sld [smem:[#allocation10 + $0x32]]
        %v866 = vstv %s865
        %v867 = vmul.f32 %v866, %v453
        %v868 = vmul.f32 %v866, %v454
        %s869 = sld [smem:[#allocation10 + $0x33]]
        %v870 = vstv %s869
        %v871 = vmul.f32 %v870, %v463
        %v872 = vmul.f32 %v870, %v464
        %v873 = vadd.f32 %v867, %v871
        %v874 = vadd.f32 %v868, %v872
        %s875 = sld [smem:[#allocation10 + $0x34]]
        %v876 = vstv %s875
        %v877 = vmul.f32 %v876, %v473
        %v878 = vmul.f32 %v876, %v474
        %v879 = vadd.f32 %v873, %v877
        %v880 = vadd.f32 %v874, %v878
        %s881 = sld [smem:[#allocation10 + $0x35]]
        %v882 = vstv %s881
        %v883 = vmul.f32 %v882, %v483
        %v884 = vmul.f32 %v882, %v484
        %v885 = vadd.f32 %v879, %v883
        %v886 = vadd.f32 %v880, %v884
        %s887 = sld [smem:[#allocation10 + $0x36]]
        %v888 = vstv %s887
        %v889 = vmul.f32 %v888, %v493
        %v890 = vmul.f32 %v888, %v494
        %v891 = vadd.f32 %v885, %v889
        %v892 = vadd.f32 %v886, %v890
        %s893 = sld [smem:[#allocation10 + $0x37]]
        %v894 = vstv %s893
        %v895 = vmul.f32 %v894, %v503
        %v896 = vmul.f32 %v894, %v504
        %v897 = vadd.f32 %v891, %v895
        %v898 = vadd.f32 %v892, %v896
        %s899 = sld [smem:[#allocation10 + $0x38]]
        %v900 = vstv %s899
        %v901 = vmul.f32 %v900, %v513
        %v902 = vmul.f32 %v900, %v514
        %v903 = vadd.f32 %v897, %v901
        %v904 = vadd.f32 %v898, %v902
        %s905 = sld [smem:[#allocation10 + $0x39]]
        %v906 = vstv %s905
        %v907 = vmul.f32 %v906, %v523
        %v908 = vmul.f32 %v906, %v524
        %v909 = vadd.f32 %v903, %v907
        %v910 = vadd.f32 %v904, %v908
        %s911 = sld [smem:[#allocation10 + $0x3a]]
        %v912 = vstv %s911
        %v913 = vmul.f32 %v912, %v533
        %v914 = vmul.f32 %v912, %v534
        %v915 = vadd.f32 %v909, %v913
        %v916 = vadd.f32 %v910, %v914
        %s917 = sld [smem:[#allocation10 + $0x3b]]
        %v918 = vstv %s917
        %v919 = vmul.f32 %v918, %v543
        %v920 = vmul.f32 %v918, %v544
        %v921 = vadd.f32 %v915, %v919
        %v922 = vadd.f32 %v916, %v920
        %s923 = sld [smem:[#allocation11 + $0x5]]
        %v924 = vstv %s923
        %v925 = vadd.f32 %v921, %v924
        %v926 = vadd.f32 %v922, %v924
        %v927 = vmax.f32 %v925, 0.0
        %v928 = vmax.f32 %v926, 0.0
        %s929 = sld [smem:[#allocation10 + $0x3c]]
        %v930 = vstv %s929
        %v931 = vmul.f32 %v930, %v453
        %v932 = vmul.f32 %v930, %v454
        %s933 = sld [smem:[#allocation10 + $0x3d]]
        %v934 = vstv %s933
        %v935 = vmul.f32 %v934, %v463
        %v936 = vmul.f32 %v934, %v464
        %v937 = vadd.f32 %v931, %v935
        %v938 = vadd.f32 %v932, %v936
        %s939 = sld [smem:[#allocation10 + $0x3e]]
        %v940 = vstv %s939
        %v941 = vmul.f32 %v940, %v473
        %v942 = vmul.f32 %v940, %v474
        %v943 = vadd.f32 %v937, %v941
        %v944 = vadd.f32 %v938, %v942
        %s945 = sld [smem:[#allocation10 + $0x3f]]
        %v946 = vstv %s945
        %v947 = vmul.f32 %v946, %v483
        %v948 = vmul.f32 %v946, %v484
        %v949 = vadd.f32 %v943, %v947
        %v950 = vadd.f32 %v944, %v948
        %s951 = sld [smem:[#allocation10 + $0x40]]
        %v952 = vstv %s951
        %v953 = vmul.f32 %v952, %v493
        %v954 = vmul.f32 %v952, %v494
        %v955 = vadd.f32 %v949, %v953
        %v956 = vadd.f32 %v950, %v954
        %s957 = sld [smem:[#allocation10 + $0x41]]
        %v958 = vstv %s957
        %v959 = vmul.f32 %v958, %v503
        %v960 = vmul.f32 %v958, %v504
        %v961 = vadd.f32 %v955, %v959
        %v962 = vadd.f32 %v956, %v960
        %s963 = sld [smem:[#allocation10 + $0x42]]
        %v964 = vstv %s963
        %v965 = vmul.f32 %v964, %v513
        %v966 = vmul.f32 %v964, %v514
        %v967 = vadd.f32 %v961, %v965
        %v968 = vadd.f32 %v962, %v966
        %s969 = sld [smem:[#allocation10 + $0x43]]
        %v970 = vstv %s969
        %v971 = vmul.f32 %v970, %v523
        %v972 = vmul.f32 %v970, %v524
        %v973 = vadd.f32 %v967, %v971
        %v974 = vadd.f32 %v968, %v972
        %s975 = sld [smem:[#allocation10 + $0x44]]
        %v976 = vstv %s975
        %v977 = vmul.f32 %v976, %v533
        %v978 = vmul.f32 %v976, %v534
        %v979 = vadd.f32 %v973, %v977
        %v980 = vadd.f32 %v974, %v978
        %s981 = sld [smem:[#allocation10 + $0x45]]
        %v982 = vstv %s981
        %v983 = vmul.f32 %v982, %v543
        %v984 = vmul.f32 %v982, %v544
        %v985 = vadd.f32 %v979, %v983
        %v986 = vadd.f32 %v980, %v984
        %s987 = sld [smem:[#allocation11 + $0x6]]
        %v988 = vstv %s987
        %v989 = vadd.f32 %v985, %v988
        %v990 = vadd.f32 %v986, %v988
        %v991 = vmax.f32 %v989, 0.0
        %v992 = vmax.f32 %v990, 0.0
        %s993 = sld [smem:[#allocation10 + $0x46]]
        %v994 = vstv %s993
        %v995 = vmul.f32 %v994, %v453
        %v996 = vmul.f32 %v994, %v454
        %s997 = sld [smem:[#allocation10 + $0x47]]
        %v998 = vstv %s997
        %v999 = vmul.f32 %v998, %v463
        %v1000 = vmul.f32 %v998, %v464
        %v1001 = vadd.f32 %v995, %v999
        %v1002 = vadd.f32 %v996, %v1000
        %s1003 = sld [smem:[#allocation10 + $0x48]]
        %v1004 = vstv %s1003
        %v1005 = vmul.f32 %v1004, %v473
        %v1006 = vmul.f32 %v1004, %v474
        %v1007 = vadd.f32 %v1001, %v1005
        %v1008 = vadd.f32 %v1002, %v1006
        %s1009 = sld [smem:[#allocation10 + $0x49]]
        %v1010 = vstv %s1009
        %v1011 = vmul.f32 %v1010, %v483
        %v1012 = vmul.f32 %v1010, %v484
        %v1013 = vadd.f32 %v1007, %v1011
        %v1014 = vadd.f32 %v1008, %v1012
        %s1015 = sld [smem:[#allocation10 + $0x4a]]
        %v1016 = vstv %s1015
        %v1017 = vmul.f32 %v1016, %v493
        %v1018 = vmul.f32 %v1016, %v494
        %v1019 = vadd.f32 %v1013, %v1017
        %v1020 = vadd.f32 %v1014, %v1018
        %s1021 = sld [smem:[#allocation10 + $0x4b]]
        %v1022 = vstv %s1021
        %v1023 = vmul.f32 %v1022, %v503
        %v1024 = vmul.f32 %v1022, %v504
        %v1025 = vadd.f32 %v1019, %v1023
        %v1026 = vadd.f32 %v1020, %v1024
        %s1027 = sld [smem:[#allocation10 + $0x4c]]
        %v1028 = vstv %s1027
        %v1029 = vmul.f32 %v1028, %v513
        %v1030 = vmul.f32 %v1028, %v514
        %v1031 = vadd.f32 %v1025, %v1029
        %v1032 = vadd.f32 %v1026, %v1030
        %s1033 = sld [smem:[#allocation10 + $0x4d]]
        %v1034 = vstv %s1033
        %v1035 = vmul.f32 %v1034, %v523
        %v1036 = vmul.f32 %v1034, %v524
        %v1037 = vadd.f32 %v1031, %v1035
        %v1038 = vadd.f32 %v1032, %v1036
        %s1039 = sld [smem:[#allocation10 + $0x4e]]
        %v1040 = vstv %s1039
        %v1041 = vmul.f32 %v1040, %v533
        %v1042 = vmul.f32 %v1040, %v534
        %v1043 = vadd.f32 %v1037, %v1041
        %v1044 = vadd.f32 %v1038, %v1042
        %s1045 = sld [smem:[#allocation10 + $0x4f]]
        %v1046 = vstv %s1045
        %v1047 = vmul.f32 %v1046, %v543
        %v1048 = vmul.f32 %v1046, %v544
        %v1049 = vadd.f32 %v1043, %v1047
        %v1050 = vadd.f32 %v1044, %v1048
        %s1051 = sld [smem:[#allocation11 + $0x7]]
        %v1052 = vstv %s1051
        %v1053 = vadd.f32 %v1049, %v1052
        %v1054 = vadd.f32 %v1050, %v1052
        %v1055 = vmax.f32 %v1053, 0.0
        %v1056 = vmax.f32 %v1054, 0.0
        %s1057 = sld [smem:[#allocation10 + $0x50]]
        %v1058 = vstv %s1057
        %v1059 = vmul.f32 %v1058, %v453
        %v1060 = vmul.f32 %v1058, %v454
        %s1061 = sld [smem:[#allocation10 + $0x51]]
        %v1062 = vstv %s1061
        %v1063 = vmul.f32 %v1062, %v463
        %v1064 = vmul.f32 %v1062, %v464
        %v1065 = vadd.f32 %v1059, %v1063
        %v1066 = vadd.f32 %v1060, %v1064
        %s1067 = sld [smem:[#allocation10 + $0x52]]
        %v1068 = vstv %s1067
        %v1069 = vmul.f32 %v1068, %v473
        %v1070 = vmul.f32 %v1068, %v474
        %v1071 = vadd.f32 %v1065, %v1069
        %v1072 = vadd.f32 %v1066, %v1070
        %s1073 = sld [smem:[#allocation10 + $0x53]]
        %v1074 = vstv %s1073
        %v1075 = vmul.f32 %v1074, %v483
        %v1076 = vmul.f32 %v1074, %v484
        %v1077 = vadd.f32 %v1071, %v1075
        %v1078 = vadd.f32 %v1072, %v1076
        %s1079 = sld [smem:[#allocation10 + $0x54]]
        %v1080 = vstv %s1079
        %v1081 = vmul.f32 %v1080, %v493
        %v1082 = vmul.f32 %v1080, %v494
        %v1083 = vadd.f32 %v1077, %v1081
        %v1084 = vadd.f32 %v1078, %v1082
        %s1085 = sld [smem:[#allocation10 + $0x55]]
        %v1086 = vstv %s1085
        %v1087 = vmul.f32 %v1086, %v503
        %v1088 = vmul.f32 %v1086, %v504
        %v1089 = vadd.f32 %v1083, %v1087
        %v1090 = vadd.f32 %v1084, %v1088
        %s1091 = sld [smem:[#allocation10 + $0x56]]
        %v1092 = vstv %s1091
        %v1093 = vmul.f32 %v1092, %v513
        %v1094 = vmul.f32 %v1092, %v514
        %v1095 = vadd.f32 %v1089, %v1093
        %v1096 = vadd.f32 %v1090, %v1094
        %s1097 = sld [smem:[#allocation10 + $0x57]]
        %v1098 = vstv %s1097
        %v1099 = vmul.f32 %v1098, %v523
        %v1100 = vmul.f32 %v1098, %v524
        %v1101 = vadd.f32 %v1095, %v1099
        %v1102 = vadd.f32 %v1096, %v1100
        %s1103 = sld [smem:[#allocation10 + $0x58]]
        %v1104 = vstv %s1103
        %v1105 = vmul.f32 %v1104, %v533
        %v1106 = vmul.f32 %v1104, %v534
        %v1107 = vadd.f32 %v1101, %v1105
        %v1108 = vadd.f32 %v1102, %v1106
        %s1109 = sld [smem:[#allocation10 + $0x59]]
        %v1110 = vstv %s1109
        %v1111 = vmul.f32 %v1110, %v543
        %v1112 = vmul.f32 %v1110, %v544
        %v1113 = vadd.f32 %v1107, %v1111
        %v1114 = vadd.f32 %v1108, %v1112
        %s1115 = sld [smem:[#allocation11 + $0x8]]
        %v1116 = vstv %s1115
        %v1117 = vadd.f32 %v1113, %v1116
        %v1118 = vadd.f32 %v1114, %v1116
        %v1119 = vmax.f32 %v1117, 0.0
        %v1120 = vmax.f32 %v1118, 0.0
        %s1121 = sld [smem:[#allocation10 + $0x5a]]
        %v1122 = vstv %s1121
        %v1123 = vmul.f32 %v1122, %v453
        %v1124 = vmul.f32 %v1122, %v454
        %s1125 = sld [smem:[#allocation10 + $0x5b]]
        %v1126 = vstv %s1125
        %v1127 = vmul.f32 %v1126, %v463
        %v1128 = vmul.f32 %v1126, %v464
        %v1129 = vadd.f32 %v1123, %v1127
        %v1130 = vadd.f32 %v1124, %v1128
        %s1131 = sld [smem:[#allocation10 + $0x5c]]
        %v1132 = vstv %s1131
        %v1133 = vmul.f32 %v1132, %v473
        %v1134 = vmul.f32 %v1132, %v474
        %v1135 = vadd.f32 %v1129, %v1133
        %v1136 = vadd.f32 %v1130, %v1134
        %s1137 = sld [smem:[#allocation10 + $0x5d]]
        %v1138 = vstv %s1137
        %v1139 = vmul.f32 %v1138, %v483
        %v1140 = vmul.f32 %v1138, %v484
        %v1141 = vadd.f32 %v1135, %v1139
        %v1142 = vadd.f32 %v1136, %v1140
        %s1143 = sld [smem:[#allocation10 + $0x5e]]
        %v1144 = vstv %s1143
        %v1145 = vmul.f32 %v1144, %v493
        %v1146 = vmul.f32 %v1144, %v494
        %v1147 = vadd.f32 %v1141, %v1145
        %v1148 = vadd.f32 %v1142, %v1146
        %s1149 = sld [smem:[#allocation10 + $0x5f]]
        %v1150 = vstv %s1149
        %v1151 = vmul.f32 %v1150, %v503
        %v1152 = vmul.f32 %v1150, %v504
        %v1153 = vadd.f32 %v1147, %v1151
        %v1154 = vadd.f32 %v1148, %v1152
        %s1155 = sld [smem:[#allocation10 + $0x60]]
        %v1156 = vstv %s1155
        %v1157 = vmul.f32 %v1156, %v513
        %v1158 = vmul.f32 %v1156, %v514
        %v1159 = vadd.f32 %v1153, %v1157
        %v1160 = vadd.f32 %v1154, %v1158
        %s1161 = sld [smem:[#allocation10 + $0x61]]
        %v1162 = vstv %s1161
        %v1163 = vmul.f32 %v1162, %v523
        %v1164 = vmul.f32 %v1162, %v524
        %v1165 = vadd.f32 %v1159, %v1163
        %v1166 = vadd.f32 %v1160, %v1164
        %s1167 = sld [smem:[#allocation10 + $0x62]]
        %v1168 = vstv %s1167
        %v1169 = vmul.f32 %v1168, %v533
        %v1170 = vmul.f32 %v1168, %v534
        %v1171 = vadd.f32 %v1165, %v1169
        %v1172 = vadd.f32 %v1166, %v1170
        %s1173 = sld [smem:[#allocation10 + $0x63]]
        %v1174 = vstv %s1173
        %v1175 = vmul.f32 %v1174, %v543
        %v1176 = vmul.f32 %v1174, %v544
        %v1177 = vadd.f32 %v1171, %v1175
        %v1178 = vadd.f32 %v1172, %v1176
        %s1179 = sld [smem:[#allocation11 + $0x9]]
        %v1180 = vstv %s1179
        %v1181 = vadd.f32 %v1177, %v1180
        %v1182 = vadd.f32 %v1178, %v1180
        %v1183 = vmax.f32 %v1181, 0.0
        %v1184 = vmax.f32 %v1182, 0.0
        %s1185 = sld [smem:[#allocation13]]
        %v1186 = vstv %s1185
        %v1187 = vmul.f32 %v1186, %v607
        %v1188 = vmul.f32 %v1186, %v608
        %s1189 = sld [smem:[#allocation13 + $0x1]]
        %v1190 = vstv %s1189
        %v1191 = vmul.f32 %v1190, %v671
        %v1192 = vmul.f32 %v1190, %v672
        %v1193 = vadd.f32 %v1187, %v1191
        %v1194 = vadd.f32 %v1188, %v1192
        %s1195 = sld [smem:[#allocation13 + $0x2]]
        %v1196 = vstv %s1195
        %v1197 = vmul.f32 %v1196, %v735
        %v1198 = vmul.f32 %v1196, %v736
        %v1199 = vadd.f32 %v1193, %v1197
        %v1200 = vadd.f32 %v1194, %v1198
        %s1201 = sld [smem:[#allocation13 + $0x3]]
        %v1202 = vstv %s1201
        %v1203 = vmul.f32 %v1202, %v799
        %v1204 = vmul.f32 %v1202, %v800
        %v1205 = vadd.f32 %v1199, %v1203
        %v1206 = vadd.f32 %v1200, %v1204
        %s1207 = sld [smem:[#allocation13 + $0x4]]
        %v1208 = vstv %s1207
        %v1209 = vmul.f32 %v1208, %v863
        %v1210 = vmul.f32 %v1208, %v864
        %v1211 = vadd.f32 %v1205, %v1209
        %v1212 = vadd.f32 %v1206, %v1210
        %s1213 = sld [smem:[#allocation13 + $0x5]]
        %v1214 = vstv %s1213
        %v1215 = vmul.f32 %v1214, %v927
        %v1216 = vmul.f32 %v1214, %v928
        %v1217 = vadd.f32 %v1211, %v1215
        %v1218 = vadd.f32 %v1212, %v1216
        %s1219 = sld [smem:[#allocation13 + $0x6]]
        %v1220 = vstv %s1219
        %v1221 = vmul.f32 %v1220, %v991
        %v1222 = vmul.f32 %v1220, %v992
        %v1223 = vadd.f32 %v1217, %v1221
        %v1224 = vadd.f32 %v1218, %v1222
        %s1225 = sld [smem:[#allocation13 + $0x7]]
        %v1226 = vstv %s1225
        %v1227 = vmul.f32 %v1226, %v1055
        %v1228 = vmul.f32 %v1226, %v1056
        %v1229 = vadd.f32 %v1223, %v1227
        %v1230 = vadd.f32 %v1224, %v1228
        %s1231 = sld [smem:[#allocation13 + $0x8]]
        %v1232 = vstv %s1231
        %v1233 = vmul.f32 %v1232, %v1119
        %v1234 = vmul.f32 %v1232, %v1120
        %v1235 = vadd.f32 %v1229, %v1233
        %v1236 = vadd.f32 %v1230, %v1234
        %s1237 = sld [smem:[#allocation13 + $0x9]]
        %v1238 = vstv %s1237
        %v1239 = vmul.f32 %v1238, %v1183
        %v1240 = vmul.f32 %v1238, %v1184
        %v1241 = vadd.f32 %v1235, %v1239
        %v1242 = vadd.f32 %v1236, %v1240
        %s1243 = sld [smem:[#allocation14]]
        %v1244 = vstv %s1243
        %v1245 = vadd.f32 %v1241, %v1244
        %v1246 = vadd.f32 %v1242, %v1244
        %v1247 = vmax.f32 %v1245, 0.0
        %v1248 = vmax.f32 %v1246, 0.0
        %s1249 = sld [smem:[#allocation13 + $0xa]]
        %v1250 = vstv %s1249
        %v1251 = vmul.f32 %v1250, %v607
        %v1252 = vmul.f32 %v1250, %v608
        %s1253 = sld [smem:[#allocation13 + $0xb]]
        %v1254 = vstv %s1253
        %v1255 = vmul.f32 %v1254, %v671
        %v1256 = vmul.f32 %v1254, %v672
        %v1257 = vadd.f32 %v1251, %v1255
        %v1258 = vadd.f32 %v1252, %v1256
        %s1259 = sld [smem:[#allocation13 + $0xc]]
        %v1260 = vstv %s1259
        %v1261 = vmul.f32 %v1260, %v735
        %v1262 = vmul.f32 %v1260, %v736
        %v1263 = vadd.f32 %v1257, %v1261
        %v1264 = vadd.f32 %v1258, %v1262
        %s1265 = sld [smem:[#allocation13 + $0xd]]
        %v1266 = vstv %s1265
        %v1267 = vmul.f32 %v1266, %v799
        %v1268 = vmul.f32 %v1266, %v800
        %v1269 = vadd.f32 %v1263, %v1267
        %v1270 = vadd.f32 %v1264, %v1268
        %s1271 = sld [smem:[#allocation13 + $0xe]]
        %v1272 = vstv %s1271
        %v1273 = vmul.f32 %v1272, %v863
        %v1274 = vmul.f32 %v1272, %v864
        %v1275 = vadd.f32 %v1269, %v1273
        %v1276 = vadd.f32 %v1270, %v1274
        %s1277 = sld [smem:[#allocation13 + $0xf]]
        %v1278 = vstv %s1277
        %v1279 = vmul.f32 %v1278, %v927
        %v1280 = vmul.f32 %v1278, %v928
        %v1281 = vadd.f32 %v1275, %v1279
        %v1282 = vadd.f32 %v1276, %v1280
        %s1283 = sld [smem:[#allocation13 + $0x10]]
        %v1284 = vstv %s1283
        %v1285 = vmul.f32 %v1284, %v991
        %v1286 = vmul.f32 %v1284, %v992
        %v1287 = vadd.f32 %v1281, %v1285
        %v1288 = vadd.f32 %v1282, %v1286
        %s1289 = sld [smem:[#allocation13 + $0x11]]
        %v1290 = vstv %s1289
        %v1291 = vmul.f32 %v1290, %v1055
        %v1292 = vmul.f32 %v1290, %v1056
        %v1293 = vadd.f32 %v1287, %v1291
        %v1294 = vadd.f32 %v1288, %v1292
        %s1295 = sld [smem:[#allocation13 + $0x12]]
        %v1296 = vstv %s1295
        %v1297 = vmul.f32 %v1296, %v1119
        %v1298 = vmul.f32 %v1296, %v1120
        %v1299 = vadd.f32 %v1293, %v1297
        %v1300 = vadd.f32 %v1294, %v1298
        %s1301 = sld [smem:[#allocation13 + $0x13]]
        %v1302 = vstv %s1301
        %v1303 = vmul.f32 %v1302, %v1183
        %v1304 = vmul.f32 %v1302, %v1184
        %v1305 = vadd.f32 %v1299, %v1303
        %v1306 = vadd.f32 %v1300, %v1304
        %s1307 = sld [smem:[#allocation14 + $0x1]]
        %v1308 = vstv %s1307
        %v1309 = vadd.f32 %v1305, %v1308
        %v1310 = vadd.f32 %v1306, %v1308
        %v1311 = vmax.f32 %v1309, 0.0
        %v1312 = vmax.f32 %v1310, 0.0
        %s1313 = sld [smem:[#allocation13 + $0x14]]
        %v1314 = vstv %s1313
        %v1315 = vmul.f32 %v1314, %v607
        %v1316 = vmul.f32 %v1314, %v608
        %s1317 = sld [smem:[#allocation13 + $0x15]]
        %v1318 = vstv %s1317
        %v1319 = vmul.f32 %v1318, %v671
        %v1320 = vmul.f32 %v1318, %v672
        %v1321 = vadd.f32 %v1315, %v1319
        %v1322 = vadd.f32 %v1316, %v1320
        %s1323 = sld [smem:[#allocation13 + $0x16]]
        %v1324 = vstv %s1323
        %v1325 = vmul.f32 %v1324, %v735
        %v1326 = vmul.f32 %v1324, %v736
        %v1327 = vadd.f32 %v1321, %v1325
        %v1328 = vadd.f32 %v1322, %v1326
        %s1329 = sld [smem:[#allocation13 + $0x17]]
        %v1330 = vstv %s1329
        %v1331 = vmul.f32 %v1330, %v799
        %v1332 = vmul.f32 %v1330, %v800
        %v1333 = vadd.f32 %v1327, %v1331
        %v1334 = vadd.f32 %v1328, %v1332
        %s1335 = sld [smem:[#allocation13 + $0x18]]
        %v1336 = vstv %s1335
        %v1337 = vmul.f32 %v1336, %v863
        %v1338 = vmul.f32 %v1336, %v864
        %v1339 = vadd.f32 %v1333, %v1337
        %v1340 = vadd.f32 %v1334, %v1338
        %s1341 = sld [smem:[#allocation13 + $0x19]]
        %v1342 = vstv %s1341
        %v1343 = vmul.f32 %v1342, %v927
        %v1344 = vmul.f32 %v1342, %v928
        %v1345 = vadd.f32 %v1339, %v1343
        %v1346 = vadd.f32 %v1340, %v1344
        %s1347 = sld [smem:[#allocation13 + $0x1a]]
        %v1348 = vstv %s1347
        %v1349 = vmul.f32 %v1348, %v991
        %v1350 = vmul.f32 %v1348, %v992
        %v1351 = vadd.f32 %v1345, %v1349
        %v1352 = vadd.f32 %v1346, %v1350
        %s1353 = sld [smem:[#allocation13 + $0x1b]]
        %v1354 = vstv %s1353
        %v1355 = vmul.f32 %v1354, %v1055
        %v1356 = vmul.f32 %v1354, %v1056
        %v1357 = vadd.f32 %v1351, %v1355
        %v1358 = vadd.f32 %v1352, %v1356
        %s1359 = sld [smem:[#allocation13 + $0x1c]]
        %v1360 = vstv %s1359
        %v1361 = vmul.f32 %v1360, %v1119
        %v1362 = vmul.f32 %v1360, %v1120
        %v1363 = vadd.f32 %v1357, %v1361
        %v1364 = vadd.f32 %v1358, %v1362
        %s1365 = sld [smem:[#allocation13 + $0x1d]]
        %v1366 = vstv %s1365
        %v1367 = vmul.f32 %v1366, %v1183
        %v1368 = vmul.f32 %v1366, %v1184
        %v1369 = vadd.f32 %v1363, %v1367
        %v1370 = vadd.f32 %v1364, %v1368
        %s1371 = sld [smem:[#allocation14 + $0x2]]
        %v1372 = vstv %s1371
        %v1373 = vadd.f32 %v1369, %v1372
        %v1374 = vadd.f32 %v1370, %v1372
        %v1375 = vmax.f32 %v1373, 0.0
        %v1376 = vmax.f32 %v1374, 0.0
        %s1377 = sld [smem:[#allocation13 + $0x1e]]
        %v1378 = vstv %s1377
        %v1379 = vmul.f32 %v1378, %v607
        %v1380 = vmul.f32 %v1378, %v608
        %s1381 = sld [smem:[#allocation13 + $0x1f]]
        %v1382 = vstv %s1381
        %v1383 = vmul.f32 %v1382, %v671
        %v1384 = vmul.f32 %v1382, %v672
        %v1385 = vadd.f32 %v1379, %v1383
        %v1386 = vadd.f32 %v1380, %v1384
        %s1387 = sld [smem:[#allocation13 + $0x20]]
        %v1388 = vstv %s1387
        %v1389 = vmul.f32 %v1388, %v735
        %v1390 = vmul.f32 %v1388, %v736
        %v1391 = vadd.f32 %v1385, %v1389
        %v1392 = vadd.f32 %v1386, %v1390
        %s1393 = sld [smem:[#allocation13 + $0x21]]
        %v1394 = vstv %s1393
        %v1395 = vmul.f32 %v1394, %v799
        %v1396 = vmul.f32 %v1394, %v800
        %v1397 = vadd.f32 %v1391, %v1395
        %v1398 = vadd.f32 %v1392, %v1396
        %s1399 = sld [smem:[#allocation13 + $0x22]]
        %v1400 = vstv %s1399
        %v1401 = vmul.f32 %v1400, %v863
        %v1402 = vmul.f32 %v1400, %v864
        %v1403 = vadd.f32 %v1397, %v1401
        %v1404 = vadd.f32 %v1398, %v1402
        %s1405 = sld [smem:[#allocation13 + $0x23]]
        %v1406 = vstv %s1405
        %v1407 = vmul.f32 %v1406, %v927
        %v1408 = vmul.f32 %v1406, %v928
        %v1409 = vadd.f32 %v1403, %v1407
        %v1410 = vadd.f32 %v1404, %v1408
        %s1411 = sld [smem:[#allocation13 + $0x24]]
        %v1412 = vstv %s1411
        %v1413 = vmul.f32 %v1412, %v991
        %v1414 = vmul.f32 %v1412, %v992
        %v1415 = vadd.f32 %v1409, %v1413
        %v1416 = vadd.f32 %v1410, %v1414
        %s1417 = sld [smem:[#allocation13 + $0x25]]
        %v1418 = vstv %s1417
        %v1419 = vmul.f32 %v1418, %v1055
        %v1420 = vmul.f32 %v1418, %v1056
        %v1421 = vadd.f32 %v1415, %v1419
        %v1422 = vadd.f32 %v1416, %v1420
        %s1423 = sld [smem:[#allocation13 + $0x26]]
        %v1424 = vstv %s1423
        %v1425 = vmul.f32 %v1424, %v1119
        %v1426 = vmul.f32 %v1424, %v1120
        %v1427 = vadd.f32 %v1421, %v1425
        %v1428 = vadd.f32 %v1422, %v1426
        %s1429 = sld [smem:[#allocation13 + $0x27]]
        %v1430 = vstv %s1429
        %v1431 = vmul.f32 %v1430, %v1183
        %v1432 = vmul.f32 %v1430, %v1184
        %v1433 = vadd.f32 %v1427, %v1431
        %v1434 = vadd.f32 %v1428, %v1432
        %s1435 = sld [smem:[#allocation14 + $0x3]]
        %v1436 = vstv %s1435
        %v1437 = vadd.f32 %v1433, %v1436
        %v1438 = vadd.f32 %v1434, %v1436
        %v1439 = vmax.f32 %v1437, 0.0
        %v1440 = vmax.f32 %v1438, 0.0
        %s1441 = sld [smem:[#allocation13 + $0x28]]
        %v1442 = vstv %s1441
        %v1443 = vmul.f32 %v1442, %v607
        %v1444 = vmul.f32 %v1442, %v608
        %s1445 = sld [smem:[#allocation13 + $0x29]]
        %v1446 = vstv %s1445
        %v1447 = vmul.f32 %v1446, %v671
        %v1448 = vmul.f32 %v1446, %v672
        %v1449 = vadd.f32 %v1443, %v1447
        %v1450 = vadd.f32 %v1444, %v1448
        %s1451 = sld [smem:[#allocation13 + $0x2a]]
        %v1452 = vstv %s1451
        %v1453 = vmul.f32 %v1452, %v735
        %v1454 = vmul.f32 %v1452, %v736
        %v1455 = vadd.f32 %v1449, %v1453
        %v1456 = vadd.f32 %v1450, %v1454
        %s1457 = sld [smem:[#allocation13 + $0x2b]]
        %v1458 = vstv %s1457
        %v1459 = vmul.f32 %v1458, %v799
        %v1460 = vmul.f32 %v1458, %v800
        %v1461 = vadd.f32 %v1455, %v1459
        %v1462 = vadd.f32 %v1456, %v1460
        %s1463 = sld [smem:[#allocation13 + $0x2c]]
        %v1464 = vstv %s1463
        %v1465 = vmul.f32 %v1464, %v863
        %v1466 = vmul.f32 %v1464, %v864
        %v1467 = vadd.f32 %v1461, %v1465
        %v1468 = vadd.f32 %v1462, %v1466
        %s1469 = sld [smem:[#allocation13 + $0x2d]]
        %v1470 = vstv %s1469
        %v1471 = vmul.f32 %v1470, %v927
        %v1472 = vmul.f32 %v1470, %v928
        %v1473 = vadd.f32 %v1467, %v1471
        %v1474 = vadd.f32 %v1468, %v1472
        %s1475 = sld [smem:[#allocation13 + $0x2e]]
        %v1476 = vstv %s1475
        %v1477 = vmul.f32 %v1476, %v991
        %v1478 = vmul.f32 %v1476, %v992
        %v1479 = vadd.f32 %v1473, %v1477
        %v1480 = vadd.f32 %v1474, %v1478
        %s1481 = sld [smem:[#allocation13 + $0x2f]]
        %v1482 = vstv %s1481
        %v1483 = vmul.f32 %v1482, %v1055
        %v1484 = vmul.f32 %v1482, %v1056
        %v1485 = vadd.f32 %v1479, %v1483
        %v1486 = vadd.f32 %v1480, %v1484
        %s1487 = sld [smem:[#allocation13 + $0x30]]
        %v1488 = vstv %s1487
        %v1489 = vmul.f32 %v1488, %v1119
        %v1490 = vmul.f32 %v1488, %v1120
        %v1491 = vadd.f32 %v1485, %v1489
        %v1492 = vadd.f32 %v1486, %v1490
        %s1493 = sld [smem:[#allocation13 + $0x31]]
        %v1494 = vstv %s1493
        %v1495 = vmul.f32 %v1494, %v1183
        %v1496 = vmul.f32 %v1494, %v1184
        %v1497 = vadd.f32 %v1491, %v1495
        %v1498 = vadd.f32 %v1492, %v1496
        %s1499 = sld [smem:[#allocation14 + $0x4]]
        %v1500 = vstv %s1499
        %v1501 = vadd.f32 %v1497, %v1500
        %v1502 = vadd.f32 %v1498, %v1500
        %v1503 = vmax.f32 %v1501, 0.0
        %v1504 = vmax.f32 %v1502, 0.0
        %s1505 = sld [smem:[#allocation13 + $0x32]]
        %v1506 = vstv %s1505
        %v1507 = vmul.f32 %v1506, %v607
        %v1508 = vmul.f32 %v1506, %v608
        %s1509 = sld [smem:[#allocation13 + $0x33]]
        %v1510 = vstv %s1509
        %v1511 = vmul.f32 %v1510, %v671
        %v1512 = vmul.f32 %v1510, %v672
        %v1513 = vadd.f32 %v1507, %v1511
        %v1514 = vadd.f32 %v1508, %v1512
        %s1515 = sld [smem:[#allocation13 + $0x34]]
        %v1516 = vstv %s1515
        %v1517 = vmul.f32 %v1516, %v735
        %v1518 = vmul.f32 %v1516, %v736
        %v1519 = vadd.f32 %v1513, %v1517
        %v1520 = vadd.f32 %v1514, %v1518
        %s1521 = sld [smem:[#allocation13 + $0x35]]
        %v1522 = vstv %s1521
        %v1523 = vmul.f32 %v1522, %v799
        %v1524 = vmul.f32 %v1522, %v800
        %v1525 = vadd.f32 %v1519, %v1523
        %v1526 = vadd.f32 %v1520, %v1524
        %s1527 = sld [smem:[#allocation13 + $0x36]]
        %v1528 = vstv %s1527
        %v1529 = vmul.f32 %v1528, %v863
        %v1530 = vmul.f32 %v1528, %v864
        %v1531 = vadd.f32 %v1525, %v1529
        %v1532 = vadd.f32 %v1526, %v1530
        %s1533 = sld [smem:[#allocation13 + $0x37]]
        %v1534 = vstv %s1533
        %v1535 = vmul.f32 %v1534, %v927
        %v1536 = vmul.f32 %v1534, %v928
        %v1537 = vadd.f32 %v1531, %v1535
        %v1538 = vadd.f32 %v1532, %v1536
        %s1539 = sld [smem:[#allocation13 + $0x38]]
        %v1540 = vstv %s1539
        %v1541 = vmul.f32 %v1540, %v991
        %v1542 = vmul.f32 %v1540, %v992
        %v1543 = vadd.f32 %v1537, %v1541
        %v1544 = vadd.f32 %v1538, %v1542
        %s1545 = sld [smem:[#allocation13 + $0x39]]
        %v1546 = vstv %s1545
        %v1547 = vmul.f32 %v1546, %v1055
        %v1548 = vmul.f32 %v1546, %v1056
        %v1549 = vadd.f32 %v1543, %v1547
        %v1550 = vadd.f32 %v1544, %v1548
        %s1551 = sld [smem:[#allocation13 + $0x3a]]
        %v1552 = vstv %s1551
        %v1553 = vmul.f32 %v1552, %v1119
        %v1554 = vmul.f32 %v1552, %v1120
        %v1555 = vadd.f32 %v1549, %v1553
        %v1556 = vadd.f32 %v1550, %v1554
        %s1557 = sld [smem:[#allocation13 + $0x3b]]
        %v1558 = vstv %s1557
        %v1559 = vmul.f32 %v1558, %v1183
        %v1560 = vmul.f32 %v1558, %v1184
        %v1561 = vadd.f32 %v1555, %v1559
        %v1562 = vadd.f32 %v1556, %v1560
        %s1563 = sld [smem:[#allocation14 + $0x5]]
        %v1564 = vstv %s1563
        %v1565 = vadd.f32 %v1561, %v1564
        %v1566 = vadd.f32 %v1562, %v1564
        %v1567 = vmax.f32 %v1565, 0.0
        %v1568 = vmax.f32 %v1566, 0.0
        %s1569 = sld [smem:[#allocation13 + $0x3c]]
        %v1570 = vstv %s1569
        %v1571 = vmul.f32 %v1570, %v607
        %v1572 = vmul.f32 %v1570, %v608
        %s1573 = sld [smem:[#allocation13 + $0x3d]]
        %v1574 = vstv %s1573
        %v1575 = vmul.f32 %v1574, %v671
        %v1576 = vmul.f32 %v1574, %v672
        %v1577 = vadd.f32 %v1571, %v1575
        %v1578 = vadd.f32 %v1572, %v1576
        %s1579 = sld [smem:[#allocation13 + $0x3e]]
        %v1580 = vstv %s1579
        %v1581 = vmul.f32 %v1580, %v735
        %v1582 = vmul.f32 %v1580, %v736
        %v1583 = vadd.f32 %v1577, %v1581
        %v1584 = vadd.f32 %v1578, %v1582
        %s1585 = sld [smem:[#allocation13 + $0x3f]]
        %v1586 = vstv %s1585
        %v1587 = vmul.f32 %v1586, %v799
        %v1588 = vmul.f32 %v1586, %v800
        %v1589 = vadd.f32 %v1583, %v1587
        %v1590 = vadd.f32 %v1584, %v1588
        %s1591 = sld [smem:[#allocation13 + $0x40]]
        %v1592 = vstv %s1591
        %v1593 = vmul.f32 %v1592, %v863
        %v1594 = vmul.f32 %v1592, %v864
        %v1595 = vadd.f32 %v1589, %v1593
        %v1596 = vadd.f32 %v1590, %v1594
        %s1597 = sld [smem:[#allocation13 + $0x41]]
        %v1598 = vstv %s1597
        %v1599 = vmul.f32 %v1598, %v927
        %v1600 = vmul.f32 %v1598, %v928
        %v1601 = vadd.f32 %v1595, %v1599
        %v1602 = vadd.f32 %v1596, %v1600
        %s1603 = sld [smem:[#allocation13 + $0x42]]
        %v1604 = vstv %s1603
        %v1605 = vmul.f32 %v1604, %v991
        %v1606 = vmul.f32 %v1604, %v992
        %v1607 = vadd.f32 %v1601, %v1605
        %v1608 = vadd.f32 %v1602, %v1606
        %s1609 = sld [smem:[#allocation13 + $0x43]]
        %v1610 = vstv %s1609
        %v1611 = vmul.f32 %v1610, %v1055
        %v1612 = vmul.f32 %v1610, %v1056
        %v1613 = vadd.f32 %v1607, %v1611
        %v1614 = vadd.f32 %v1608, %v1612
        %s1615 = sld [smem:[#allocation13 + $0x44]]
        %v1616 = vstv %s1615
        %v1617 = vmul.f32 %v1616, %v1119
        %v1618 = vmul.f32 %v1616, %v1120
        %v1619 = vadd.f32 %v1613, %v1617
        %v1620 = vadd.f32 %v1614, %v1618
        %s1621 = sld [smem:[#allocation13 + $0x45]]
        %v1622 = vstv %s1621
        %v1623 = vmul.f32 %v1622, %v1183
        %v1624 = vmul.f32 %v1622, %v1184
        %v1625 = vadd.f32 %v1619, %v1623
        %v1626 = vadd.f32 %v1620, %v1624
        %s1627 = sld [smem:[#allocation14 + $0x6]]
        %v1628 = vstv %s1627
        %v1629 = vadd.f32 %v1625, %v1628
        %v1630 = vadd.f32 %v1626, %v1628
        %v1631 = vmax.f32 %v1629, 0.0
        %v1632 = vmax.f32 %v1630, 0.0
        %s1633 = sld [smem:[#allocation13 + $0x46]]
        %v1634 = vstv %s1633
        %v1635 = vmul.f32 %v1634, %v607
        %v1636 = vmul.f32 %v1634, %v608
        %s1637 = sld [smem:[#allocation13 + $0x47]]
        %v1638 = vstv %s1637
        %v1639 = vmul.f32 %v1638, %v671
        %v1640 = vmul.f32 %v1638, %v672
        %v1641 = vadd.f32 %v1635, %v1639
        %v1642 = vadd.f32 %v1636, %v1640
        %s1643 = sld [smem:[#allocation13 + $0x48]]
        %v1644 = vstv %s1643
        %v1645 = vmul.f32 %v1644, %v735
        %v1646 = vmul.f32 %v1644, %v736
        %v1647 = vadd.f32 %v1641, %v1645
        %v1648 = vadd.f32 %v1642, %v1646
        %s1649 = sld [smem:[#allocation13 + $0x49]]
        %v1650 = vstv %s1649
        %v1651 = vmul.f32 %v1650, %v799
        %v1652 = vmul.f32 %v1650, %v800
        %v1653 = vadd.f32 %v1647, %v1651
        %v1654 = vadd.f32 %v1648, %v1652
        %s1655 = sld [smem:[#allocation13 + $0x4a]]
        %v1656 = vstv %s1655
        %v1657 = vmul.f32 %v1656, %v863
        %v1658 = vmul.f32 %v1656, %v864
        %v1659 = vadd.f32 %v1653, %v1657
        %v1660 = vadd.f32 %v1654, %v1658
        %s1661 = sld [smem:[#allocation13 + $0x4b]]
        %v1662 = vstv %s1661
        %v1663 = vmul.f32 %v1662, %v927
        %v1664 = vmul.f32 %v1662, %v928
        %v1665 = vadd.f32 %v1659, %v1663
        %v1666 = vadd.f32 %v1660, %v1664
        %s1667 = sld [smem:[#allocation13 + $0x4c]]
        %v1668 = vstv %s1667
        %v1669 = vmul.f32 %v1668, %v991
        %v1670 = vmul.f32 %v1668, %v992
        %v1671 = vadd.f32 %v1665, %v1669
        %v1672 = vadd.f32 %v1666, %v1670
        %s1673 = sld [smem:[#allocation13 + $0x4d]]
        %v1674 = vstv %s1673
        %v1675 = vmul.f32 %v1674, %v1055
        %v1676 = vmul.f32 %v1674, %v1056
        %v1677 = vadd.f32 %v1671, %v1675
        %v1678 = vadd.f32 %v1672, %v1676
        %s1679 = sld [smem:[#allocation13 + $0x4e]]
        %v1680 = vstv %s1679
        %v1681 = vmul.f32 %v1680, %v1119
        %v1682 = vmul.f32 %v1680, %v1120
        %v1683 = vadd.f32 %v1677, %v1681
        %v1684 = vadd.f32 %v1678, %v1682
        %s1685 = sld [smem:[#allocation13 + $0x4f]]
        %v1686 = vstv %s1685
        %v1687 = vmul.f32 %v1686, %v1183
        %v1688 = vmul.f32 %v1686, %v1184
        %v1689 = vadd.f32 %v1683, %v1687
        %v1690 = vadd.f32 %v1684, %v1688
        %s1691 = sld [smem:[#allocation14 + $0x7]]
        %v1692 = vstv %s1691
        %v1693 = vadd.f32 %v1689, %v1692
        %v1694 = vadd.f32 %v1690, %v1692
        %v1695 = vmax.f32 %v1693, 0.0
        %v1696 = vmax.f32 %v1694, 0.0
        %s1697 = sld [smem:[#allocation13 + $0x50]]
        %v1698 = vstv %s1697
        %v1699 = vmul.f32 %v1698, %v607
        %v1700 = vmul.f32 %v1698, %v608
        %s1701 = sld [smem:[#allocation13 + $0x51]]
        %v1702 = vstv %s1701
        %v1703 = vmul.f32 %v1702, %v671
        %v1704 = vmul.f32 %v1702, %v672
        %v1705 = vadd.f32 %v1699, %v1703
        %v1706 = vadd.f32 %v1700, %v1704
        %s1707 = sld [smem:[#allocation13 + $0x52]]
        %v1708 = vstv %s1707
        %v1709 = vmul.f32 %v1708, %v735
        %v1710 = vmul.f32 %v1708, %v736
        %v1711 = vadd.f32 %v1705, %v1709
        %v1712 = vadd.f32 %v1706, %v1710
        %s1713 = sld [smem:[#allocation13 + $0x53]]
        %v1714 = vstv %s1713
        %v1715 = vmul.f32 %v1714, %v799
        %v1716 = vmul.f32 %v1714, %v800
        %v1717 = vadd.f32 %v1711, %v1715
        %v1718 = vadd.f32 %v1712, %v1716
        %s1719 = sld [smem:[#allocation13 + $0x54]]
        %v1720 = vstv %s1719
        %v1721 = vmul.f32 %v1720, %v863
        %v1722 = vmul.f32 %v1720, %v864
        %v1723 = vadd.f32 %v1717, %v1721
        %v1724 = vadd.f32 %v1718, %v1722
        %s1725 = sld [smem:[#allocation13 + $0x55]]
        %v1726 = vstv %s1725
        %v1727 = vmul.f32 %v1726, %v927
        %v1728 = vmul.f32 %v1726, %v928
        %v1729 = vadd.f32 %v1723, %v1727
        %v1730 = vadd.f32 %v1724, %v1728
        %s1731 = sld [smem:[#allocation13 + $0x56]]
        %v1732 = vstv %s1731
        %v1733 = vmul.f32 %v1732, %v991
        %v1734 = vmul.f32 %v1732, %v992
        %v1735 = vadd.f32 %v1729, %v1733
        %v1736 = vadd.f32 %v1730, %v1734
        %s1737 = sld [smem:[#allocation13 + $0x57]]
        %v1738 = vstv %s1737
        %v1739 = vmul.f32 %v1738, %v1055
        %v1740 = vmul.f32 %v1738, %v1056
        %v1741 = vadd.f32 %v1735, %v1739
        %v1742 = vadd.f32 %v1736, %v1740
        %s1743 = sld [smem:[#allocation13 + $0x58]]
        %v1744 = vstv %s1743
        %v1745 = vmul.f32 %v1744, %v1119
        %v1746 = vmul.f32 %v1744, %v1120
        %v1747 = vadd.f32 %v1741, %v1745
        %v1748 = vadd.f32 %v1742, %v1746
        %s1749 = sld [smem:[#allocation13 + $0x59]]
        %v1750 = vstv %s1749
        %v1751 = vmul.f32 %v1750, %v1183
        %v1752 = vmul.f32 %v1750, %v1184
        %v1753 = vadd.f32 %v1747, %v1751
        %v1754 = vadd.f32 %v1748, %v1752
        %s1755 = sld [smem:[#allocation14 + $0x8]]
        %v1756 = vstv %s1755
        %v1757 = vadd.f32 %v1753, %v1756
        %v1758 = vadd.f32 %v1754, %v1756
        %v1759 = vmax.f32 %v1757, 0.0
        %v1760 = vmax.f32 %v1758, 0.0
        %s1761 = sld [smem:[#allocation13 + $0x5a]]
        %v1762 = vstv %s1761
        %v1763 = vmul.f32 %v1762, %v607
        %v1764 = vmul.f32 %v1762, %v608
        %s1765 = sld [smem:[#allocation13 + $0x5b]]
        %v1766 = vstv %s1765
        %v1767 = vmul.f32 %v1766, %v671
        %v1768 = vmul.f32 %v1766, %v672
        %v1769 = vadd.f32 %v1763, %v1767
        %v1770 = vadd.f32 %v1764, %v1768
        %s1771 = sld [smem:[#allocation13 + $0x5c]]
        %v1772 = vstv %s1771
        %v1773 = vmul.f32 %v1772, %v735
        %v1774 = vmul.f32 %v1772, %v736
        %v1775 = vadd.f32 %v1769, %v1773
        %v1776 = vadd.f32 %v1770, %v1774
        %s1777 = sld [smem:[#allocation13 + $0x5d]]
        %v1778 = vstv %s1777
        %v1779 = vmul.f32 %v1778, %v799
        %v1780 = vmul.f32 %v1778, %v800
        %v1781 = vadd.f32 %v1775, %v1779
        %v1782 = vadd.f32 %v1776, %v1780
        %s1783 = sld [smem:[#allocation13 + $0x5e]]
        %v1784 = vstv %s1783
        %v1785 = vmul.f32 %v1784, %v863
        %v1786 = vmul.f32 %v1784, %v864
        %v1787 = vadd.f32 %v1781, %v1785
        %v1788 = vadd.f32 %v1782, %v1786
        %s1789 = sld [smem:[#allocation13 + $0x5f]]
        %v1790 = vstv %s1789
        %v1791 = vmul.f32 %v1790, %v927
        %v1792 = vmul.f32 %v1790, %v928
        %v1793 = vadd.f32 %v1787, %v1791
        %v1794 = vadd.f32 %v1788, %v1792
        %s1795 = sld [smem:[#allocation13 + $0x60]]
        %v1796 = vstv %s1795
        %v1797 = vmul.f32 %v1796, %v991
        %v1798 = vmul.f32 %v1796, %v992
        %v1799 = vadd.f32 %v1793, %v1797
        %v1800 = vadd.f32 %v1794, %v1798
        %s1801 = sld [smem:[#allocation13 + $0x61]]
        %v1802 = vstv %s1801
        %v1803 = vmul.f32 %v1802, %v1055
        %v1804 = vmul.f32 %v1802, %v1056
        %v1805 = vadd.f32 %v1799, %v1803
        %v1806 = vadd.f32 %v1800, %v1804
        %s1807 = sld [smem:[#allocation13 + $0x62]]
        %v1808 = vstv %s1807
        %v1809 = vmul.f32 %v1808, %v1119
        %v1810 = vmul.f32 %v1808, %v1120
        %v1811 = vadd.f32 %v1805, %v1809
        %v1812 = vadd.f32 %v1806, %v1810
        %s1813 = sld [smem:[#allocation13 + $0x63]]
        %v1814 = vstv %s1813
        %v1815 = vmul.f32 %v1814, %v1183
        %v1816 = vmul.f32 %v1814, %v1184
        %v1817 = vadd.f32 %v1811, %v1815
        %v1818 = vadd.f32 %v1812, %v1816
        %s1819 = sld [smem:[#allocation14 + $0x9]]
        %v1820 = vstv %s1819
        %v1821 = vadd.f32 %v1817, %v1820
        %v1822 = vadd.f32 %v1818, %v1820
        %v1823 = vmax.f32 %v1821, 0.0
        %v1824 = vmax.f32 %v1822, 0.0
        %s1825 = sld [smem:[#allocation16]]
        %v1826 = vstv %s1825
        %v1827 = vmul.f32 %v1826, %v1247
        %v1828 = vmul.f32 %v1826, %v1248
        %s1829 = sld [smem:[#allocation16 + $0x1]]
        %v1830 = vstv %s1829
        %v1831 = vmul.f32 %v1830, %v1311
        %v1832 = vmul.f32 %v1830, %v1312
        %v1833 = vadd.f32 %v1827, %v1831
        %v1834 = vadd.f32 %v1828, %v1832
        %s1835 = sld [smem:[#allocation16 + $0x2]]
        %v1836 = vstv %s1835
        %v1837 = vmul.f32 %v1836, %v1375
        %v1838 = vmul.f32 %v1836, %v1376
        %v1839 = vadd.f32 %v1833, %v1837
        %v1840 = vadd.f32 %v1834, %v1838
        %s1841 = sld [smem:[#allocation16 + $0x3]]
        %v1842 = vstv %s1841
        %v1843 = vmul.f32 %v1842, %v1439
        %v1844 = vmul.f32 %v1842, %v1440
        %v1845 = vadd.f32 %v1839, %v1843
        %v1846 = vadd.f32 %v1840, %v1844
        %s1847 = sld [smem:[#allocation16 + $0x4]]
        %v1848 = vstv %s1847
        %v1849 = vmul.f32 %v1848, %v1503
        %v1850 = vmul.f32 %v1848, %v1504
        %v1851 = vadd.f32 %v1845, %v1849
        %v1852 = vadd.f32 %v1846, %v1850
        %s1853 = sld [smem:[#allocation16 + $0x5]]
        %v1854 = vstv %s1853
        %v1855 = vmul.f32 %v1854, %v1567
        %v1856 = vmul.f32 %v1854, %v1568
        %v1857 = vadd.f32 %v1851, %v1855
        %v1858 = vadd.f32 %v1852, %v1856
        %s1859 = sld [smem:[#allocation16 + $0x6]]
        %v1860 = vstv %s1859
        %v1861 = vmul.f32 %v1860, %v1631
        %v1862 = vmul.f32 %v1860, %v1632
        %v1863 = vadd.f32 %v1857, %v1861
        %v1864 = vadd.f32 %v1858, %v1862
        %s1865 = sld [smem:[#allocation16 + $0x7]]
        %v1866 = vstv %s1865
        %v1867 = vmul.f32 %v1866, %v1695
        %v1868 = vmul.f32 %v1866, %v1696
        %v1869 = vadd.f32 %v1863, %v1867
        %v1870 = vadd.f32 %v1864, %v1868
        %s1871 = sld [smem:[#allocation16 + $0x8]]
        %v1872 = vstv %s1871
        %v1873 = vmul.f32 %v1872, %v1759
        %v1874 = vmul.f32 %v1872, %v1760
        %v1875 = vadd.f32 %v1869, %v1873
        %v1876 = vadd.f32 %v1870, %v1874
        %s1877 = sld [smem:[#allocation16 + $0x9]]
        %v1878 = vstv %s1877
        %v1879 = vmul.f32 %v1878, %v1823
        %v1880 = vmul.f32 %v1878, %v1824
        %v1881 = vadd.f32 %v1875, %v1879
        %v1882 = vadd.f32 %v1876, %v1880
        %s1883 = sld [smem:[#allocation2]]
        %v1884 = vstv %s1883
        %v1885 = vadd.f32 %v1881, %v1884
        %v1886 = vadd.f32 %v1882, %v1884
        %1887 = vst [vmem:[%s440] sm:$0xff] %v1885
        %1888 = vst [vmem:[%s440 + $0x8] sm:$0xff] %v1886
        %s1889 = sand.u32 %s233, 1
        %s1890 = scalar_lea.sflag [#allocation5], %s1889
        %s1891 = sand.u32 %s233, 1
        %s1892 = smul.addr %s1891, 16
        %s1893 = scalar_lea.vmem [#allocation17], %s1892
        // Predicated region
        $region89: #{tpu_custom_call.1} parent=55 // pred_check
          %p1894 = pneg %p243
        $region90: #{tpu_custom_call.1} parent=55 // pred_check_branch
          %1896 = sbr.rel (%p1894) target = $region92
        $region91: #{tpu_custom_call.1} parent=55 // pred_region
          %s1897 = smul.u32 2, %s31
          %s1899 = ssub.s32 256, 256
          %1900 = vsyncadd %s1890, %s1899
          %s1901 = smul.addr %s1897, 128
          %s1902 = scalar_lea.hbm %s9, %s1901
          %s1903 = sshll.u32 %s1893, 4
          %s1904 = int_to_ptr.vmem [resolvable:$true] %s1903
          %1909 = dma.vmem_to_hbm [thread:$0]  %s1904, 256, %s1902, %s1890, 128, 128, 8
        $region92: #{tpu_custom_call.1} parent=55 // pred_fallthru
          _
      $region56: #{tpu_custom_call.1} parent=5 // pred_fallthru
        _
      %p1910 = scmp.le.s32.totalorder 2, %s26
      // Predicated region
      $region93: #{tpu_custom_call.1} parent=5 // pred_check
        %p1911 = pneg %p1910
      $region94: #{tpu_custom_call.1} parent=5 // pred_check_branch
        %1913 = sbr.rel (%p1911) target = $region96
      $region95: #{tpu_custom_call.1} parent=5 // pred_region
        %s1914 = ssub.s32 %s26, 2
        // Predicated region
        $region97: #{tpu_custom_call.1} parent=95 // pred_check
          %p1915 = pneg %p249
        $region98: #{tpu_custom_call.1} parent=95 // pred_check_branch
          %1917 = sbr.rel (%p1915) target = $region100
        $region99: #{tpu_custom_call.1} parent=95 // pred_region
          %s1918 = sand.u32 %s234, 1
          %s1919 = scalar_lea.sflag [#allocation5], %s1918
          %s1920 = sand.u32 %s234, 1
          %s1921 = smul.addr %s1920, 16
          %s1922 = scalar_lea.vmem [#allocation17], %s1921
          %1923 = dma.done %s1919, 256
        $region100: #{tpu_custom_call.1} parent=95 // pred_fallthru
          _
      $region96: #{tpu_custom_call.1} parent=5 // pred_fallthru
        _
    $region6: #{tpu_custom_call.1} parent=1 // loop_footer
      %s30 = sadd.s32 1, %s26
    $region7: #{tpu_custom_call.1} parent=1 // loop_footer_branch
      %25 = sbr.rel target = $region3
    $region8: #{tpu_custom_call.1} parent=1 // loop_exit
      _
    %1924 = vsyncpa [#allocation4], 1
    %s1925 = scalar_lea.sflag [#allocation4], 1
    %1926 = vsyncpa %s1925, 1
    %1927 = vsyncpa [#allocation5], 1
    %s1928 = scalar_lea.sflag [#allocation5], 1
    %1929 = vsyncpa %s1928, 1
    %1930 = vsyncpa [#allocation6], 1
    %s1931 = scalar_lea.sflag [#allocation6], 1
    %1932 = vsyncpa %s1931, 1
    %1933 = vsyncpa [#allocation9], 1
    %1934 = vsyncpa [#allocation12], 1
    %1935 = vsyncpa [#allocation15], 1

</llo_original>
